<compile_context>
chip_gen: v7x
topology: tpu7x:2x2x1
jax: 0.10.0
libtpu: 0.0.40
codegen_flags: <defaults>
</compile_context>

<pallas_src>
import functools

import jax
import jax.numpy as jnp
from jax import lax
from jax.experimental import pallas as pl
from jax.experimental.pallas import tpu as pltpu


# --------------------------------------------------------------------------
# Fused kernel: all LSTM layers/directions + ReLU -> Linear -> Sigmoid head
# --------------------------------------------------------------------------
def _fused_lstm_kernel(*refs, num_layers, num_dir, hidden_size, seq_len, batch):
    H, T, B = hidden_size, seq_len, batch
    h4 = 4 * H
    G = num_dir * h4          # fused (both-direction) gate width
    R = num_dir * B           # stacked rows: [fwd batch ; bwd batch]

    # ---- unpack refs: inputs..., output, scratch... ------------------------
    x_ref = refs[0]
    idx = 1
    layer_w = []
    for _ in range(num_layers):
        layer_w.append((refs[idx], refs[idx + 1], refs[idx + 2]))
        idx += 3
    fc_w_ref, fc_b_ref, out_ref = refs[idx], refs[idx + 1], refs[idx + 2]
    idx += 3
    precomp_ref = refs[idx]                                  # (T*B, G) f32, reused per layer
    idx += 1
    n_act = min(num_layers - 1, 2)
    act_refs = [refs[idx + i] for i in range(n_act)]         # (T*B, num_dir*H) f32 ping-pong

    finals = []                                              # final h per (layer, dir)

    for l in range(num_layers):
        is_first = l == 0
        is_last = l == num_layers - 1
        wih_ref, whh_ref, b_ref = layer_w[l]

        # ---- (1) hoisted input projection: one big MXU matmul for ALL timesteps
        if is_first:
            src = x_ref[...]                                            # (T*B, D) bf16
        else:
            src = act_refs[(l - 1) % n_act][...].astype(jnp.bfloat16)   # (T*B, num_dir*H)
        precomp_ref[...] = (
            jnp.broadcast_to(b_ref[...], (T * B, G))
            + jnp.dot(src, wih_ref[...], preferred_element_type=jnp.float32))

        whh = whh_ref[...]                                              # (H, G) bf16
        dst_ref = None if is_last else act_refs[l % n_act]

        # ---- (2) serial recurrence: single fused-direction W_hh push per step
        def step(t, carry, whh=whh, dst_ref=dst_ref):
            h, c = carry                                                # (R, H) f32 each
            t_f = pl.multiple_of(t * B, B)                              # fwd time slot
            t_b = pl.multiple_of((T - 1 - t) * B, B)                    # bwd time slot

            rec = jnp.dot(h.astype(jnp.bfloat16), whh,
                          preferred_element_type=jnp.float32)           # (R, G)
            if num_dir == 2:
                g_f = precomp_ref[pl.ds(t_f, B), 0:h4] + rec[0:B, 0:h4]
                g_b = precomp_ref[pl.ds(t_b, B), h4:2 * h4] + rec[B:R, h4:2 * h4]
                gates = jnp.concatenate([g_f, g_b], axis=0)             # (R, 4H)
            else:
                gates = precomp_ref[pl.ds(t_f, B), :] + rec

            # (5) one sigmoid over the whole fused gate block, tanh only on g
            sig = jax.nn.sigmoid(gates)
            i_g = sig[:, 0:H]
            f_g = sig[:, H:2 * H]
            o_g = sig[:, 3 * H:4 * H]
            g_g = jnp.tanh(gates[:, 2 * H:3 * H])

            c_new = f_g * c + i_g * g_g
            h_new = o_g * jnp.tanh(c_new)

            if dst_ref is not None:                                     # (3) merged act slab
                dst_ref[pl.ds(t_f, B), 0:H] = h_new[0:B, :]
                if num_dir == 2:
                    dst_ref[pl.ds(t_b, B), H:2 * H] = h_new[B:R, :]
            return (h_new, c_new)

        init = (jnp.zeros((R, H), jnp.float32), jnp.zeros((R, H), jnp.float32))
        h_fin, _ = lax.fori_loop(0, T, step, init,
                                 unroll=True if T <= 32 else 8)         # (4)

        for d in range(num_dir):
            finals.append(h_fin[d * B:(d + 1) * B, :])                  # PyTorch h_n order

    # ---- head: ReLU(h_n chunks) -> per-chunk fc dots (no lane concat) -> Sigmoid
    O = fc_b_ref.shape[1]
    y = jnp.broadcast_to(fc_b_ref[...], (B, O))
    for i, h_ld in enumerate(finals):
        w_chunk = fc_w_ref[i * H:(i + 1) * H, :]                        # (H, O) bf16
        y = y + jnp.dot(jnp.maximum(h_ld, 0.0).astype(jnp.bfloat16), w_chunk,
                        preferred_element_type=jnp.float32)
    out_ref[...] = jax.nn.sigmoid(y)


# --------------------------------------------------------------------------
# Full forward pass
# --------------------------------------------------------------------------
def my_lstm_forward(tokens, params, *, num_layers, bidirectional):
    num_dir = 2 if bidirectional else 1

    # Embedding lookup (frozen table); all Dropout layers are identity at inference.
    emb = jnp.take(params["embedding"], tokens, axis=0)                 # (B, T, D) bf16
    B, T, D = emb.shape
    H = params["lstm"][0][1].shape[0]                                   # whh_cat: (H, G)
    G = params["lstm"][0][1].shape[1]                                   # num_dir*4H
    O = params["fc_w_t"].shape[1]
    F = params["fc_w_t"].shape[0]                                       # num_layers*num_dir*H

    # Pad batch to the sublane width; padded rows are independent junk, dropped at the end.
    B_p = ((B + 7) // 8) * 8
    x = jnp.transpose(emb, (1, 0, 2))                                   # (T, B, D) time-major
    if B_p != B:
        x = jnp.pad(x, ((0, 0), (0, B_p - B), (0, 0)))
    x = x.reshape(T * B_p, D).astype(jnp.bfloat16)                      # flat: t-major, b-minor

    inputs = [x]
    in_specs = [pl.BlockSpec((T * B_p, D), lambda i: (0, 0))]
    for l in range(num_layers):
        wih_cat, whh_cat, b_cat = params["lstm"][l]
        in_dim = wih_cat.shape[0]
        inputs += [wih_cat, whh_cat, b_cat]
        in_specs += [
            pl.BlockSpec((in_dim, G), lambda i: (0, 0)),
            pl.BlockSpec((H, G), lambda i: (0, 0)),
            pl.BlockSpec((1, G), lambda i: (0, 0)),
        ]
    inputs += [params["fc_w_t"], params["fc_b"]]
    in_specs += [pl.BlockSpec((F, O), lambda i: (0, 0)),
                 pl.BlockSpec((1, O), lambda i: (0, 0))]

    # VMEM scratch: one reusable precomputed-gate buffer + ping-pong activation slabs.
    n_act = min(num_layers - 1, 2)
    scratch_shapes = [pltpu.VMEM((T * B_p, G), jnp.float32)]
    scratch_shapes += [pltpu.VMEM((T * B_p, num_dir * H), jnp.float32)
                       for _ in range(n_act)]

    kernel = functools.partial(
        _fused_lstm_kernel, num_layers=num_layers, num_dir=num_dir,
        hidden_size=H, seq_len=T, batch=B_p)

    out = pl.pallas_call(
        kernel,
        out_shape=jax.ShapeDtypeStruct((B_p, O), jnp.float32),
        grid_spec=pltpu.PrefetchScalarGridSpec(
            num_scalar_prefetch=0,
            grid=(1,),
            in_specs=in_specs,
            out_specs=pl.BlockSpec((B_p, O), lambda i: (0, 0)),
            scratch_shapes=scratch_shapes,
        ),
        compiler_params=pltpu.CompilerParams(
            dimension_semantics=("arbitrary",),
            vmem_limit_bytes=64 * 1024 * 1024),
    )(*inputs)
    return out[:B]


# --------------------------------------------------------------------------
# Deterministic synthetic parameters (PyTorch layout, pre-transposed & direction-fused)
# --------------------------------------------------------------------------
def init_params(key, *, vocab_size, input_size, hidden_size, output_size,
                num_layers, bidirectional):
    num_dir = 2 if bidirectional else 1
    H = hidden_size
    n_keys = 3 + 4 * num_layers * num_dir
    keys = iter(jax.random.split(key, n_keys))
    scale = 1.0 / float(H) ** 0.5

    params = {
        # Frozen "pretrained" table stands in for FastText/GloVe vectors; stored bf16
        # to halve HBM gather bandwidth (the only HBM-heavy stage).
        "embedding": (jax.random.normal(next(keys), (vocab_size, input_size),
                                        jnp.float32) * 0.1).astype(jnp.bfloat16),
        "lstm": [],
    }
    for layer in range(num_layers):
        in_dim = input_size if layer == 0 else H * num_dir
        wih_t, whh_t, bias = [], [], []
        for _ in range(num_dir):
            w_ih = jax.random.uniform(next(keys), (4 * H, in_dim), jnp.float32, -scale, scale)
            w_hh = jax.random.uniform(next(keys), (4 * H, H), jnp.float32, -scale, scale)
            b_ih = jax.random.uniform(next(keys), (4 * H,), jnp.float32, -scale, scale)
            b_hh = jax.random.uniform(next(keys), (4 * H,), jnp.float32, -scale, scale)
            wih_t.append(w_ih.T)
            whh_t.append(w_hh.T)
            bias.append(b_ih + b_hh)
        # Host-side direction fusion along the gate (output) dim:
        #   W_ih^T -> (in_dim, num_dir*4H), W_hh^T -> (H, num_dir*4H), bias -> (1, num_dir*4H)
        params["lstm"].append((
            jnp.concatenate(wih_t, axis=1).astype(jnp.bfloat16),
            jnp.concatenate(whh_t, axis=1).astype(jnp.bfloat16),
            jnp.concatenate(bias, axis=0).reshape(1, -1),               # f32
        ))

    F = num_layers * H * num_dir
    fscale = 1.0 / float(F) ** 0.5
    params["fc_w_t"] = jax.random.uniform(next(keys), (F, output_size),
                                          jnp.float32, -fscale, fscale).astype(jnp.bfloat16)
    params["fc_b"] = jax.random.uniform(next(keys), (1, output_size),
                                        jnp.float32, -fscale, fscale)
    return params


if __name__ == "__main__":
    # Small, forward-consistent shapes.
    B, T = 2, 8
    VOCAB = 100
    INPUT_SIZE = 32      # embedding dim == LSTM input_size
    HIDDEN = 32
    OUTPUT = 4
    NUM_LAYERS = 2
    BIDIRECTIONAL = True

    key = jax.random.PRNGKey(0)
    k_tok, k_par = jax.random.split(key)
    tokens = jax.random.randint(k_tok, (B, T), 0, VOCAB, dtype=jnp.int32)
    params = init_params(k_par, vocab_size=VOCAB, input_size=INPUT_SIZE,
                         hidden_size=HIDDEN, output_size=OUTPUT,
                         num_layers=NUM_LAYERS, bidirectional=BIDIRECTIONAL)

    forward = jax.jit(functools.partial(
        my_lstm_forward, num_layers=NUM_LAYERS, bidirectional=BIDIRECTIONAL))

    out = forward(tokens, params)
    out = jax.block_until_ready(out)
    assert out.shape == (B, OUTPUT)
    assert bool(jnp.all((out >= 0.0) & (out <= 1.0)))
    print("KERNEL_OK")
</pallas_src>

<mosaic_0001>
module attributes {stable_mosaic.version = 11 : i64} {
  func.func @_fused_lstm_kernel(%arg0: i32, %arg1: memref<64x32xbf16, #tpu.memory_space<vmem>>, %arg2: memref<32x256xbf16, #tpu.memory_space<vmem>>, %arg3: memref<32x256xbf16, #tpu.memory_space<vmem>>, %arg4: memref<1x256xf32, #tpu.memory_space<vmem>>, %arg5: memref<64x256xbf16, #tpu.memory_space<vmem>>, %arg6: memref<32x256xbf16, #tpu.memory_space<vmem>>, %arg7: memref<1x256xf32, #tpu.memory_space<vmem>>, %arg8: memref<128x4xbf16, #tpu.memory_space<vmem>>, %arg9: memref<1x4xf32, #tpu.memory_space<vmem>>, %arg10: memref<8x4xf32, #tpu.memory_space<vmem>>, %arg11: memref<64x256xf32, #tpu.memory_space<vmem>>, %arg12: memref<64x64xf32, #tpu.memory_space<vmem>>) attributes {dimension_semantics = [#tpu.dimension_semantics<arbitrary>], iteration_bounds = array<i64: 1>, scalar_prefetch = 0 : i64, scratch_operands = 2 : i64, tpu.core_type = #tpu.core_type<tc>, window_params = [{pipeline_mode = #tpu.pipeline_mode<synchronous>, transform_indices = @transform_0, window_bounds = array<i64: 64, 32>}, {pipeline_mode = #tpu.pipeline_mode<synchronous>, transform_indices = @transform_1, window_bounds = array<i64: 32, 256>}, {pipeline_mode = #tpu.pipeline_mode<synchronous>, transform_indices = @transform_2, window_bounds = array<i64: 32, 256>}, {pipeline_mode = #tpu.pipeline_mode<synchronous>, transform_indices = @transform_3, window_bounds = array<i64: 1, 256>}, {pipeline_mode = #tpu.pipeline_mode<synchronous>, transform_indices = @transform_4, window_bounds = array<i64: 64, 256>}, {pipeline_mode = #tpu.pipeline_mode<synchronous>, transform_indices = @transform_5, window_bounds = array<i64: 32, 256>}, {pipeline_mode = #tpu.pipeline_mode<synchronous>, transform_indices = @transform_6, window_bounds = array<i64: 1, 256>}, {pipeline_mode = #tpu.pipeline_mode<synchronous>, transform_indices = @transform_7, window_bounds = array<i64: 128, 4>}, {pipeline_mode = #tpu.pipeline_mode<synchronous>, transform_indices = @transform_8, window_bounds = array<i64: 1, 4>}, {pipeline_mode = #tpu.pipeline_mode<synchronous>, transform_indices = @transform_9, window_bounds = array<i64: 8, 4>}]} {
    %c0 = arith.constant 0 : index
    %c0_0 = arith.constant 0 : index
    %0 = vector.load %arg1[%c0, %c0_0] : memref<64x32xbf16, #tpu.memory_space<vmem>>, vector<64x32xbf16>
    %c0_1 = arith.constant 0 : index
    %c0_2 = arith.constant 0 : index
    %1 = vector.load %arg4[%c0_1, %c0_2] : memref<1x256xf32, #tpu.memory_space<vmem>>, vector<1x256xf32>
    %2 = vector.shape_cast %1 : vector<1x256xf32> to vector<1x256xf32>
    %3 = vector.broadcast %2 : vector<1x256xf32> to vector<64x256xf32>
    %c0_3 = arith.constant 0 : index
    %c0_4 = arith.constant 0 : index
    %4 = vector.load %arg2[%c0_3, %c0_4] : memref<32x256xbf16, #tpu.memory_space<vmem>>, vector<32x256xbf16>
    %cst = arith.constant dense<0.000000e+00> : vector<64x256xf32>
    %5 = tpu.matmul %0, %4, %cst {dimension_numbers = #tpu.dot_dimension_numbers<[1], [0], [0], [1], [0, 0, 1, 1], [], []>} : vector<64x32xbf16>, vector<32x256xbf16>, vector<64x256xf32> -> vector<64x256xf32>
    %6 = arith.addf %3, %5 : vector<64x256xf32>
    %c0_5 = arith.constant 0 : index
    %c0_6 = arith.constant 0 : index
    %7 = vector.load %arg11[%c0_5, %c0_6] : memref<64x256xf32, #tpu.memory_space<vmem>>, vector<64x256xf32>
    tpu.vector_store %arg11[%c0_5, %c0_6], %6 {strides = array<i32>} : memref<64x256xf32, #tpu.memory_space<vmem>>, vector<64x256xf32>,
    %c0_7 = arith.constant 0 : index
    %c0_8 = arith.constant 0 : index
    %8 = vector.load %arg3[%c0_7, %c0_8] : memref<32x256xbf16, #tpu.memory_space<vmem>>, vector<32x256xbf16>
    %cst_9 = arith.constant 0.000000e+00 : f32
    %9 = vector.broadcast %cst_9 : f32 to vector<16x32xf32>
    %cst_10 = arith.constant 0.000000e+00 : f32
    %10 = vector.broadcast %cst_10 : f32 to vector<16x32xf32>
    %c0_i32 = arith.constant 0 : i32
    %c8_i32 = arith.constant 8 : i32
    %11 = arith.muli %c0_i32, %c8_i32 : i32
    %12 = tpu.assume_multiple %11, 8 : i32
    %c7_i32 = arith.constant 7 : i32
    %13 = arith.subi %c7_i32, %c0_i32 : i32
    %c8_i32_11 = arith.constant 8 : i32
    %14 = arith.muli %13, %c8_i32_11 : i32
    %15 = tpu.assume_multiple %14, 8 : i32
    %16 = arith.truncf %9 : vector<16x32xf32> to vector<16x32xbf16>
    %cst_12 = arith.constant dense<0.000000e+00> : vector<16x256xf32>
    %17 = tpu.matmul %16, %8, %cst_12 {dimension_numbers = #tpu.dot_dimension_numbers<[1], [0], [0], [1], [0, 0, 1, 1], [], []>} : vector<16x32xbf16>, vector<32x256xbf16>, vector<16x256xf32> -> vector<16x256xf32>
    %18 = arith.index_cast %12 : i32 to index
    %c0_13 = arith.constant 0 : index
    %19 = vector.load %arg11[%18, %c0_13] : memref<64x256xf32, #tpu.memory_space<vmem>>, vector<8x128xf32>
    %20 = vector.extract_strided_slice %17 {offsets = [0, 0], sizes = [8, 128], strides = [1, 1]} : vector<16x256xf32> to vector<8x128xf32>
    %21 = arith.addf %19, %20 : vector<8x128xf32>
    %22 = arith.index_cast %15 : i32 to index
    %c128 = arith.constant 128 : index
    %23 = vector.load %arg11[%22, %c128] : memref<64x256xf32, #tpu.memory_space<vmem>>, vector<8x128xf32>
    %24 = vector.extract_strided_slice %17 {offsets = [8, 128], sizes = [8, 128], strides = [1, 1]} : vector<16x256xf32> to vector<8x128xf32>
    %25 = arith.addf %23, %24 : vector<8x128xf32>
    %26 = tpu.concatenate %21, %25 in 0 : vector<8x128xf32>, vector<8x128xf32> -> vector<16x128xf32>
    %27 = arith.negf %26 : vector<16x128xf32>
    %28 = math.exp %27 : vector<16x128xf32>
    %cst_14 = arith.constant 1.000000e+00 : f32
    %29 = vector.broadcast %cst_14 : f32 to vector<16x128xf32>
    %30 = arith.addf %29, %28 : vector<16x128xf32>
    %31 = arith.divf %29, %30 : vector<16x128xf32>
    %32 = vector.extract_strided_slice %31 {offsets = [0, 0], sizes = [16, 32], strides = [1, 1]} : vector<16x128xf32> to vector<16x32xf32>
    %33 = vector.extract_strided_slice %31 {offsets = [0, 32], sizes = [16, 32], strides = [1, 1]} : vector<16x128xf32> to vector<16x32xf32>
    %34 = vector.extract_strided_slice %31 {offsets = [0, 96], sizes = [16, 32], strides = [1, 1]} : vector<16x128xf32> to vector<16x32xf32>
    %35 = vector.extract_strided_slice %26 {offsets = [0, 64], sizes = [16, 32], strides = [1, 1]} : vector<16x128xf32> to vector<16x32xf32>
    %36 = math.tanh %35 : vector<16x32xf32>
    %37 = arith.mulf %33, %10 : vector<16x32xf32>
    %38 = arith.mulf %32, %36 : vector<16x32xf32>
    %39 = arith.addf %37, %38 : vector<16x32xf32>
    %40 = math.tanh %39 : vector<16x32xf32>
    %41 = arith.mulf %34, %40 : vector<16x32xf32>
    %42 = vector.extract_strided_slice %41 {offsets = [0, 0], sizes = [8, 32], strides = [1, 1]} : vector<16x32xf32> to vector<8x32xf32>
    %43 = arith.index_cast %12 : i32 to index
    %c0_15 = arith.constant 0 : index
    %44 = vector.load %arg12[%43, %c0_15] : memref<64x64xf32, #tpu.memory_space<vmem>>, vector<8x32xf32>
    tpu.vector_store %arg12[%43, %c0_15], %42 {strides = array<i32>} : memref<64x64xf32, #tpu.memory_space<vmem>>, vector<8x32xf32>,
    %45 = vector.extract_strided_slice %41 {offsets = [8, 0], sizes = [8, 32], strides = [1, 1]} : vector<16x32xf32> to vector<8x32xf32>
    %46 = arith.index_cast %15 : i32 to index
    %c32 = arith.constant 32 : index
    %47 = vector.load %arg12[%46, %c32] : memref<64x64xf32, #tpu.memory_space<vmem>>, vector<8x32xf32>
    tpu.vector_store %arg12[%46, %c32], %45 {strides = array<i32>} : memref<64x64xf32, #tpu.memory_space<vmem>>, vector<8x32xf32>,
    %c1_i32 = arith.constant 1 : i32
    %c8_i32_16 = arith.constant 8 : i32
    %48 = arith.muli %c1_i32, %c8_i32_16 : i32
    %49 = tpu.assume_multiple %48, 8 : i32
    %c7_i32_17 = arith.constant 7 : i32
    %50 = arith.subi %c7_i32_17, %c1_i32 : i32
    %c8_i32_18 = arith.constant 8 : i32
    %51 = arith.muli %50, %c8_i32_18 : i32
    %52 = tpu.assume_multiple %51, 8 : i32
    %53 = arith.truncf %41 : vector<16x32xf32> to vector<16x32xbf16>
    %cst_19 = arith.constant dense<0.000000e+00> : vector<16x256xf32>
    %54 = tpu.matmul %53, %8, %cst_19 {dimension_numbers = #tpu.dot_dimension_numbers<[1], [0], [0], [1], [0, 0, 1, 1], [], []>} : vector<16x32xbf16>, vector<32x256xbf16>, vector<16x256xf32> -> vector<16x256xf32>
    %55 = arith.index_cast %49 : i32 to index
    %c0_20 = arith.constant 0 : index
    %56 = vector.load %arg11[%55, %c0_20] : memref<64x256xf32, #tpu.memory_space<vmem>>, vector<8x128xf32>
    %57 = vector.extract_strided_slice %54 {offsets = [0, 0], sizes = [8, 128], strides = [1, 1]} : vector<16x256xf32> to vector<8x128xf32>
    %58 = arith.addf %56, %57 : vector<8x128xf32>
    %59 = arith.index_cast %52 : i32 to index
    %c128_21 = arith.constant 128 : index
    %60 = vector.load %arg11[%59, %c128_21] : memref<64x256xf32, #tpu.memory_space<vmem>>, vector<8x128xf32>
    %61 = vector.extract_strided_slice %54 {offsets = [8, 128], sizes = [8, 128], strides = [1, 1]} : vector<16x256xf32> to vector<8x128xf32>
    %62 = arith.addf %60, %61 : vector<8x128xf32>
    %63 = tpu.concatenate %58, %62 in 0 : vector<8x128xf32>, vector<8x128xf32> -> vector<16x128xf32>
    %64 = arith.negf %63 : vector<16x128xf32>
    %65 = math.exp %64 : vector<16x128xf32>
    %cst_22 = arith.constant 1.000000e+00 : f32
    %66 = vector.broadcast %cst_22 : f32 to vector<16x128xf32>
    %67 = arith.addf %66, %65 : vector<16x128xf32>
    %68 = arith.divf %66, %67 : vector<16x128xf32>
    %69 = vector.extract_strided_slice %68 {offsets = [0, 0], sizes = [16, 32], strides = [1, 1]} : vector<16x128xf32> to vector<16x32xf32>
    %70 = vector.extract_strided_slice %68 {offsets = [0, 32], sizes = [16, 32], strides = [1, 1]} : vector<16x128xf32> to vector<16x32xf32>
    %71 = vector.extract_strided_slice %68 {offsets = [0, 96], sizes = [16, 32], strides = [1, 1]} : vector<16x128xf32> to vector<16x32xf32>
    %72 = vector.extract_strided_slice %63 {offsets = [0, 64], sizes = [16, 32], strides = [1, 1]} : vector<16x128xf32> to vector<16x32xf32>
    %73 = math.tanh %72 : vector<16x32xf32>
    %74 = arith.mulf %70, %39 : vector<16x32xf32>
    %75 = arith.mulf %69, %73 : vector<16x32xf32>
    %76 = arith.addf %74, %75 : vector<16x32xf32>
    %77 = math.tanh %76 : vector<16x32xf32>
    %78 = arith.mulf %71, %77 : vector<16x32xf32>
    %79 = vector.extract_strided_slice %78 {offsets = [0, 0], sizes = [8, 32], strides = [1, 1]} : vector<16x32xf32> to vector<8x32xf32>
    %80 = arith.index_cast %49 : i32 to index
    %c0_23 = arith.constant 0 : index
    %81 = vector.load %arg12[%80, %c0_23] : memref<64x64xf32, #tpu.memory_space<vmem>>, vector<8x32xf32>
    tpu.vector_store %arg12[%80, %c0_23], %79 {strides = array<i32>} : memref<64x64xf32, #tpu.memory_space<vmem>>, vector<8x32xf32>,
    %82 = vector.extract_strided_slice %78 {offsets = [8, 0], sizes = [8, 32], strides = [1, 1]} : vector<16x32xf32> to vector<8x32xf32>
    %83 = arith.index_cast %52 : i32 to index
    %c32_24 = arith.constant 32 : index
    %84 = vector.load %arg12[%83, %c32_24] : memref<64x64xf32, #tpu.memory_space<vmem>>, vector<8x32xf32>
    tpu.vector_store %arg12[%83, %c32_24], %82 {strides = array<i32>} : memref<64x64xf32, #tpu.memory_space<vmem>>, vector<8x32xf32>,
    %c2_i32 = arith.constant 2 : i32
    %c8_i32_25 = arith.constant 8 : i32
    %85 = arith.muli %c2_i32, %c8_i32_25 : i32
    %86 = tpu.assume_multiple %85, 8 : i32
    %c7_i32_26 = arith.constant 7 : i32
    %87 = arith.subi %c7_i32_26, %c2_i32 : i32
    %c8_i32_27 = arith.constant 8 : i32
    %88 = arith.muli %87, %c8_i32_27 : i32
    %89 = tpu.assume_multiple %88, 8 : i32
    %90 = arith.truncf %78 : vector<16x32xf32> to vector<16x32xbf16>
    %cst_28 = arith.constant dense<0.000000e+00> : vector<16x256xf32>
    %91 = tpu.matmul %90, %8, %cst_28 {dimension_numbers = #tpu.dot_dimension_numbers<[1], [0], [0], [1], [0, 0, 1, 1], [], []>} : vector<16x32xbf16>, vector<32x256xbf16>, vector<16x256xf32> -> vector<16x256xf32>
    %92 = arith.index_cast %86 : i32 to index
    %c0_29 = arith.constant 0 : index
    %93 = vector.load %arg11[%92, %c0_29] : memref<64x256xf32, #tpu.memory_space<vmem>>, vector<8x128xf32>
    %94 = vector.extract_strided_slice %91 {offsets = [0, 0], sizes = [8, 128], strides = [1, 1]} : vector<16x256xf32> to vector<8x128xf32>
    %95 = arith.addf %93, %94 : vector<8x128xf32>
    %96 = arith.index_cast %89 : i32 to index
    %c128_30 = arith.constant 128 : index
    %97 = vector.load %arg11[%96, %c128_30] : memref<64x256xf32, #tpu.memory_space<vmem>>, vector<8x128xf32>
    %98 = vector.extract_strided_slice %91 {offsets = [8, 128], sizes = [8, 128], strides = [1, 1]} : vector<16x256xf32> to vector<8x128xf32>
    %99 = arith.addf %97, %98 : vector<8x128xf32>
    %100 = tpu.concatenate %95, %99 in 0 : vector<8x128xf32>, vector<8x128xf32> -> vector<16x128xf32>
    %101 = arith.negf %100 : vector<16x128xf32>
    %102 = math.exp %101 : vector<16x128xf32>
    %cst_31 = arith.constant 1.000000e+00 : f32
    %103 = vector.broadcast %cst_31 : f32 to vector<16x128xf32>
    %104 = arith.addf %103, %102 : vector<16x128xf32>
    %105 = arith.divf %103, %104 : vector<16x128xf32>
    %106 = vector.extract_strided_slice %105 {offsets = [0, 0], sizes = [16, 32], strides = [1, 1]} : vector<16x128xf32> to vector<16x32xf32>
    %107 = vector.extract_strided_slice %105 {offsets = [0, 32], sizes = [16, 32], strides = [1, 1]} : vector<16x128xf32> to vector<16x32xf32>
    %108 = vector.extract_strided_slice %105 {offsets = [0, 96], sizes = [16, 32], strides = [1, 1]} : vector<16x128xf32> to vector<16x32xf32>
    %109 = vector.extract_strided_slice %100 {offsets = [0, 64], sizes = [16, 32], strides = [1, 1]} : vector<16x128xf32> to vector<16x32xf32>
    %110 = math.tanh %109 : vector<16x32xf32>
    %111 = arith.mulf %107, %76 : vector<16x32xf32>
    %112 = arith.mulf %106, %110 : vector<16x32xf32>
    %113 = arith.addf %111, %112 : vector<16x32xf32>
    %114 = math.tanh %113 : vector<16x32xf32>
    %115 = arith.mulf %108, %114 : vector<16x32xf32>
    %116 = vector.extract_strided_slice %115 {offsets = [0, 0], sizes = [8, 32], strides = [1, 1]} : vector<16x32xf32> to vector<8x32xf32>
    %117 = arith.index_cast %86 : i32 to index
    %c0_32 = arith.constant 0 : index
    %118 = vector.load %arg12[%117, %c0_32] : memref<64x64xf32, #tpu.memory_space<vmem>>, vector<8x32xf32>
    tpu.vector_store %arg12[%117, %c0_32], %116 {strides = array<i32>} : memref<64x64xf32, #tpu.memory_space<vmem>>, vector<8x32xf32>,
    %119 = vector.extract_strided_slice %115 {offsets = [8, 0], sizes = [8, 32], strides = [1, 1]} : vector<16x32xf32> to vector<8x32xf32>
    %120 = arith.index_cast %89 : i32 to index
    %c32_33 = arith.constant 32 : index
    %121 = vector.load %arg12[%120, %c32_33] : memref<64x64xf32, #tpu.memory_space<vmem>>, vector<8x32xf32>
    tpu.vector_store %arg12[%120, %c32_33], %119 {strides = array<i32>} : memref<64x64xf32, #tpu.memory_space<vmem>>, vector<8x32xf32>,
    %c3_i32 = arith.constant 3 : i32
    %c8_i32_34 = arith.constant 8 : i32
    %122 = arith.muli %c3_i32, %c8_i32_34 : i32
    %123 = tpu.assume_multiple %122, 8 : i32
    %c7_i32_35 = arith.constant 7 : i32
    %124 = arith.subi %c7_i32_35, %c3_i32 : i32
    %c8_i32_36 = arith.constant 8 : i32
    %125 = arith.muli %124, %c8_i32_36 : i32
    %126 = tpu.assume_multiple %125, 8 : i32
    %127 = arith.truncf %115 : vector<16x32xf32> to vector<16x32xbf16>
    %cst_37 = arith.constant dense<0.000000e+00> : vector<16x256xf32>
    %128 = tpu.matmul %127, %8, %cst_37 {dimension_numbers = #tpu.dot_dimension_numbers<[1], [0], [0], [1], [0, 0, 1, 1], [], []>} : vector<16x32xbf16>, vector<32x256xbf16>, vector<16x256xf32> -> vector<16x256xf32>
    %129 = arith.index_cast %123 : i32 to index
    %c0_38 = arith.constant 0 : index
    %130 = vector.load %arg11[%129, %c0_38] : memref<64x256xf32, #tpu.memory_space<vmem>>, vector<8x128xf32>
    %131 = vector.extract_strided_slice %128 {offsets = [0, 0], sizes = [8, 128], strides = [1, 1]} : vector<16x256xf32> to vector<8x128xf32>
    %132 = arith.addf %130, %131 : vector<8x128xf32>
    %133 = arith.index_cast %126 : i32 to index
    %c128_39 = arith.constant 128 : index
    %134 = vector.load %arg11[%133, %c128_39] : memref<64x256xf32, #tpu.memory_space<vmem>>, vector<8x128xf32>
    %135 = vector.extract_strided_slice %128 {offsets = [8, 128], sizes = [8, 128], strides = [1, 1]} : vector<16x256xf32> to vector<8x128xf32>
    %136 = arith.addf %134, %135 : vector<8x128xf32>
    %137 = tpu.concatenate %132, %136 in 0 : vector<8x128xf32>, vector<8x128xf32> -> vector<16x128xf32>
    %138 = arith.negf %137 : vector<16x128xf32>
    %139 = math.exp %138 : vector<16x128xf32>
    %cst_40 = arith.constant 1.000000e+00 : f32
    %140 = vector.broadcast %cst_40 : f32 to vector<16x128xf32>
    %141 = arith.addf %140, %139 : vector<16x128xf32>
    %142 = arith.divf %140, %141 : vector<16x128xf32>
    %143 = vector.extract_strided_slice %142 {offsets = [0, 0], sizes = [16, 32], strides = [1, 1]} : vector<16x128xf32> to vector<16x32xf32>
    %144 = vector.extract_strided_slice %142 {offsets = [0, 32], sizes = [16, 32], strides = [1, 1]} : vector<16x128xf32> to vector<16x32xf32>
    %145 = vector.extract_strided_slice %142 {offsets = [0, 96], sizes = [16, 32], strides = [1, 1]} : vector<16x128xf32> to vector<16x32xf32>
    %146 = vector.extract_strided_slice %137 {offsets = [0, 64], sizes = [16, 32], strides = [1, 1]} : vector<16x128xf32> to vector<16x32xf32>
    %147 = math.tanh %146 : vector<16x32xf32>
    %148 = arith.mulf %144, %113 : vector<16x32xf32>
    %149 = arith.mulf %143, %147 : vector<16x32xf32>
    %150 = arith.addf %148, %149 : vector<16x32xf32>
    %151 = math.tanh %150 : vector<16x32xf32>
    %152 = arith.mulf %145, %151 : vector<16x32xf32>
    %153 = vector.extract_strided_slice %152 {offsets = [0, 0], sizes = [8, 32], strides = [1, 1]} : vector<16x32xf32> to vector<8x32xf32>
    %154 = arith.index_cast %123 : i32 to index
    %c0_41 = arith.constant 0 : index
    %155 = vector.load %arg12[%154, %c0_41] : memref<64x64xf32, #tpu.memory_space<vmem>>, vector<8x32xf32>
    tpu.vector_store %arg12[%154, %c0_41], %153 {strides = array<i32>} : memref<64x64xf32, #tpu.memory_space<vmem>>, vector<8x32xf32>,
    %156 = vector.extract_strided_slice %152 {offsets = [8, 0], sizes = [8, 32], strides = [1, 1]} : vector<16x32xf32> to vector<8x32xf32>
    %157 = arith.index_cast %126 : i32 to index
    %c32_42 = arith.constant 32 : index
    %158 = vector.load %arg12[%157, %c32_42] : memref<64x64xf32, #tpu.memory_space<vmem>>, vector<8x32xf32>
    tpu.vector_store %arg12[%157, %c32_42], %156 {strides = array<i32>} : memref<64x64xf32, #tpu.memory_space<vmem>>, vector<8x32xf32>,
    %c4_i32 = arith.constant 4 : i32
    %c8_i32_43 = arith.constant 8 : i32
    %159 = arith.muli %c4_i32, %c8_i32_43 : i32
    %160 = tpu.assume_multiple %159, 8 : i32
    %c7_i32_44 = arith.constant 7 : i32
    %161 = arith.subi %c7_i32_44, %c4_i32 : i32
    %c8_i32_45 = arith.constant 8 : i32
    %162 = arith.muli %161, %c8_i32_45 : i32
    %163 = tpu.assume_multiple %162, 8 : i32
    %164 = arith.truncf %152 : vector<16x32xf32> to vector<16x32xbf16>
    %cst_46 = arith.constant dense<0.000000e+00> : vector<16x256xf32>
    %165 = tpu.matmul %164, %8, %cst_46 {dimension_numbers = #tpu.dot_dimension_numbers<[1], [0], [0], [1], [0, 0, 1, 1], [], []>} : vector<16x32xbf16>, vector<32x256xbf16>, vector<16x256xf32> -> vector<16x256xf32>
    %166 = arith.index_cast %160 : i32 to index
    %c0_47 = arith.constant 0 : index
    %167 = vector.load %arg11[%166, %c0_47] : memref<64x256xf32, #tpu.memory_space<vmem>>, vector<8x128xf32>
    %168 = vector.extract_strided_slice %165 {offsets = [0, 0], sizes = [8, 128], strides = [1, 1]} : vector<16x256xf32> to vector<8x128xf32>
    %169 = arith.addf %167, %168 : vector<8x128xf32>
    %170 = arith.index_cast %163 : i32 to index
    %c128_48 = arith.constant 128 : index
    %171 = vector.load %arg11[%170, %c128_48] : memref<64x256xf32, #tpu.memory_space<vmem>>, vector<8x128xf32>
    %172 = vector.extract_strided_slice %165 {offsets = [8, 128], sizes = [8, 128], strides = [1, 1]} : vector<16x256xf32> to vector<8x128xf32>
    %173 = arith.addf %171, %172 : vector<8x128xf32>
    %174 = tpu.concatenate %169, %173 in 0 : vector<8x128xf32>, vector<8x128xf32> -> vector<16x128xf32>
    %175 = arith.negf %174 : vector<16x128xf32>
    %176 = math.exp %175 : vector<16x128xf32>
    %cst_49 = arith.constant 1.000000e+00 : f32
    %177 = vector.broadcast %cst_49 : f32 to vector<16x128xf32>
    %178 = arith.addf %177, %176 : vector<16x128xf32>
    %179 = arith.divf %177, %178 : vector<16x128xf32>
    %180 = vector.extract_strided_slice %179 {offsets = [0, 0], sizes = [16, 32], strides = [1, 1]} : vector<16x128xf32> to vector<16x32xf32>
    %181 = vector.extract_strided_slice %179 {offsets = [0, 32], sizes = [16, 32], strides = [1, 1]} : vector<16x128xf32> to vector<16x32xf32>
    %182 = vector.extract_strided_slice %179 {offsets = [0, 96], sizes = [16, 32], strides = [1, 1]} : vector<16x128xf32> to vector<16x32xf32>
    %183 = vector.extract_strided_slice %174 {offsets = [0, 64], sizes = [16, 32], strides = [1, 1]} : vector<16x128xf32> to vector<16x32xf32>
    %184 = math.tanh %183 : vector<16x32xf32>
    %185 = arith.mulf %181, %150 : vector<16x32xf32>
    %186 = arith.mulf %180, %184 : vector<16x32xf32>
    %187 = arith.addf %185, %186 : vector<16x32xf32>
    %188 = math.tanh %187 : vector<16x32xf32>
    %189 = arith.mulf %182, %188 : vector<16x32xf32>
    %190 = vector.extract_strided_slice %189 {offsets = [0, 0], sizes = [8, 32], strides = [1, 1]} : vector<16x32xf32> to vector<8x32xf32>
    %191 = arith.index_cast %160 : i32 to index
    %c0_50 = arith.constant 0 : index
    %192 = vector.load %arg12[%191, %c0_50] : memref<64x64xf32, #tpu.memory_space<vmem>>, vector<8x32xf32>
    tpu.vector_store %arg12[%191, %c0_50], %190 {strides = array<i32>} : memref<64x64xf32, #tpu.memory_space<vmem>>, vector<8x32xf32>,
    %193 = vector.extract_strided_slice %189 {offsets = [8, 0], sizes = [8, 32], strides = [1, 1]} : vector<16x32xf32> to vector<8x32xf32>
    %194 = arith.index_cast %163 : i32 to index
    %c32_51 = arith.constant 32 : index
    %195 = vector.load %arg12[%194, %c32_51] : memref<64x64xf32, #tpu.memory_space<vmem>>, vector<8x32xf32>
    tpu.vector_store %arg12[%194, %c32_51], %193 {strides = array<i32>} : memref<64x64xf32, #tpu.memory_space<vmem>>, vector<8x32xf32>,
    %c5_i32 = arith.constant 5 : i32
    %c8_i32_52 = arith.constant 8 : i32
    %196 = arith.muli %c5_i32, %c8_i32_52 : i32
    %197 = tpu.assume_multiple %196, 8 : i32
    %c7_i32_53 = arith.constant 7 : i32
    %198 = arith.subi %c7_i32_53, %c5_i32 : i32
    %c8_i32_54 = arith.constant 8 : i32
    %199 = arith.muli %198, %c8_i32_54 : i32
    %200 = tpu.assume_multiple %199, 8 : i32
    %201 = arith.truncf %189 : vector<16x32xf32> to vector<16x32xbf16>
    %cst_55 = arith.constant dense<0.000000e+00> : vector<16x256xf32>
    %202 = tpu.matmul %201, %8, %cst_55 {dimension_numbers = #tpu.dot_dimension_numbers<[1], [0], [0], [1], [0, 0, 1, 1], [], []>} : vector<16x32xbf16>, vector<32x256xbf16>, vector<16x256xf32> -> vector<16x256xf32>
    %203 = arith.index_cast %197 : i32 to index
    %c0_56 = arith.constant 0 : index
    %204 = vector.load %arg11[%203, %c0_56] : memref<64x256xf32, #tpu.memory_space<vmem>>, vector<8x128xf32>
    %205 = vector.extract_strided_slice %202 {offsets = [0, 0], sizes = [8, 128], strides = [1, 1]} : vector<16x256xf32> to vector<8x128xf32>
    %206 = arith.addf %204, %205 : vector<8x128xf32>
    %207 = arith.index_cast %200 : i32 to index
    %c128_57 = arith.constant 128 : index
    %208 = vector.load %arg11[%207, %c128_57] : memref<64x256xf32, #tpu.memory_space<vmem>>, vector<8x128xf32>
    %209 = vector.extract_strided_slice %202 {offsets = [8, 128], sizes = [8, 128], strides = [1, 1]} : vector<16x256xf32> to vector<8x128xf32>
    %210 = arith.addf %208, %209 : vector<8x128xf32>
    %211 = tpu.concatenate %206, %210 in 0 : vector<8x128xf32>, vector<8x128xf32> -> vector<16x128xf32>
    %212 = arith.negf %211 : vector<16x128xf32>
    %213 = math.exp %212 : vector<16x128xf32>
    %cst_58 = arith.constant 1.000000e+00 : f32
    %214 = vector.broadcast %cst_58 : f32 to vector<16x128xf32>
    %215 = arith.addf %214, %213 : vector<16x128xf32>
    %216 = arith.divf %214, %215 : vector<16x128xf32>
    %217 = vector.extract_strided_slice %216 {offsets = [0, 0], sizes = [16, 32], strides = [1, 1]} : vector<16x128xf32> to vector<16x32xf32>
    %218 = vector.extract_strided_slice %216 {offsets = [0, 32], sizes = [16, 32], strides = [1, 1]} : vector<16x128xf32> to vector<16x32xf32>
    %219 = vector.extract_strided_slice %216 {offsets = [0, 96], sizes = [16, 32], strides = [1, 1]} : vector<16x128xf32> to vector<16x32xf32>
    %220 = vector.extract_strided_slice %211 {offsets = [0, 64], sizes = [16, 32], strides = [1, 1]} : vector<16x128xf32> to vector<16x32xf32>
    %221 = math.tanh %220 : vector<16x32xf32>
    %222 = arith.mulf %218, %187 : vector<16x32xf32>
    %223 = arith.mulf %217, %221 : vector<16x32xf32>
    %224 = arith.addf %222, %223 : vector<16x32xf32>
    %225 = math.tanh %224 : vector<16x32xf32>
    %226 = arith.mulf %219, %225 : vector<16x32xf32>
    %227 = vector.extract_strided_slice %226 {offsets = [0, 0], sizes = [8, 32], strides = [1, 1]} : vector<16x32xf32> to vector<8x32xf32>
    %228 = arith.index_cast %197 : i32 to index
    %c0_59 = arith.constant 0 : index
    %229 = vector.load %arg12[%228, %c0_59] : memref<64x64xf32, #tpu.memory_space<vmem>>, vector<8x32xf32>
    tpu.vector_store %arg12[%228, %c0_59], %227 {strides = array<i32>} : memref<64x64xf32, #tpu.memory_space<vmem>>, vector<8x32xf32>,
    %230 = vector.extract_strided_slice %226 {offsets = [8, 0], sizes = [8, 32], strides = [1, 1]} : vector<16x32xf32> to vector<8x32xf32>
    %231 = arith.index_cast %200 : i32 to index
    %c32_60 = arith.constant 32 : index
    %232 = vector.load %arg12[%231, %c32_60] : memref<64x64xf32, #tpu.memory_space<vmem>>, vector<8x32xf32>
    tpu.vector_store %arg12[%231, %c32_60], %230 {strides = array<i32>} : memref<64x64xf32, #tpu.memory_space<vmem>>, vector<8x32xf32>,
    %c6_i32 = arith.constant 6 : i32
    %c8_i32_61 = arith.constant 8 : i32
    %233 = arith.muli %c6_i32, %c8_i32_61 : i32
    %234 = tpu.assume_multiple %233, 8 : i32
    %c7_i32_62 = arith.constant 7 : i32
    %235 = arith.subi %c7_i32_62, %c6_i32 : i32
    %c8_i32_63 = arith.constant 8 : i32
    %236 = arith.muli %235, %c8_i32_63 : i32
    %237 = tpu.assume_multiple %236, 8 : i32
    %238 = arith.truncf %226 : vector<16x32xf32> to vector<16x32xbf16>
    %cst_64 = arith.constant dense<0.000000e+00> : vector<16x256xf32>
    %239 = tpu.matmul %238, %8, %cst_64 {dimension_numbers = #tpu.dot_dimension_numbers<[1], [0], [0], [1], [0, 0, 1, 1], [], []>} : vector<16x32xbf16>, vector<32x256xbf16>, vector<16x256xf32> -> vector<16x256xf32>
    %240 = arith.index_cast %234 : i32 to index
    %c0_65 = arith.constant 0 : index
    %241 = vector.load %arg11[%240, %c0_65] : memref<64x256xf32, #tpu.memory_space<vmem>>, vector<8x128xf32>
    %242 = vector.extract_strided_slice %239 {offsets = [0, 0], sizes = [8, 128], strides = [1, 1]} : vector<16x256xf32> to vector<8x128xf32>
    %243 = arith.addf %241, %242 : vector<8x128xf32>
    %244 = arith.index_cast %237 : i32 to index
    %c128_66 = arith.constant 128 : index
    %245 = vector.load %arg11[%244, %c128_66] : memref<64x256xf32, #tpu.memory_space<vmem>>, vector<8x128xf32>
    %246 = vector.extract_strided_slice %239 {offsets = [8, 128], sizes = [8, 128], strides = [1, 1]} : vector<16x256xf32> to vector<8x128xf32>
    %247 = arith.addf %245, %246 : vector<8x128xf32>
    %248 = tpu.concatenate %243, %247 in 0 : vector<8x128xf32>, vector<8x128xf32> -> vector<16x128xf32>
    %249 = arith.negf %248 : vector<16x128xf32>
    %250 = math.exp %249 : vector<16x128xf32>
    %cst_67 = arith.constant 1.000000e+00 : f32
    %251 = vector.broadcast %cst_67 : f32 to vector<16x128xf32>
    %252 = arith.addf %251, %250 : vector<16x128xf32>
    %253 = arith.divf %251, %252 : vector<16x128xf32>
    %254 = vector.extract_strided_slice %253 {offsets = [0, 0], sizes = [16, 32], strides = [1, 1]} : vector<16x128xf32> to vector<16x32xf32>
    %255 = vector.extract_strided_slice %253 {offsets = [0, 32], sizes = [16, 32], strides = [1, 1]} : vector<16x128xf32> to vector<16x32xf32>
    %256 = vector.extract_strided_slice %253 {offsets = [0, 96], sizes = [16, 32], strides = [1, 1]} : vector<16x128xf32> to vector<16x32xf32>
    %257 = vector.extract_strided_slice %248 {offsets = [0, 64], sizes = [16, 32], strides = [1, 1]} : vector<16x128xf32> to vector<16x32xf32>
    %258 = math.tanh %257 : vector<16x32xf32>
    %259 = arith.mulf %255, %224 : vector<16x32xf32>
    %260 = arith.mulf %254, %258 : vector<16x32xf32>
    %261 = arith.addf %259, %260 : vector<16x32xf32>
    %262 = math.tanh %261 : vector<16x32xf32>
    %263 = arith.mulf %256, %262 : vector<16x32xf32>
    %264 = vector.extract_strided_slice %263 {offsets = [0, 0], sizes = [8, 32], strides = [1, 1]} : vector<16x32xf32> to vector<8x32xf32>
    %265 = arith.index_cast %234 : i32 to index
    %c0_68 = arith.constant 0 : index
    %266 = vector.load %arg12[%265, %c0_68] : memref<64x64xf32, #tpu.memory_space<vmem>>, vector<8x32xf32>
    tpu.vector_store %arg12[%265, %c0_68], %264 {strides = array<i32>} : memref<64x64xf32, #tpu.memory_space<vmem>>, vector<8x32xf32>,
    %267 = vector.extract_strided_slice %263 {offsets = [8, 0], sizes = [8, 32], strides = [1, 1]} : vector<16x32xf32> to vector<8x32xf32>
    %268 = arith.index_cast %237 : i32 to index
    %c32_69 = arith.constant 32 : index
    %269 = vector.load %arg12[%268, %c32_69] : memref<64x64xf32, #tpu.memory_space<vmem>>, vector<8x32xf32>
    tpu.vector_store %arg12[%268, %c32_69], %267 {strides = array<i32>} : memref<64x64xf32, #tpu.memory_space<vmem>>, vector<8x32xf32>,
    %c7_i32_70 = arith.constant 7 : i32
    %c8_i32_71 = arith.constant 8 : i32
    %270 = arith.muli %c7_i32_70, %c8_i32_71 : i32
    %271 = tpu.assume_multiple %270, 8 : i32
    %c7_i32_72 = arith.constant 7 : i32
    %272 = arith.subi %c7_i32_72, %c7_i32_70 : i32
    %c8_i32_73 = arith.constant 8 : i32
    %273 = arith.muli %272, %c8_i32_73 : i32
    %274 = tpu.assume_multiple %273, 8 : i32
    %275 = arith.truncf %263 : vector<16x32xf32> to vector<16x32xbf16>
    %cst_74 = arith.constant dense<0.000000e+00> : vector<16x256xf32>
    %276 = tpu.matmul %275, %8, %cst_74 {dimension_numbers = #tpu.dot_dimension_numbers<[1], [0], [0], [1], [0, 0, 1, 1], [], []>} : vector<16x32xbf16>, vector<32x256xbf16>, vector<16x256xf32> -> vector<16x256xf32>
    %277 = arith.index_cast %271 : i32 to index
    %c0_75 = arith.constant 0 : index
    %278 = vector.load %arg11[%277, %c0_75] : memref<64x256xf32, #tpu.memory_space<vmem>>, vector<8x128xf32>
    %279 = vector.extract_strided_slice %276 {offsets = [0, 0], sizes = [8, 128], strides = [1, 1]} : vector<16x256xf32> to vector<8x128xf32>
    %280 = arith.addf %278, %279 : vector<8x128xf32>
    %281 = arith.index_cast %274 : i32 to index
    %c128_76 = arith.constant 128 : index
    %282 = vector.load %arg11[%281, %c128_76] : memref<64x256xf32, #tpu.memory_space<vmem>>, vector<8x128xf32>
    %283 = vector.extract_strided_slice %276 {offsets = [8, 128], sizes = [8, 128], strides = [1, 1]} : vector<16x256xf32> to vector<8x128xf32>
    %284 = arith.addf %282, %283 : vector<8x128xf32>
    %285 = tpu.concatenate %280, %284 in 0 : vector<8x128xf32>, vector<8x128xf32> -> vector<16x128xf32>
    %286 = arith.negf %285 : vector<16x128xf32>
    %287 = math.exp %286 : vector<16x128xf32>
    %cst_77 = arith.constant 1.000000e+00 : f32
    %288 = vector.broadcast %cst_77 : f32 to vector<16x128xf32>
    %289 = arith.addf %288, %287 : vector<16x128xf32>
    %290 = arith.divf %288, %289 : vector<16x128xf32>
    %291 = vector.extract_strided_slice %290 {offsets = [0, 0], sizes = [16, 32], strides = [1, 1]} : vector<16x128xf32> to vector<16x32xf32>
    %292 = vector.extract_strided_slice %290 {offsets = [0, 32], sizes = [16, 32], strides = [1, 1]} : vector<16x128xf32> to vector<16x32xf32>
    %293 = vector.extract_strided_slice %290 {offsets = [0, 96], sizes = [16, 32], strides = [1, 1]} : vector<16x128xf32> to vector<16x32xf32>
    %294 = vector.extract_strided_slice %285 {offsets = [0, 64], sizes = [16, 32], strides = [1, 1]} : vector<16x128xf32> to vector<16x32xf32>
    %295 = math.tanh %294 : vector<16x32xf32>
    %296 = arith.mulf %292, %261 : vector<16x32xf32>
    %297 = arith.mulf %291, %295 : vector<16x32xf32>
    %298 = arith.addf %296, %297 : vector<16x32xf32>
    %299 = math.tanh %298 : vector<16x32xf32>
    %300 = arith.mulf %293, %299 : vector<16x32xf32>
    %301 = vector.extract_strided_slice %300 {offsets = [0, 0], sizes = [8, 32], strides = [1, 1]} : vector<16x32xf32> to vector<8x32xf32>
    %302 = arith.index_cast %271 : i32 to index
    %c0_78 = arith.constant 0 : index
    %303 = vector.load %arg12[%302, %c0_78] : memref<64x64xf32, #tpu.memory_space<vmem>>, vector<8x32xf32>
    tpu.vector_store %arg12[%302, %c0_78], %301 {strides = array<i32>} : memref<64x64xf32, #tpu.memory_space<vmem>>, vector<8x32xf32>,
    %304 = vector.extract_strided_slice %300 {offsets = [8, 0], sizes = [8, 32], strides = [1, 1]} : vector<16x32xf32> to vector<8x32xf32>
    %305 = arith.index_cast %274 : i32 to index
    %c32_79 = arith.constant 32 : index
    %306 = vector.load %arg12[%305, %c32_79] : memref<64x64xf32, #tpu.memory_space<vmem>>, vector<8x32xf32>
    tpu.vector_store %arg12[%305, %c32_79], %304 {strides = array<i32>} : memref<64x64xf32, #tpu.memory_space<vmem>>, vector<8x32xf32>,
    %c8_i32_80 = arith.constant 8 : i32
    %307 = vector.extract_strided_slice %300 {offsets = [0, 0], sizes = [8, 32], strides = [1, 1]} : vector<16x32xf32> to vector<8x32xf32>
    %308 = vector.extract_strided_slice %300 {offsets = [8, 0], sizes = [8, 32], strides = [1, 1]} : vector<16x32xf32> to vector<8x32xf32>
    %c0_81 = arith.constant 0 : index
    %c0_82 = arith.constant 0 : index
    %309 = vector.load %arg12[%c0_81, %c0_82] : memref<64x64xf32, #tpu.memory_space<vmem>>, vector<64x64xf32>
    %310 = arith.truncf %309 : vector<64x64xf32> to vector<64x64xbf16>
    %c0_83 = arith.constant 0 : index
    %c0_84 = arith.constant 0 : index
    %311 = vector.load %arg7[%c0_83, %c0_84] : memref<1x256xf32, #tpu.memory_space<vmem>>, vector<1x256xf32>
    %312 = vector.shape_cast %311 : vector<1x256xf32> to vector<1x256xf32>
    %313 = vector.broadcast %312 : vector<1x256xf32> to vector<64x256xf32>
    %c0_85 = arith.constant 0 : index
    %c0_86 = arith.constant 0 : index
    %314 = vector.load %arg5[%c0_85, %c0_86] : memref<64x256xbf16, #tpu.memory_space<vmem>>, vector<64x256xbf16>
    %cst_87 = arith.constant dense<0.000000e+00> : vector<64x256xf32>
    %315 = tpu.matmul %310, %314, %cst_87 {dimension_numbers = #tpu.dot_dimension_numbers<[1], [0], [0], [1], [0, 0, 1, 1], [], []>} : vector<64x64xbf16>, vector<64x256xbf16>, vector<64x256xf32> -> vector<64x256xf32>
    %316 = arith.addf %313, %315 : vector<64x256xf32>
    %c0_88 = arith.constant 0 : index
    %c0_89 = arith.constant 0 : index
    %317 = vector.load %arg11[%c0_88, %c0_89] : memref<64x256xf32, #tpu.memory_space<vmem>>, vector<64x256xf32>
    tpu.vector_store %arg11[%c0_88, %c0_89], %316 {strides = array<i32>} : memref<64x256xf32, #tpu.memory_space<vmem>>, vector<64x256xf32>,
    %c0_90 = arith.constant 0 : index
    %c0_91 = arith.constant 0 : index
    %318 = vector.load %arg6[%c0_90, %c0_91] : memref<32x256xbf16, #tpu.memory_space<vmem>>, vector<32x256xbf16>
    %cst_92 = arith.constant 0.000000e+00 : f32
    %319 = vector.broadcast %cst_92 : f32 to vector<16x32xf32>
    %cst_93 = arith.constant 0.000000e+00 : f32
    %320 = vector.broadcast %cst_93 : f32 to vector<16x32xf32>
    %c0_i32_94 = arith.constant 0 : i32
    %c8_i32_95 = arith.constant 8 : i32
    %321 = arith.muli %c0_i32_94, %c8_i32_95 : i32
    %322 = tpu.assume_multiple %321, 8 : i32
    %c7_i32_96 = arith.constant 7 : i32
    %323 = arith.subi %c7_i32_96, %c0_i32_94 : i32
    %c8_i32_97 = arith.constant 8 : i32
    %324 = arith.muli %323, %c8_i32_97 : i32
    %325 = tpu.assume_multiple %324, 8 : i32
    %326 = arith.truncf %319 : vector<16x32xf32> to vector<16x32xbf16>
    %cst_98 = arith.constant dense<0.000000e+00> : vector<16x256xf32>
    %327 = tpu.matmul %326, %318, %cst_98 {dimension_numbers = #tpu.dot_dimension_numbers<[1], [0], [0], [1], [0, 0, 1, 1], [], []>} : vector<16x32xbf16>, vector<32x256xbf16>, vector<16x256xf32> -> vector<16x256xf32>
    %328 = arith.index_cast %322 : i32 to index
    %c0_99 = arith.constant 0 : index
    %329 = vector.load %arg11[%328, %c0_99] : memref<64x256xf32, #tpu.memory_space<vmem>>, vector<8x128xf32>
    %330 = vector.extract_strided_slice %327 {offsets = [0, 0], sizes = [8, 128], strides = [1, 1]} : vector<16x256xf32> to vector<8x128xf32>
    %331 = arith.addf %329, %330 : vector<8x128xf32>
    %332 = arith.index_cast %325 : i32 to index
    %c128_100 = arith.constant 128 : index
    %333 = vector.load %arg11[%332, %c128_100] : memref<64x256xf32, #tpu.memory_space<vmem>>, vector<8x128xf32>
    %334 = vector.extract_strided_slice %327 {offsets = [8, 128], sizes = [8, 128], strides = [1, 1]} : vector<16x256xf32> to vector<8x128xf32>
    %335 = arith.addf %333, %334 : vector<8x128xf32>
    %336 = tpu.concatenate %331, %335 in 0 : vector<8x128xf32>, vector<8x128xf32> -> vector<16x128xf32>
    %337 = arith.negf %336 : vector<16x128xf32>
    %338 = math.exp %337 : vector<16x128xf32>
    %cst_101 = arith.constant 1.000000e+00 : f32
    %339 = vector.broadcast %cst_101 : f32 to vector<16x128xf32>
    %340 = arith.addf %339, %338 : vector<16x128xf32>
    %341 = arith.divf %339, %340 : vector<16x128xf32>
    %342 = vector.extract_strided_slice %341 {offsets = [0, 0], sizes = [16, 32], strides = [1, 1]} : vector<16x128xf32> to vector<16x32xf32>
    %343 = vector.extract_strided_slice %341 {offsets = [0, 32], sizes = [16, 32], strides = [1, 1]} : vector<16x128xf32> to vector<16x32xf32>
    %344 = vector.extract_strided_slice %341 {offsets = [0, 96], sizes = [16, 32], strides = [1, 1]} : vector<16x128xf32> to vector<16x32xf32>
    %345 = vector.extract_strided_slice %336 {offsets = [0, 64], sizes = [16, 32], strides = [1, 1]} : vector<16x128xf32> to vector<16x32xf32>
    %346 = math.tanh %345 : vector<16x32xf32>
    %347 = arith.mulf %343, %320 : vector<16x32xf32>
    %348 = arith.mulf %342, %346 : vector<16x32xf32>
    %349 = arith.addf %347, %348 : vector<16x32xf32>
    %350 = math.tanh %349 : vector<16x32xf32>
    %351 = arith.mulf %344, %350 : vector<16x32xf32>
    %c1_i32_102 = arith.constant 1 : i32
    %c8_i32_103 = arith.constant 8 : i32
    %352 = arith.muli %c1_i32_102, %c8_i32_103 : i32
    %353 = tpu.assume_multiple %352, 8 : i32
    %c7_i32_104 = arith.constant 7 : i32
    %354 = arith.subi %c7_i32_104, %c1_i32_102 : i32
    %c8_i32_105 = arith.constant 8 : i32
    %355 = arith.muli %354, %c8_i32_105 : i32
    %356 = tpu.assume_multiple %355, 8 : i32
    %357 = arith.truncf %351 : vector<16x32xf32> to vector<16x32xbf16>
    %cst_106 = arith.constant dense<0.000000e+00> : vector<16x256xf32>
    %358 = tpu.matmul %357, %318, %cst_106 {dimension_numbers = #tpu.dot_dimension_numbers<[1], [0], [0], [1], [0, 0, 1, 1], [], []>} : vector<16x32xbf16>, vector<32x256xbf16>, vector<16x256xf32> -> vector<16x256xf32>
    %359 = arith.index_cast %353 : i32 to index
    %c0_107 = arith.constant 0 : index
    %360 = vector.load %arg11[%359, %c0_107] : memref<64x256xf32, #tpu.memory_space<vmem>>, vector<8x128xf32>
    %361 = vector.extract_strided_slice %358 {offsets = [0, 0], sizes = [8, 128], strides = [1, 1]} : vector<16x256xf32> to vector<8x128xf32>
    %362 = arith.addf %360, %361 : vector<8x128xf32>
    %363 = arith.index_cast %356 : i32 to index
    %c128_108 = arith.constant 128 : index
    %364 = vector.load %arg11[%363, %c128_108] : memref<64x256xf32, #tpu.memory_space<vmem>>, vector<8x128xf32>
    %365 = vector.extract_strided_slice %358 {offsets = [8, 128], sizes = [8, 128], strides = [1, 1]} : vector<16x256xf32> to vector<8x128xf32>
    %366 = arith.addf %364, %365 : vector<8x128xf32>
    %367 = tpu.concatenate %362, %366 in 0 : vector<8x128xf32>, vector<8x128xf32> -> vector<16x128xf32>
    %368 = arith.negf %367 : vector<16x128xf32>
    %369 = math.exp %368 : vector<16x128xf32>
    %cst_109 = arith.constant 1.000000e+00 : f32
    %370 = vector.broadcast %cst_109 : f32 to vector<16x128xf32>
    %371 = arith.addf %370, %369 : vector<16x128xf32>
    %372 = arith.divf %370, %371 : vector<16x128xf32>
    %373 = vector.extract_strided_slice %372 {offsets = [0, 0], sizes = [16, 32], strides = [1, 1]} : vector<16x128xf32> to vector<16x32xf32>
    %374 = vector.extract_strided_slice %372 {offsets = [0, 32], sizes = [16, 32], strides = [1, 1]} : vector<16x128xf32> to vector<16x32xf32>
    %375 = vector.extract_strided_slice %372 {offsets = [0, 96], sizes = [16, 32], strides = [1, 1]} : vector<16x128xf32> to vector<16x32xf32>
    %376 = vector.extract_strided_slice %367 {offsets = [0, 64], sizes = [16, 32], strides = [1, 1]} : vector<16x128xf32> to vector<16x32xf32>
    %377 = math.tanh %376 : vector<16x32xf32>
    %378 = arith.mulf %374, %349 : vector<16x32xf32>
    %379 = arith.mulf %373, %377 : vector<16x32xf32>
    %380 = arith.addf %378, %379 : vector<16x32xf32>
    %381 = math.tanh %380 : vector<16x32xf32>
    %382 = arith.mulf %375, %381 : vector<16x32xf32>
    %c2_i32_110 = arith.constant 2 : i32
    %c8_i32_111 = arith.constant 8 : i32
    %383 = arith.muli %c2_i32_110, %c8_i32_111 : i32
    %384 = tpu.assume_multiple %383, 8 : i32
    %c7_i32_112 = arith.constant 7 : i32
    %385 = arith.subi %c7_i32_112, %c2_i32_110 : i32
    %c8_i32_113 = arith.constant 8 : i32
    %386 = arith.muli %385, %c8_i32_113 : i32
    %387 = tpu.assume_multiple %386, 8 : i32
    %388 = arith.truncf %382 : vector<16x32xf32> to vector<16x32xbf16>
    %cst_114 = arith.constant dense<0.000000e+00> : vector<16x256xf32>
    %389 = tpu.matmul %388, %318, %cst_114 {dimension_numbers = #tpu.dot_dimension_numbers<[1], [0], [0], [1], [0, 0, 1, 1], [], []>} : vector<16x32xbf16>, vector<32x256xbf16>, vector<16x256xf32> -> vector<16x256xf32>
    %390 = arith.index_cast %384 : i32 to index
    %c0_115 = arith.constant 0 : index
    %391 = vector.load %arg11[%390, %c0_115] : memref<64x256xf32, #tpu.memory_space<vmem>>, vector<8x128xf32>
    %392 = vector.extract_strided_slice %389 {offsets = [0, 0], sizes = [8, 128], strides = [1, 1]} : vector<16x256xf32> to vector<8x128xf32>
    %393 = arith.addf %391, %392 : vector<8x128xf32>
    %394 = arith.index_cast %387 : i32 to index
    %c128_116 = arith.constant 128 : index
    %395 = vector.load %arg11[%394, %c128_116] : memref<64x256xf32, #tpu.memory_space<vmem>>, vector<8x128xf32>
    %396 = vector.extract_strided_slice %389 {offsets = [8, 128], sizes = [8, 128], strides = [1, 1]} : vector<16x256xf32> to vector<8x128xf32>
    %397 = arith.addf %395, %396 : vector<8x128xf32>
    %398 = tpu.concatenate %393, %397 in 0 : vector<8x128xf32>, vector<8x128xf32> -> vector<16x128xf32>
    %399 = arith.negf %398 : vector<16x128xf32>
    %400 = math.exp %399 : vector<16x128xf32>
    %cst_117 = arith.constant 1.000000e+00 : f32
    %401 = vector.broadcast %cst_117 : f32 to vector<16x128xf32>
    %402 = arith.addf %401, %400 : vector<16x128xf32>
    %403 = arith.divf %401, %402 : vector<16x128xf32>
    %404 = vector.extract_strided_slice %403 {offsets = [0, 0], sizes = [16, 32], strides = [1, 1]} : vector<16x128xf32> to vector<16x32xf32>
    %405 = vector.extract_strided_slice %403 {offsets = [0, 32], sizes = [16, 32], strides = [1, 1]} : vector<16x128xf32> to vector<16x32xf32>
    %406 = vector.extract_strided_slice %403 {offsets = [0, 96], sizes = [16, 32], strides = [1, 1]} : vector<16x128xf32> to vector<16x32xf32>
    %407 = vector.extract_strided_slice %398 {offsets = [0, 64], sizes = [16, 32], strides = [1, 1]} : vector<16x128xf32> to vector<16x32xf32>
    %408 = math.tanh %407 : vector<16x32xf32>
    %409 = arith.mulf %405, %380 : vector<16x32xf32>
    %410 = arith.mulf %404, %408 : vector<16x32xf32>
    %411 = arith.addf %409, %410 : vector<16x32xf32>
    %412 = math.tanh %411 : vector<16x32xf32>
    %413 = arith.mulf %406, %412 : vector<16x32xf32>
    %c3_i32_118 = arith.constant 3 : i32
    %c8_i32_119 = arith.constant 8 : i32
    %414 = arith.muli %c3_i32_118, %c8_i32_119 : i32
    %415 = tpu.assume_multiple %414, 8 : i32
    %c7_i32_120 = arith.constant 7 : i32
    %416 = arith.subi %c7_i32_120, %c3_i32_118 : i32
    %c8_i32_121 = arith.constant 8 : i32
    %417 = arith.muli %416, %c8_i32_121 : i32
    %418 = tpu.assume_multiple %417, 8 : i32
    %419 = arith.truncf %413 : vector<16x32xf32> to vector<16x32xbf16>
    %cst_122 = arith.constant dense<0.000000e+00> : vector<16x256xf32>
    %420 = tpu.matmul %419, %318, %cst_122 {dimension_numbers = #tpu.dot_dimension_numbers<[1], [0], [0], [1], [0, 0, 1, 1], [], []>} : vector<16x32xbf16>, vector<32x256xbf16>, vector<16x256xf32> -> vector<16x256xf32>
    %421 = arith.index_cast %415 : i32 to index
    %c0_123 = arith.constant 0 : index
    %422 = vector.load %arg11[%421, %c0_123] : memref<64x256xf32, #tpu.memory_space<vmem>>, vector<8x128xf32>
    %423 = vector.extract_strided_slice %420 {offsets = [0, 0], sizes = [8, 128], strides = [1, 1]} : vector<16x256xf32> to vector<8x128xf32>
    %424 = arith.addf %422, %423 : vector<8x128xf32>
    %425 = arith.index_cast %418 : i32 to index
    %c128_124 = arith.constant 128 : index
    %426 = vector.load %arg11[%425, %c128_124] : memref<64x256xf32, #tpu.memory_space<vmem>>, vector<8x128xf32>
    %427 = vector.extract_strided_slice %420 {offsets = [8, 128], sizes = [8, 128], strides = [1, 1]} : vector<16x256xf32> to vector<8x128xf32>
    %428 = arith.addf %426, %427 : vector<8x128xf32>
    %429 = tpu.concatenate %424, %428 in 0 : vector<8x128xf32>, vector<8x128xf32> -> vector<16x128xf32>
    %430 = arith.negf %429 : vector<16x128xf32>
    %431 = math.exp %430 : vector<16x128xf32>
    %cst_125 = arith.constant 1.000000e+00 : f32
    %432 = vector.broadcast %cst_125 : f32 to vector<16x128xf32>
    %433 = arith.addf %432, %431 : vector<16x128xf32>
    %434 = arith.divf %432, %433 : vector<16x128xf32>
    %435 = vector.extract_strided_slice %434 {offsets = [0, 0], sizes = [16, 32], strides = [1, 1]} : vector<16x128xf32> to vector<16x32xf32>
    %436 = vector.extract_strided_slice %434 {offsets = [0, 32], sizes = [16, 32], strides = [1, 1]} : vector<16x128xf32> to vector<16x32xf32>
    %437 = vector.extract_strided_slice %434 {offsets = [0, 96], sizes = [16, 32], strides = [1, 1]} : vector<16x128xf32> to vector<16x32xf32>
    %438 = vector.extract_strided_slice %429 {offsets = [0, 64], sizes = [16, 32], strides = [1, 1]} : vector<16x128xf32> to vector<16x32xf32>
    %439 = math.tanh %438 : vector<16x32xf32>
    %440 = arith.mulf %436, %411 : vector<16x32xf32>
    %441 = arith.mulf %435, %439 : vector<16x32xf32>
    %442 = arith.addf %440, %441 : vector<16x32xf32>
    %443 = math.tanh %442 : vector<16x32xf32>
    %444 = arith.mulf %437, %443 : vector<16x32xf32>
    %c4_i32_126 = arith.constant 4 : i32
    %c8_i32_127 = arith.constant 8 : i32
    %445 = arith.muli %c4_i32_126, %c8_i32_127 : i32
    %446 = tpu.assume_multiple %445, 8 : i32
    %c7_i32_128 = arith.constant 7 : i32
    %447 = arith.subi %c7_i32_128, %c4_i32_126 : i32
    %c8_i32_129 = arith.constant 8 : i32
    %448 = arith.muli %447, %c8_i32_129 : i32
    %449 = tpu.assume_multiple %448, 8 : i32
    %450 = arith.truncf %444 : vector<16x32xf32> to vector<16x32xbf16>
    %cst_130 = arith.constant dense<0.000000e+00> : vector<16x256xf32>
    %451 = tpu.matmul %450, %318, %cst_130 {dimension_numbers = #tpu.dot_dimension_numbers<[1], [0], [0], [1], [0, 0, 1, 1], [], []>} : vector<16x32xbf16>, vector<32x256xbf16>, vector<16x256xf32> -> vector<16x256xf32>
    %452 = arith.index_cast %446 : i32 to index
    %c0_131 = arith.constant 0 : index
    %453 = vector.load %arg11[%452, %c0_131] : memref<64x256xf32, #tpu.memory_space<vmem>>, vector<8x128xf32>
    %454 = vector.extract_strided_slice %451 {offsets = [0, 0], sizes = [8, 128], strides = [1, 1]} : vector<16x256xf32> to vector<8x128xf32>
    %455 = arith.addf %453, %454 : vector<8x128xf32>
    %456 = arith.index_cast %449 : i32 to index
    %c128_132 = arith.constant 128 : index
    %457 = vector.load %arg11[%456, %c128_132] : memref<64x256xf32, #tpu.memory_space<vmem>>, vector<8x128xf32>
    %458 = vector.extract_strided_slice %451 {offsets = [8, 128], sizes = [8, 128], strides = [1, 1]} : vector<16x256xf32> to vector<8x128xf32>
    %459 = arith.addf %457, %458 : vector<8x128xf32>
    %460 = tpu.concatenate %455, %459 in 0 : vector<8x128xf32>, vector<8x128xf32> -> vector<16x128xf32>
    %461 = arith.negf %460 : vector<16x128xf32>
    %462 = math.exp %461 : vector<16x128xf32>
    %cst_133 = arith.constant 1.000000e+00 : f32
    %463 = vector.broadcast %cst_133 : f32 to vector<16x128xf32>
    %464 = arith.addf %463, %462 : vector<16x128xf32>
    %465 = arith.divf %463, %464 : vector<16x128xf32>
    %466 = vector.extract_strided_slice %465 {offsets = [0, 0], sizes = [16, 32], strides = [1, 1]} : vector<16x128xf32> to vector<16x32xf32>
    %467 = vector.extract_strided_slice %465 {offsets = [0, 32], sizes = [16, 32], strides = [1, 1]} : vector<16x128xf32> to vector<16x32xf32>
    %468 = vector.extract_strided_slice %465 {offsets = [0, 96], sizes = [16, 32], strides = [1, 1]} : vector<16x128xf32> to vector<16x32xf32>
    %469 = vector.extract_strided_slice %460 {offsets = [0, 64], sizes = [16, 32], strides = [1, 1]} : vector<16x128xf32> to vector<16x32xf32>
    %470 = math.tanh %469 : vector<16x32xf32>
    %471 = arith.mulf %467, %442 : vector<16x32xf32>
    %472 = arith.mulf %466, %470 : vector<16x32xf32>
    %473 = arith.addf %471, %472 : vector<16x32xf32>
    %474 = math.tanh %473 : vector<16x32xf32>
    %475 = arith.mulf %468, %474 : vector<16x32xf32>
    %c5_i32_134 = arith.constant 5 : i32
    %c8_i32_135 = arith.constant 8 : i32
    %476 = arith.muli %c5_i32_134, %c8_i32_135 : i32
    %477 = tpu.assume_multiple %476, 8 : i32
    %c7_i32_136 = arith.constant 7 : i32
    %478 = arith.subi %c7_i32_136, %c5_i32_134 : i32
    %c8_i32_137 = arith.constant 8 : i32
    %479 = arith.muli %478, %c8_i32_137 : i32
    %480 = tpu.assume_multiple %479, 8 : i32
    %481 = arith.truncf %475 : vector<16x32xf32> to vector<16x32xbf16>
    %cst_138 = arith.constant dense<0.000000e+00> : vector<16x256xf32>
    %482 = tpu.matmul %481, %318, %cst_138 {dimension_numbers = #tpu.dot_dimension_numbers<[1], [0], [0], [1], [0, 0, 1, 1], [], []>} : vector<16x32xbf16>, vector<32x256xbf16>, vector<16x256xf32> -> vector<16x256xf32>
    %483 = arith.index_cast %477 : i32 to index
    %c0_139 = arith.constant 0 : index
    %484 = vector.load %arg11[%483, %c0_139] : memref<64x256xf32, #tpu.memory_space<vmem>>, vector<8x128xf32>
    %485 = vector.extract_strided_slice %482 {offsets = [0, 0], sizes = [8, 128], strides = [1, 1]} : vector<16x256xf32> to vector<8x128xf32>
    %486 = arith.addf %484, %485 : vector<8x128xf32>
    %487 = arith.index_cast %480 : i32 to index
    %c128_140 = arith.constant 128 : index
    %488 = vector.load %arg11[%487, %c128_140] : memref<64x256xf32, #tpu.memory_space<vmem>>, vector<8x128xf32>
    %489 = vector.extract_strided_slice %482 {offsets = [8, 128], sizes = [8, 128], strides = [1, 1]} : vector<16x256xf32> to vector<8x128xf32>
    %490 = arith.addf %488, %489 : vector<8x128xf32>
    %491 = tpu.concatenate %486, %490 in 0 : vector<8x128xf32>, vector<8x128xf32> -> vector<16x128xf32>
    %492 = arith.negf %491 : vector<16x128xf32>
    %493 = math.exp %492 : vector<16x128xf32>
    %cst_141 = arith.constant 1.000000e+00 : f32
    %494 = vector.broadcast %cst_141 : f32 to vector<16x128xf32>
    %495 = arith.addf %494, %493 : vector<16x128xf32>
    %496 = arith.divf %494, %495 : vector<16x128xf32>
    %497 = vector.extract_strided_slice %496 {offsets = [0, 0], sizes = [16, 32], strides = [1, 1]} : vector<16x128xf32> to vector<16x32xf32>
    %498 = vector.extract_strided_slice %496 {offsets = [0, 32], sizes = [16, 32], strides = [1, 1]} : vector<16x128xf32> to vector<16x32xf32>
    %499 = vector.extract_strided_slice %496 {offsets = [0, 96], sizes = [16, 32], strides = [1, 1]} : vector<16x128xf32> to vector<16x32xf32>
    %500 = vector.extract_strided_slice %491 {offsets = [0, 64], sizes = [16, 32], strides = [1, 1]} : vector<16x128xf32> to vector<16x32xf32>
    %501 = math.tanh %500 : vector<16x32xf32>
    %502 = arith.mulf %498, %473 : vector<16x32xf32>
    %503 = arith.mulf %497, %501 : vector<16x32xf32>
    %504 = arith.addf %502, %503 : vector<16x32xf32>
    %505 = math.tanh %504 : vector<16x32xf32>
    %506 = arith.mulf %499, %505 : vector<16x32xf32>
    %c6_i32_142 = arith.constant 6 : i32
    %c8_i32_143 = arith.constant 8 : i32
    %507 = arith.muli %c6_i32_142, %c8_i32_143 : i32
    %508 = tpu.assume_multiple %507, 8 : i32
    %c7_i32_144 = arith.constant 7 : i32
    %509 = arith.subi %c7_i32_144, %c6_i32_142 : i32
    %c8_i32_145 = arith.constant 8 : i32
    %510 = arith.muli %509, %c8_i32_145 : i32
    %511 = tpu.assume_multiple %510, 8 : i32
    %512 = arith.truncf %506 : vector<16x32xf32> to vector<16x32xbf16>
    %cst_146 = arith.constant dense<0.000000e+00> : vector<16x256xf32>
    %513 = tpu.matmul %512, %318, %cst_146 {dimension_numbers = #tpu.dot_dimension_numbers<[1], [0], [0], [1], [0, 0, 1, 1], [], []>} : vector<16x32xbf16>, vector<32x256xbf16>, vector<16x256xf32> -> vector<16x256xf32>
    %514 = arith.index_cast %508 : i32 to index
    %c0_147 = arith.constant 0 : index
    %515 = vector.load %arg11[%514, %c0_147] : memref<64x256xf32, #tpu.memory_space<vmem>>, vector<8x128xf32>
    %516 = vector.extract_strided_slice %513 {offsets = [0, 0], sizes = [8, 128], strides = [1, 1]} : vector<16x256xf32> to vector<8x128xf32>
    %517 = arith.addf %515, %516 : vector<8x128xf32>
    %518 = arith.index_cast %511 : i32 to index
    %c128_148 = arith.constant 128 : index
    %519 = vector.load %arg11[%518, %c128_148] : memref<64x256xf32, #tpu.memory_space<vmem>>, vector<8x128xf32>
    %520 = vector.extract_strided_slice %513 {offsets = [8, 128], sizes = [8, 128], strides = [1, 1]} : vector<16x256xf32> to vector<8x128xf32>
    %521 = arith.addf %519, %520 : vector<8x128xf32>
    %522 = tpu.concatenate %517, %521 in 0 : vector<8x128xf32>, vector<8x128xf32> -> vector<16x128xf32>
    %523 = arith.negf %522 : vector<16x128xf32>
    %524 = math.exp %523 : vector<16x128xf32>
    %cst_149 = arith.constant 1.000000e+00 : f32
    %525 = vector.broadcast %cst_149 : f32 to vector<16x128xf32>
    %526 = arith.addf %525, %524 : vector<16x128xf32>
    %527 = arith.divf %525, %526 : vector<16x128xf32>
    %528 = vector.extract_strided_slice %527 {offsets = [0, 0], sizes = [16, 32], strides = [1, 1]} : vector<16x128xf32> to vector<16x32xf32>
    %529 = vector.extract_strided_slice %527 {offsets = [0, 32], sizes = [16, 32], strides = [1, 1]} : vector<16x128xf32> to vector<16x32xf32>
    %530 = vector.extract_strided_slice %527 {offsets = [0, 96], sizes = [16, 32], strides = [1, 1]} : vector<16x128xf32> to vector<16x32xf32>
    %531 = vector.extract_strided_slice %522 {offsets = [0, 64], sizes = [16, 32], strides = [1, 1]} : vector<16x128xf32> to vector<16x32xf32>
    %532 = math.tanh %531 : vector<16x32xf32>
    %533 = arith.mulf %529, %504 : vector<16x32xf32>
    %534 = arith.mulf %528, %532 : vector<16x32xf32>
    %535 = arith.addf %533, %534 : vector<16x32xf32>
    %536 = math.tanh %535 : vector<16x32xf32>
    %537 = arith.mulf %530, %536 : vector<16x32xf32>
    %c7_i32_150 = arith.constant 7 : i32
    %c8_i32_151 = arith.constant 8 : i32
    %538 = arith.muli %c7_i32_150, %c8_i32_151 : i32
    %539 = tpu.assume_multiple %538, 8 : i32
    %c7_i32_152 = arith.constant 7 : i32
    %540 = arith.subi %c7_i32_152, %c7_i32_150 : i32
    %c8_i32_153 = arith.constant 8 : i32
    %541 = arith.muli %540, %c8_i32_153 : i32
    %542 = tpu.assume_multiple %541, 8 : i32
    %543 = arith.truncf %537 : vector<16x32xf32> to vector<16x32xbf16>
    %cst_154 = arith.constant dense<0.000000e+00> : vector<16x256xf32>
    %544 = tpu.matmul %543, %318, %cst_154 {dimension_numbers = #tpu.dot_dimension_numbers<[1], [0], [0], [1], [0, 0, 1, 1], [], []>} : vector<16x32xbf16>, vector<32x256xbf16>, vector<16x256xf32> -> vector<16x256xf32>
    %545 = arith.index_cast %539 : i32 to index
    %c0_155 = arith.constant 0 : index
    %546 = vector.load %arg11[%545, %c0_155] : memref<64x256xf32, #tpu.memory_space<vmem>>, vector<8x128xf32>
    %547 = vector.extract_strided_slice %544 {offsets = [0, 0], sizes = [8, 128], strides = [1, 1]} : vector<16x256xf32> to vector<8x128xf32>
    %548 = arith.addf %546, %547 : vector<8x128xf32>
    %549 = arith.index_cast %542 : i32 to index
    %c128_156 = arith.constant 128 : index
    %550 = vector.load %arg11[%549, %c128_156] : memref<64x256xf32, #tpu.memory_space<vmem>>, vector<8x128xf32>
    %551 = vector.extract_strided_slice %544 {offsets = [8, 128], sizes = [8, 128], strides = [1, 1]} : vector<16x256xf32> to vector<8x128xf32>
    %552 = arith.addf %550, %551 : vector<8x128xf32>
    %553 = tpu.concatenate %548, %552 in 0 : vector<8x128xf32>, vector<8x128xf32> -> vector<16x128xf32>
    %554 = arith.negf %553 : vector<16x128xf32>
    %555 = math.exp %554 : vector<16x128xf32>
    %cst_157 = arith.constant 1.000000e+00 : f32
    %556 = vector.broadcast %cst_157 : f32 to vector<16x128xf32>
    %557 = arith.addf %556, %555 : vector<16x128xf32>
    %558 = arith.divf %556, %557 : vector<16x128xf32>
    %559 = vector.extract_strided_slice %558 {offsets = [0, 0], sizes = [16, 32], strides = [1, 1]} : vector<16x128xf32> to vector<16x32xf32>
    %560 = vector.extract_strided_slice %558 {offsets = [0, 32], sizes = [16, 32], strides = [1, 1]} : vector<16x128xf32> to vector<16x32xf32>
    %561 = vector.extract_strided_slice %558 {offsets = [0, 96], sizes = [16, 32], strides = [1, 1]} : vector<16x128xf32> to vector<16x32xf32>
    %562 = vector.extract_strided_slice %553 {offsets = [0, 64], sizes = [16, 32], strides = [1, 1]} : vector<16x128xf32> to vector<16x32xf32>
    %563 = math.tanh %562 : vector<16x32xf32>
    %564 = arith.mulf %560, %535 : vector<16x32xf32>
    %565 = arith.mulf %559, %563 : vector<16x32xf32>
    %566 = arith.addf %564, %565 : vector<16x32xf32>
    %567 = math.tanh %566 : vector<16x32xf32>
    %568 = arith.mulf %561, %567 : vector<16x32xf32>
    %c8_i32_158 = arith.constant 8 : i32
    %569 = vector.extract_strided_slice %568 {offsets = [0, 0], sizes = [8, 32], strides = [1, 1]} : vector<16x32xf32> to vector<8x32xf32>
    %570 = vector.extract_strided_slice %568 {offsets = [8, 0], sizes = [8, 32], strides = [1, 1]} : vector<16x32xf32> to vector<8x32xf32>
    %c0_159 = arith.constant 0 : index
    %c0_160 = arith.constant 0 : index
    %571 = vector.load %arg9[%c0_159, %c0_160] : memref<1x4xf32, #tpu.memory_space<vmem>>, vector<1x4xf32>
    %572 = vector.shape_cast %571 : vector<1x4xf32> to vector<1x4xf32>
    %573 = vector.broadcast %572 : vector<1x4xf32> to vector<8x4xf32>
    %c0_161 = arith.constant 0 : index
    %c0_162 = arith.constant 0 : index
    %574 = vector.load %arg8[%c0_161, %c0_162] : memref<128x4xbf16, #tpu.memory_space<vmem>>, vector<32x4xbf16>
    %cst_163 = arith.constant 0.000000e+00 : f32
    %575 = vector.broadcast %cst_163 : f32 to vector<8x32xf32>
    %576 = arith.maximumf %307, %575 : vector<8x32xf32>
    %577 = arith.truncf %576 : vector<8x32xf32> to vector<8x32xbf16>
    %cst_164 = arith.constant dense<0.000000e+00> : vector<8x4xf32>
    %578 = tpu.matmul %577, %574, %cst_164 {dimension_numbers = #tpu.dot_dimension_numbers<[1], [0], [0], [1], [0, 0, 1, 1], [], []>} : vector<8x32xbf16>, vector<32x4xbf16>, vector<8x4xf32> -> vector<8x4xf32>
    %579 = arith.addf %573, %578 : vector<8x4xf32>
    %c32_165 = arith.constant 32 : index
    %c0_166 = arith.constant 0 : index
    %580 = vector.load %arg8[%c32_165, %c0_166] : memref<128x4xbf16, #tpu.memory_space<vmem>>, vector<32x4xbf16>
    %cst_167 = arith.constant 0.000000e+00 : f32
    %581 = vector.broadcast %cst_167 : f32 to vector<8x32xf32>
    %582 = arith.maximumf %308, %581 : vector<8x32xf32>
    %583 = arith.truncf %582 : vector<8x32xf32> to vector<8x32xbf16>
    %cst_168 = arith.constant dense<0.000000e+00> : vector<8x4xf32>
    %584 = tpu.matmul %583, %580, %cst_168 {dimension_numbers = #tpu.dot_dimension_numbers<[1], [0], [0], [1], [0, 0, 1, 1], [], []>} : vector<8x32xbf16>, vector<32x4xbf16>, vector<8x4xf32> -> vector<8x4xf32>
    %585 = arith.addf %579, %584 : vector<8x4xf32>
    %c64 = arith.constant 64 : index
    %c0_169 = arith.constant 0 : index
    %586 = vector.load %arg8[%c64, %c0_169] : memref<128x4xbf16, #tpu.memory_space<vmem>>, vector<32x4xbf16>
    %cst_170 = arith.constant 0.000000e+00 : f32
    %587 = vector.broadcast %cst_170 : f32 to vector<8x32xf32>
    %588 = arith.maximumf %569, %587 : vector<8x32xf32>
    %589 = arith.truncf %588 : vector<8x32xf32> to vector<8x32xbf16>
    %cst_171 = arith.constant dense<0.000000e+00> : vector<8x4xf32>
    %590 = tpu.matmul %589, %586, %cst_171 {dimension_numbers = #tpu.dot_dimension_numbers<[1], [0], [0], [1], [0, 0, 1, 1], [], []>} : vector<8x32xbf16>, vector<32x4xbf16>, vector<8x4xf32> -> vector<8x4xf32>
    %591 = arith.addf %585, %590 : vector<8x4xf32>
    %c96 = arith.constant 96 : index
    %c0_172 = arith.constant 0 : index
    %592 = vector.load %arg8[%c96, %c0_172] : memref<128x4xbf16, #tpu.memory_space<vmem>>, vector<32x4xbf16>
    %cst_173 = arith.constant 0.000000e+00 : f32
    %593 = vector.broadcast %cst_173 : f32 to vector<8x32xf32>
    %594 = arith.maximumf %570, %593 : vector<8x32xf32>
    %595 = arith.truncf %594 : vector<8x32xf32> to vector<8x32xbf16>
    %cst_174 = arith.constant dense<0.000000e+00> : vector<8x4xf32>
    %596 = tpu.matmul %595, %592, %cst_174 {dimension_numbers = #tpu.dot_dimension_numbers<[1], [0], [0], [1], [0, 0, 1, 1], [], []>} : vector<8x32xbf16>, vector<32x4xbf16>, vector<8x4xf32> -> vector<8x4xf32>
    %597 = arith.addf %591, %596 : vector<8x4xf32>
    %598 = arith.negf %597 : vector<8x4xf32>
    %599 = math.exp %598 : vector<8x4xf32>
    %cst_175 = arith.constant 1.000000e+00 : f32
    %600 = vector.broadcast %cst_175 : f32 to vector<8x4xf32>
    %601 = arith.addf %600, %599 : vector<8x4xf32>
    %602 = arith.divf %600, %601 : vector<8x4xf32>
    %c0_176 = arith.constant 0 : index
    %c0_177 = arith.constant 0 : index
    %603 = vector.load %arg10[%c0_176, %c0_177] : memref<8x4xf32, #tpu.memory_space<vmem>>, vector<8x4xf32>
    tpu.vector_store %arg10[%c0_176, %c0_177], %602 {strides = array<i32>} : memref<8x4xf32, #tpu.memory_space<vmem>>, vector<8x4xf32>,
    return
  }
  func.func @transform_0(%arg0: i32) -> (i32, i32) {
    %c0_i32 = arith.constant 0 : i32
    %c0_i32_0 = arith.constant 0 : i32
    %c0_i32_1 = arith.constant 0 : i32
    return %c0_i32, %c0_i32_0 : i32, i32
  }
  func.func @transform_1(%arg0: i32) -> (i32, i32) {
    %c0_i32 = arith.constant 0 : i32
    %c0_i32_0 = arith.constant 0 : i32
    %c0_i32_1 = arith.constant 0 : i32
    return %c0_i32, %c0_i32_0 : i32, i32
  }
  func.func @transform_2(%arg0: i32) -> (i32, i32) {
    %c0_i32 = arith.constant 0 : i32
    %c0_i32_0 = arith.constant 0 : i32
    %c0_i32_1 = arith.constant 0 : i32
    return %c0_i32, %c0_i32_0 : i32, i32
  }
  func.func @transform_3(%arg0: i32) -> (i32, i32) {
    %c0_i32 = arith.constant 0 : i32
    %c0_i32_0 = arith.constant 0 : i32
    %c0_i32_1 = arith.constant 0 : i32
    return %c0_i32, %c0_i32_0 : i32, i32
  }
  func.func @transform_4(%arg0: i32) -> (i32, i32) {
    %c0_i32 = arith.constant 0 : i32
    %c0_i32_0 = arith.constant 0 : i32
    %c0_i32_1 = arith.constant 0 : i32
    return %c0_i32, %c0_i32_0 : i32, i32
  }
  func.func @transform_5(%arg0: i32) -> (i32, i32) {
    %c0_i32 = arith.constant 0 : i32
    %c0_i32_0 = arith.constant 0 : i32
    %c0_i32_1 = arith.constant 0 : i32
    return %c0_i32, %c0_i32_0 : i32, i32
  }
  func.func @transform_6(%arg0: i32) -> (i32, i32) {
    %c0_i32 = arith.constant 0 : i32
    %c0_i32_0 = arith.constant 0 : i32
    %c0_i32_1 = arith.constant 0 : i32
    return %c0_i32, %c0_i32_0 : i32, i32
  }
  func.func @transform_7(%arg0: i32) -> (i32, i32) {
    %c0_i32 = arith.constant 0 : i32
    %c0_i32_0 = arith.constant 0 : i32
    %c0_i32_1 = arith.constant 0 : i32
    return %c0_i32, %c0_i32_0 : i32, i32
  }
  func.func @transform_8(%arg0: i32) -> (i32, i32) {
    %c0_i32 = arith.constant 0 : i32
    %c0_i32_0 = arith.constant 0 : i32
    %c0_i32_1 = arith.constant 0 : i32
    return %c0_i32, %c0_i32_0 : i32, i32
  }
  func.func @transform_9(%arg0: i32) -> (i32, i32) {
    %c0_i32 = arith.constant 0 : i32
    %c0_i32_0 = arith.constant 0 : i32
    %c0_i32_1 = arith.constant 0 : i32
    return %c0_i32, %c0_i32_0 : i32, i32
  }
}

</mosaic_0001>

<llo_original>
// kernel: my_lstm_forward.1
$region0: #{my_lstm_forward.1}
  #allocation0 [shape = 'u32[]', space=smem, size = 0x4, offset = 0x4, fixed_abs, tag = 'smem constant byte address 0x4 - core index']
  #allocation1 [shape = 'u32[144,128]{1,0:T(1,128)}', space=vmem, size = 0x12000, scoped, tag = 'internal scratch']
  #allocation2 [shape = 'f32[64,256]{1,0:T(8,128)}', space=vmem, size = 0x10000, scoped, tag = 'scratch operand']
  #allocation3 [shape = 'f32[64,64]{1,0:T(8,128)}', space=vmem, size = 0x8000, scoped, tag = 'scratch operand']
  %s0 = inlined_call_operand.hbm [shape: bf16[64,32], index: 0, kind: input, shape index: {}]
  %s1 = inlined_call_operand.hbm [shape: bf16[32,256], index: 1, kind: input, shape index: {}]
  %s2 = inlined_call_operand.hbm [shape: bf16[32,256], index: 2, kind: input, shape index: {}]
  %s3 = inlined_call_operand.hbm [shape: f32[1,256], index: 3, kind: input, shape index: {}]
  %s4 = inlined_call_operand.hbm [shape: bf16[64,256], index: 4, kind: input, shape index: {}]
  %s5 = inlined_call_operand.hbm [shape: bf16[32,256], index: 5, kind: input, shape index: {}]
  %s6 = inlined_call_operand.hbm [shape: f32[1,256], index: 6, kind: input, shape index: {}]
  %s7 = inlined_call_operand.hbm [shape: bf16[128,4], index: 7, kind: input, shape index: {}]
  %s8 = inlined_call_operand.hbm [shape: f32[1,4], index: 8, kind: input, shape index: {}]
  %s9 = inlined_call_operand.hbm [shape: f32[8,4], index: 9, kind: output, shape index: {}]
  %s10 = sld [smem:[#allocation0]]
  $region82: #{my_lstm_forward.1} parent=0
    _
  %s12 = ssub.s32 1, %s10
  %s13 = scalar_select 0, %s12, %s10
  $region1: #{my_lstm_forward.1} parent=0
    #allocation4 [shape = 'u8[16384]{0}', space=vmem, size = 0x4000, scoped, tag = 'input window, operand 0, single buffered']
    #allocation5 [shape = 's32[1]{0}', space=sflag, size = 0x4, scoped, tag = 'scoped memory for my_lstm_forward.1']
    #allocation6 [shape = 's32[1]{0}', space=sflag, size = 0x4, scoped, tag = 'scoped memory for my_lstm_forward.1']
    #allocation7 [shape = 'u8[16384]{0}', space=vmem, size = 0x4000, scoped, tag = 'input window, operand 1, single buffered']
    #allocation8 [shape = 's32[1]{0}', space=sflag, size = 0x4, scoped, tag = 'scoped memory for my_lstm_forward.1']
    #allocation9 [shape = 'u8[16384]{0}', space=vmem, size = 0x4000, scoped, tag = 'input window, operand 2, single buffered']
    #allocation10 [shape = 'u8[1024]{0}', space=vmem, size = 0x400, scoped, tag = 'input window, operand 3, single buffered']
    #allocation11 [shape = 's32[1]{0}', space=sflag, size = 0x4, scoped, tag = 'scoped memory for my_lstm_forward.1']
    #allocation12 [shape = 'u8[32768]{0}', space=vmem, size = 0x8000, scoped, tag = 'input window, operand 4, single buffered']
    #allocation13 [shape = 'u8[16384]{0}', space=vmem, size = 0x4000, scoped, tag = 'input window, operand 5, single buffered']
    #allocation14 [shape = 's32[1]{0}', space=sflag, size = 0x4, scoped, tag = 'scoped memory for my_lstm_forward.1']
    #allocation15 [shape = 'u8[1024]{0}', space=vmem, size = 0x400, scoped, tag = 'input window, operand 6, single buffered']
    #allocation16 [shape = 'u8[32768]{0}', space=vmem, size = 0x8000, scoped, tag = 'input window, operand 7, single buffered']
    #allocation17 [shape = 's32[1]{0}', space=sflag, size = 0x4, scoped, tag = 'scoped memory for my_lstm_forward.1']
    #allocation18 [shape = 'u8[512]{0}', space=vmem, size = 0x400, scoped, tag = 'input window, operand 8, single buffered']
    #allocation19 [shape = 'u8[4096]{0}', space=vmem, size = 0x1000, scoped, tag = 'output window, operand 0, single buffered']
    %14 = vsyncpa [#allocation5], 0
    %15 = vsyncpa [#allocation8], 0
    %16 = vsyncpa [#allocation11], 0
    %17 = vsyncpa [#allocation14], 0
    %18 = vsyncpa [#allocation17], 0
    %19 = vsyncpa [#allocation6], 0
    // Predicated region
    $region2: #{my_lstm_forward.1} parent=1 // pred_check
      _
    $region3: #{my_lstm_forward.1} parent=1 // pred_check_branch
      %21 = sbr.rel (0) target = $region5
    $region4: #{my_lstm_forward.1} parent=1 // pred_region
      %s23 = ssub.s32 512, 512
      %24 = vsyncadd [#allocation5], %s23
      %s25 = sshll.u32 [#allocation4], 4
      %s26 = int_to_ptr.vmem [resolvable:$true] %s25
      %31 = dma.hbm_to_vmem [thread:$0]  %s0, 512, %s26, [#allocation5], 64, 64, 4
    $region5: #{my_lstm_forward.1} parent=1 // pred_fallthru
      _
    // Predicated region
    $region6: #{my_lstm_forward.1} parent=1 // pred_check
      _
    $region7: #{my_lstm_forward.1} parent=1 // pred_check_branch
      %33 = sbr.rel (0) target = $region9
    $region8: #{my_lstm_forward.1} parent=1 // pred_region
      %s35 = ssub.s32 512, 512
      %36 = vsyncadd [#allocation8], %s35
      %s37 = sshll.u32 [#allocation7], 4
      %s38 = int_to_ptr.vmem [resolvable:$true] %s37
      %43 = dma.hbm_to_vmem [thread:$0]  %s1, 512, %s38, [#allocation8], 128, 128, 8
    $region9: #{my_lstm_forward.1} parent=1 // pred_fallthru
      _
    // Predicated region
    $region10: #{my_lstm_forward.1} parent=1 // pred_check
      _
    $region11: #{my_lstm_forward.1} parent=1 // pred_check_branch
      %45 = sbr.rel (0) target = $region13
    $region12: #{my_lstm_forward.1} parent=1 // pred_region
      %s47 = ssub.s32 512, 512
      %48 = vsyncadd [#allocation8], %s47
      %s49 = sshll.u32 [#allocation9], 4
      %s50 = int_to_ptr.vmem [resolvable:$true] %s49
      %55 = dma.hbm_to_vmem [thread:$0]  %s2, 512, %s50, [#allocation8], 128, 128, 8
    $region13: #{my_lstm_forward.1} parent=1 // pred_fallthru
      _
    // Predicated region
    $region14: #{my_lstm_forward.1} parent=1 // pred_check
      _
    $region15: #{my_lstm_forward.1} parent=1 // pred_check_branch
      %57 = sbr.rel (0) target = $region17
    $region16: #{my_lstm_forward.1} parent=1 // pred_region
      %s59 = ssub.s32 32, 32
      %60 = vsyncadd [#allocation11], %s59
      %s62 = sshll.u32 [#allocation10], 4
      %s63 = int_to_ptr.vmem [resolvable:$true] %s62
      %65 = dma.hbm_to_vmem [thread:$0]  %s3, 32, %s63, [#allocation11]
    $region17: #{my_lstm_forward.1} parent=1 // pred_fallthru
      _
    // Predicated region
    $region18: #{my_lstm_forward.1} parent=1 // pred_check
      _
    $region19: #{my_lstm_forward.1} parent=1 // pred_check_branch
      %67 = sbr.rel (0) target = $region21
    $region20: #{my_lstm_forward.1} parent=1 // pred_region
      %s69 = ssub.s32 1024, 1024
      %70 = vsyncadd [#allocation11], %s69
      %s71 = sshll.u32 [#allocation12], 4
      %s72 = int_to_ptr.vmem [resolvable:$true] %s71
      %77 = dma.hbm_to_vmem [thread:$0]  %s4, 1024, %s72, [#allocation11], 128, 128, 8
    $region21: #{my_lstm_forward.1} parent=1 // pred_fallthru
      _
    // Predicated region
    $region22: #{my_lstm_forward.1} parent=1 // pred_check
      _
    $region23: #{my_lstm_forward.1} parent=1 // pred_check_branch
      %79 = sbr.rel (0) target = $region25
    $region24: #{my_lstm_forward.1} parent=1 // pred_region
      %s81 = ssub.s32 512, 512
      %82 = vsyncadd [#allocation14], %s81
      %s83 = sshll.u32 [#allocation13], 4
      %s84 = int_to_ptr.vmem [resolvable:$true] %s83
      %89 = dma.hbm_to_vmem [thread:$0]  %s5, 512, %s84, [#allocation14], 128, 128, 8
    $region25: #{my_lstm_forward.1} parent=1 // pred_fallthru
      _
    // Predicated region
    $region26: #{my_lstm_forward.1} parent=1 // pred_check
      _
    $region27: #{my_lstm_forward.1} parent=1 // pred_check_branch
      %91 = sbr.rel (0) target = $region29
    $region28: #{my_lstm_forward.1} parent=1 // pred_region
      %s93 = ssub.s32 32, 32
      %94 = vsyncadd [#allocation14], %s93
      %s96 = sshll.u32 [#allocation15], 4
      %s97 = int_to_ptr.vmem [resolvable:$true] %s96
      %99 = dma.hbm_to_vmem [thread:$0]  %s6, 32, %s97, [#allocation14]
    $region29: #{my_lstm_forward.1} parent=1 // pred_fallthru
      _
    // Predicated region
    $region30: #{my_lstm_forward.1} parent=1 // pred_check
      _
    $region31: #{my_lstm_forward.1} parent=1 // pred_check_branch
      %101 = sbr.rel (0) target = $region33
    $region32: #{my_lstm_forward.1} parent=1 // pred_region
      %s103 = ssub.s32 1024, 1024
      %104 = vsyncadd [#allocation17], %s103
      %s105 = sshll.u32 [#allocation16], 4
      %s106 = int_to_ptr.vmem [resolvable:$true] %s105
      %111 = dma.hbm_to_vmem [thread:$0]  %s7, 1024, %s106, [#allocation17], 64, 64, 4
    $region33: #{my_lstm_forward.1} parent=1 // pred_fallthru
      _
    // Predicated region
    $region34: #{my_lstm_forward.1} parent=1 // pred_check
      _
    $region35: #{my_lstm_forward.1} parent=1 // pred_check_branch
      %113 = sbr.rel (0) target = $region37
    $region36: #{my_lstm_forward.1} parent=1 // pred_region
      %s115 = ssub.s32 16, 16
      %116 = vsyncadd [#allocation17], %s115
      %s118 = sshll.u32 [#allocation18], 4
      %s119 = int_to_ptr.vmem [resolvable:$true] %s118
      %121 = dma.hbm_to_vmem [thread:$0]  %s8, 16, %s119, [#allocation17]
    $region37: #{my_lstm_forward.1} parent=1 // pred_fallthru
      _
    // Predicated region
    $region38: #{my_lstm_forward.1} parent=1 // pred_check
      _
    $region39: #{my_lstm_forward.1} parent=1 // pred_check_branch
      %123 = sbr.rel (0) target = $region41
    $region40: #{my_lstm_forward.1} parent=1 // pred_region
      %124 = dma.done [#allocation5], 512
    $region41: #{my_lstm_forward.1} parent=1 // pred_fallthru
      _
    // Predicated region
    $region42: #{my_lstm_forward.1} parent=1 // pred_check
      _
    $region43: #{my_lstm_forward.1} parent=1 // pred_check_branch
      %126 = sbr.rel (0) target = $region45
    $region44: #{my_lstm_forward.1} parent=1 // pred_region
      %127 = dma.done [#allocation8], 512
    $region45: #{my_lstm_forward.1} parent=1 // pred_fallthru
      _
    // Predicated region
    $region46: #{my_lstm_forward.1} parent=1 // pred_check
      _
    $region47: #{my_lstm_forward.1} parent=1 // pred_check_branch
      %129 = sbr.rel (0) target = $region49
    $region48: #{my_lstm_forward.1} parent=1 // pred_region
      %130 = dma.done [#allocation8], 512
    $region49: #{my_lstm_forward.1} parent=1 // pred_fallthru
      _
    // Predicated region
    $region50: #{my_lstm_forward.1} parent=1 // pred_check
      _
    $region51: #{my_lstm_forward.1} parent=1 // pred_check_branch
      %132 = sbr.rel (0) target = $region53
    $region52: #{my_lstm_forward.1} parent=1 // pred_region
      %133 = dma.done [#allocation11], 32
    $region53: #{my_lstm_forward.1} parent=1 // pred_fallthru
      _
    // Predicated region
    $region54: #{my_lstm_forward.1} parent=1 // pred_check
      _
    $region55: #{my_lstm_forward.1} parent=1 // pred_check_branch
      %135 = sbr.rel (0) target = $region57
    $region56: #{my_lstm_forward.1} parent=1 // pred_region
      %136 = dma.done [#allocation11], 1024
    $region57: #{my_lstm_forward.1} parent=1 // pred_fallthru
      _
    // Predicated region
    $region58: #{my_lstm_forward.1} parent=1 // pred_check
      _
    $region59: #{my_lstm_forward.1} parent=1 // pred_check_branch
      %138 = sbr.rel (0) target = $region61
    $region60: #{my_lstm_forward.1} parent=1 // pred_region
      %139 = dma.done [#allocation14], 512
    $region61: #{my_lstm_forward.1} parent=1 // pred_fallthru
      _
    // Predicated region
    $region62: #{my_lstm_forward.1} parent=1 // pred_check
      _
    $region63: #{my_lstm_forward.1} parent=1 // pred_check_branch
      %141 = sbr.rel (0) target = $region65
    $region64: #{my_lstm_forward.1} parent=1 // pred_region
      %142 = dma.done [#allocation14], 32
    $region65: #{my_lstm_forward.1} parent=1 // pred_fallthru
      _
    // Predicated region
    $region66: #{my_lstm_forward.1} parent=1 // pred_check
      _
    $region67: #{my_lstm_forward.1} parent=1 // pred_check_branch
      %144 = sbr.rel (0) target = $region69
    $region68: #{my_lstm_forward.1} parent=1 // pred_region
      %145 = dma.done [#allocation17], 1024
    $region69: #{my_lstm_forward.1} parent=1 // pred_fallthru
      _
    // Predicated region
    $region70: #{my_lstm_forward.1} parent=1 // pred_check
      _
    $region71: #{my_lstm_forward.1} parent=1 // pred_check_branch
      %147 = sbr.rel (0) target = $region73
    $region72: #{my_lstm_forward.1} parent=1 // pred_region
      %148 = dma.done [#allocation17], 16
    $region73: #{my_lstm_forward.1} parent=1 // pred_fallthru
      _
    %v150 = vld [vmem:[#allocation4] sm:$0xf]
    %v151 = vld [vmem:[#allocation4 + $0x4] sm:$0xf]
    %v152 = vld [vmem:[#allocation4 + $0x8] sm:$0xf]
    %v153 = vld [vmem:[#allocation4 + $0xc] sm:$0xf]
    %v154 = vld [vmem:[#allocation4 + $0x10] sm:$0xf]
    %v155 = vld [vmem:[#allocation4 + $0x14] sm:$0xf]
    %v156 = vld [vmem:[#allocation4 + $0x18] sm:$0xf]
    %v157 = vld [vmem:[#allocation4 + $0x1c] sm:$0xf]
    %v158 = vld [vmem:[#allocation10] sm:$0x3]
    %v160 = vlaneseq
    %v161 = vshrl.u32 %v160, 7
    %v162 = vsub.s32 0, %v161
    %v163 = vrot.slane %v158, %v162
    %v164 = vlaneseq
    %v165 = vshrl.u32 %v164, 7
    %v166 = vsub.s32 1, %v165
    %v167 = vrot.slane %v158, %v166
    %v170 = vld [vmem:[#allocation7] sm:$0xff]
    %v171 = vld [vmem:[#allocation7 + $0x8] sm:$0xff]
    %v172 = vld [vmem:[#allocation7 + $0x10] sm:$0xff]
    %v173 = vld [vmem:[#allocation7 + $0x18] sm:$0xff]
    %v182 = vunpack.c.l.b16 %v150
    %v183 = vunpack.c.l.b16 %v151
    %v184 = vunpack.c.l.b16 %v152
    %v185 = vunpack.c.l.b16 %v153
    %v186 = vunpack.c.l.b16 %v154
    %v187 = vunpack.c.l.b16 %v155
    %v188 = vunpack.c.l.b16 %v156
    %v189 = vunpack.c.l.b16 %v157
    %v190 = vpack.c.b16 %v183, %v182
    %v191 = vpack.c.b16 %v185, %v184
    %v192 = vpack.c.b16 %v187, %v186
    %v193 = vpack.c.b16 %v189, %v188
    %v198 = vunpack.c.l.b16 %v170
    %v199 = vunpack.c.h.b16 %v170
    %v200 = vunpack.c.l.b16 %v171
    %v201 = vunpack.c.h.b16 %v171
    %v202 = vunpack.c.l.b16 %v172
    %v203 = vunpack.c.h.b16 %v172
    %v204 = vunpack.c.l.b16 %v173
    %v205 = vunpack.c.h.b16 %v173
    %v206 = vpack.c.b16 %v200, %v198
    %v207 = vpack.c.b16 %v201, %v199
    %v208 = vpack.c.b16 %v204, %v202
    %v209 = vpack.c.b16 %v205, %v203
    %vm214 = vcmask 261120
    %v216 = vsel %vm214, %v190, 0
    %v219 = vsel %vm214, %v191, 0
    %v222 = vsel %vm214, %v192, 0
    %v225 = vsel %vm214, %v193, 0
    %227 = vmatprep.subr.bf16.mxu0 %v207
    %228 = vmatpush1.bf16.msra.mxu0 %v206
    %229 = vmatprep.subr.bf16.mxu0 %v209
    %230 = vmatpush1.bf16.msra.mxu0 %v208
    %231 = vmatprep.subr.bf16.mxu0 0
    %232 = vmatpush1.bf16.msra.mxu0 0
    %233 = vmatprep.subr.bf16.mxu0 0
    %234 = vmatpush1.bf16.msra.mxu0 0
    %235 = vmatprep.subr.bf16.mxu0 0
    %236 = vmatpush1.bf16.msra.mxu0 0
    %237 = vmatprep.subr.bf16.mxu0 0
    %238 = vmatpush1.bf16.msra.mxu0 0
    %239 = vmatprep.subr.bf16.mxu0 0
    %240 = vmatpush1.bf16.msra.mxu0 0
    %241 = vmatprep.subr.bf16.mxu0 0
    %242 = vmatpush1.bf16.msra.mxu0 0
    %243 = vmatprep.subr.bf16.mxu0 0
    %244 = vmatpush1.bf16.msra.mxu0 0
    %245 = vmatprep.subr.bf16.mxu0 0
    %246 = vmatpush1.bf16.msra.mxu0 0
    %247 = vmatprep.subr.bf16.mxu0 0
    %248 = vmatpush1.bf16.msra.mxu0 0
    %249 = vmatprep.subr.bf16.mxu0 0
    %250 = vmatpush1.bf16.msra.mxu0 0
    %251 = vmatprep.subr.bf16.mxu0 0
    %252 = vmatpush1.bf16.msra.mxu0 0
    %253 = vmatprep.subr.bf16.mxu0 0
    %254 = vmatpush1.bf16.msra.mxu0 0
    %255 = vmatprep.subr.bf16.mxu0 0
    %256 = vmatpush1.bf16.msra.mxu0 0
    %257 = vmatprep.subr.bf16.mxu0 0
    %258 = vmatpush1.bf16.msra.mxu0 0
    %259 = vmatprep.mubr.bf16.mxu0 0
    %260 = vmatmul.mubr.bf16.gmra.mrb[0].mxu0 %v216
    %v261 = vpop.f32.mrb[0].mxu0
    %v262 = vadd.f32 0.0, %v261
    %v263 = vpop.f32.mrb[0].mxu0
    %v264 = vadd.f32 0.0, %v263
    %v265 = vpop.f32.mrb[0].mxu0
    %v266 = vadd.f32 0.0, %v265
    %v267 = vpop.f32.mrb[0].mxu0
    %v268 = vadd.f32 0.0, %v267
    %269 = vmatprep.mubr.bf16.mxu0 0
    %270 = vmatmul.mubr.bf16.gmra.mrb[0].mxu0 %v219
    %v271 = vpop.f32.mrb[0].mxu0
    %v272 = vadd.f32 0.0, %v271
    %v273 = vpop.f32.mrb[0].mxu0
    %v274 = vadd.f32 0.0, %v273
    %v275 = vpop.f32.mrb[0].mxu0
    %v276 = vadd.f32 0.0, %v275
    %v277 = vpop.f32.mrb[0].mxu0
    %v278 = vadd.f32 0.0, %v277
    %279 = vmatprep.mubr.bf16.mxu0 0
    %280 = vmatmul.mubr.bf16.gmra.mrb[0].mxu0 %v222
    %v281 = vpop.f32.mrb[0].mxu0
    %v282 = vadd.f32 0.0, %v281
    %v283 = vpop.f32.mrb[0].mxu0
    %v284 = vadd.f32 0.0, %v283
    %v285 = vpop.f32.mrb[0].mxu0
    %v286 = vadd.f32 0.0, %v285
    %v287 = vpop.f32.mrb[0].mxu0
    %v288 = vadd.f32 0.0, %v287
    %289 = vmatprep.mubr.bf16.mxu0 0
    %290 = vmatmul.mubr.bf16.gmra.mrb[0].mxu0 %v225
    %v291 = vpop.f32.mrb[0].mxu0
    %v292 = vadd.f32 0.0, %v291
    %v293 = vpop.f32.mrb[0].mxu0
    %v294 = vadd.f32 0.0, %v293
    %v295 = vpop.f32.mrb[0].mxu0
    %v296 = vadd.f32 0.0, %v295
    %v297 = vpop.f32.mrb[0].mxu0
    %v298 = vadd.f32 0.0, %v297
    %299 = vdwg.mxu0
    %v300 = vadd.f32 %v163, %v262
    %v301 = vadd.f32 %v167, %v264
    %v302 = vadd.f32 %v163, %v266
    %v303 = vadd.f32 %v167, %v268
    %v304 = vadd.f32 %v163, %v272
    %v305 = vadd.f32 %v167, %v274
    %v306 = vadd.f32 %v163, %v276
    %v307 = vadd.f32 %v167, %v278
    %v308 = vadd.f32 %v163, %v282
    %v309 = vadd.f32 %v167, %v284
    %v310 = vadd.f32 %v163, %v286
    %v311 = vadd.f32 %v167, %v288
    %v312 = vadd.f32 %v163, %v292
    %v313 = vadd.f32 %v167, %v294
    %v314 = vadd.f32 %v163, %v296
    %v315 = vadd.f32 %v167, %v298
    %316 = vst [vmem:[#allocation2] sm:$0xff] %v300
    %317 = vst [vmem:[#allocation2 + $0x8] sm:$0xff] %v301
    %318 = vst [vmem:[#allocation2 + $0x10] sm:$0xff] %v302
    %319 = vst [vmem:[#allocation2 + $0x18] sm:$0xff] %v303
    %320 = vst [vmem:[#allocation2 + $0x20] sm:$0xff] %v304
    %321 = vst [vmem:[#allocation2 + $0x28] sm:$0xff] %v305
    %322 = vst [vmem:[#allocation2 + $0x30] sm:$0xff] %v306
    %323 = vst [vmem:[#allocation2 + $0x38] sm:$0xff] %v307
    %324 = vst [vmem:[#allocation2 + $0x40] sm:$0xff] %v308
    %325 = vst [vmem:[#allocation2 + $0x48] sm:$0xff] %v309
    %326 = vst [vmem:[#allocation2 + $0x50] sm:$0xff] %v310
    %327 = vst [vmem:[#allocation2 + $0x58] sm:$0xff] %v311
    %328 = vst [vmem:[#allocation2 + $0x60] sm:$0xff] %v312
    %329 = vst [vmem:[#allocation2 + $0x68] sm:$0xff] %v313
    %330 = vst [vmem:[#allocation2 + $0x70] sm:$0xff] %v314
    %331 = vst [vmem:[#allocation2 + $0x78] sm:$0xff] %v315
    %v332 = vld [vmem:[#allocation9] sm:$0xff]
    %v333 = vld [vmem:[#allocation9 + $0x8] sm:$0xff]
    %v334 = vld [vmem:[#allocation9 + $0x10] sm:$0xff]
    %v335 = vld [vmem:[#allocation9 + $0x18] sm:$0xff]
    %v340 = vunpack.c.l.b16 %v332
    %v341 = vunpack.c.h.b16 %v332
    %v342 = vunpack.c.l.b16 %v333
    %v343 = vunpack.c.h.b16 %v333
    %v344 = vunpack.c.l.b16 %v334
    %v345 = vunpack.c.h.b16 %v334
    %v346 = vunpack.c.l.b16 %v335
    %v347 = vunpack.c.h.b16 %v335
    %v348 = vpack.c.b16 %v342, %v340
    %v349 = vpack.c.b16 %v343, %v341
    %v350 = vpack.c.b16 %v346, %v344
    %v351 = vpack.c.b16 %v347, %v345
    %v357 = vsel %vm214, 0, 0
    %359 = vmatprep.subr.bf16.mxu0 %v349
    %360 = vmatpush1.bf16.msra.mxu0 %v348
    %361 = vmatprep.subr.bf16.mxu0 %v351
    %362 = vmatpush1.bf16.msra.mxu0 %v350
    %363 = vmatprep.subr.bf16.mxu0 0
    %364 = vmatpush1.bf16.msra.mxu0 0
    %365 = vmatprep.subr.bf16.mxu0 0
    %366 = vmatpush1.bf16.msra.mxu0 0
    %367 = vmatprep.subr.bf16.mxu0 0
    %368 = vmatpush1.bf16.msra.mxu0 0
    %369 = vmatprep.subr.bf16.mxu0 0
    %370 = vmatpush1.bf16.msra.mxu0 0
    %371 = vmatprep.subr.bf16.mxu0 0
    %372 = vmatpush1.bf16.msra.mxu0 0
    %373 = vmatprep.subr.bf16.mxu0 0
    %374 = vmatpush1.bf16.msra.mxu0 0
    %375 = vmatprep.subr.bf16.mxu0 0
    %376 = vmatpush1.bf16.msra.mxu0 0
    %377 = vmatprep.subr.bf16.mxu0 0
    %378 = vmatpush1.bf16.msra.mxu0 0
    %379 = vmatprep.subr.bf16.mxu0 0
    %380 = vmatpush1.bf16.msra.mxu0 0
    %381 = vmatprep.subr.bf16.mxu0 0
    %382 = vmatpush1.bf16.msra.mxu0 0
    %383 = vmatprep.subr.bf16.mxu0 0
    %384 = vmatpush1.bf16.msra.mxu0 0
    %385 = vmatprep.subr.bf16.mxu0 0
    %386 = vmatpush1.bf16.msra.mxu0 0
    %387 = vmatprep.subr.bf16.mxu0 0
    %388 = vmatpush1.bf16.msra.mxu0 0
    %389 = vmatprep.subr.bf16.mxu0 0
    %390 = vmatpush1.bf16.msra.mxu0 0
    %391 = vmatprep.mubr.bf16.mxu0 0
    %392 = vmatmul.mubr.bf16.gmra.mrb[0].mxu0 %v357
    %v393 = vpop.f32.mrb[0].mxu0
    %v394 = vadd.f32 0.0, %v393
    %v395 = vpop.f32.mrb[0].mxu0
    %v396 = vpop.f32.mrb[0].mxu0
    %v397 = vpop.f32.mrb[0].mxu0
    %v398 = vadd.f32 0.0, %v397
    %399 = vdwg.mxu0
    %s400 = smul.u32 0, 2
    %s401 = smul.addr %s400, 8
    %s402 = scalar_lea.vmem [#allocation2], %s401
    %v403 = vld [vmem:[%s402] sm:$0xff]
    %v404 = vadd.f32 %v403, %v394
    %s405 = smul.u32 7, 2
    %s406 = smul.addr %s405, 8
    %s407 = scalar_lea.vmem [#allocation2], %s406
    %v408 = vld [vmem:[%s407 + $0x8] sm:$0xff]
    %v409 = vadd.f32 %v408, %v398
    %v410 = vxor.u32 %v404, 2147483648
    %v411 = vxor.u32 %v409, 2147483648
    %v412 = vmul.f32 %v410, 1.442695
    %v413 = vpow.pop %v412
    %v414 = vmul.f32 %v411, 1.442695
    %v415 = vpow.pop %v414
    %v416 = vadd.f32 %v413, 1.0
    %v417 = vadd.f32 %v415, 1.0
    %v418 = vrcp.pop %v416
    %v419 = vmul.f32 1.0, %v418
    %v420 = vrcp.pop %v417
    %v421 = vmul.f32 1.0, %v420
    %v422 = vtanh.pop %v404
    %v423 = vtanh.pop %v409
    %v424 = vmul.f32 %v419, 0.0
    %v425 = vmul.f32 %v421, 0.0
    %428 = vrot.lane.b32.xlu0 %v422, 64
    %v429 = vpop.permute.xlu0 %428
    %430 = vrot.lane.b32.xlu0 %v423, 64
    %v431 = vpop.permute.xlu0 %430
    %v434 = vmul.f32 %v419, %v429
    %v435 = vmul.f32 %v421, %v431
    %438 = vrot.lane.b32.xlu0 %v434, 32
    %v439 = vpop.permute.xlu0 %438
    %440 = vrot.lane.b32.xlu0 %v435, 32
    %v441 = vpop.permute.xlu0 %440
    %v444 = vadd.f32 %v424, %v439
    %v445 = vadd.f32 %v425, %v441
    %v446 = vtanh.pop %v444
    %v447 = vtanh.pop %v445
    %450 = vrot.lane.b32.xlu0 %v446, 64
    %v451 = vpop.permute.xlu0 %450
    %452 = vrot.lane.b32.xlu0 %v447, 64
    %v453 = vpop.permute.xlu0 %452
    %v456 = vmul.f32 %v419, %v451
    %v457 = vmul.f32 %v421, %v453
    %459 = vrot.lane.b32.xlu0 %v456, 32
    %v460 = vpop.permute.xlu0 %459
    %462 = vst.msk [vmem:[#allocation3] sm:$0xff] %vm214, %v460
    %464 = vrot.lane.b32.xlu0 %v457, 64
    %v465 = vpop.permute.xlu0 %464
    %s467 = scalar_lea.vmem [#allocation3], 56
    %vm468 = vcmask 523520
    %469 = vst.msk [vmem:[%s467] sm:$0xff] %vm468, %v465
    %v470 = vpack.c.bf16 %v457, %v456
    %472 = vrot.lane.b32.xlu0 %v470, 32
    %v473 = vpop.permute.xlu0 %472
    %v475 = vsel %vm214, %v473, 0
    %477 = vmatprep.subr.bf16.mxu0 %v349
    %478 = vmatpush1.bf16.msra.mxu0 %v348
    %479 = vmatprep.subr.bf16.mxu0 %v351
    %480 = vmatpush1.bf16.msra.mxu0 %v350
    %481 = vmatprep.subr.bf16.mxu0 0
    %482 = vmatpush1.bf16.msra.mxu0 0
    %483 = vmatprep.subr.bf16.mxu0 0
    %484 = vmatpush1.bf16.msra.mxu0 0
    %485 = vmatprep.subr.bf16.mxu0 0
    %486 = vmatpush1.bf16.msra.mxu0 0
    %487 = vmatprep.subr.bf16.mxu0 0
    %488 = vmatpush1.bf16.msra.mxu0 0
    %489 = vmatprep.subr.bf16.mxu0 0
    %490 = vmatpush1.bf16.msra.mxu0 0
    %491 = vmatprep.subr.bf16.mxu0 0
    %492 = vmatpush1.bf16.msra.mxu0 0
    %493 = vmatprep.subr.bf16.mxu0 0
    %494 = vmatpush1.bf16.msra.mxu0 0
    %495 = vmatprep.subr.bf16.mxu0 0
    %496 = vmatpush1.bf16.msra.mxu0 0
    %497 = vmatprep.subr.bf16.mxu0 0
    %498 = vmatpush1.bf16.msra.mxu0 0
    %499 = vmatprep.subr.bf16.mxu0 0
    %500 = vmatpush1.bf16.msra.mxu0 0
    %501 = vmatprep.subr.bf16.mxu0 0
    %502 = vmatpush1.bf16.msra.mxu0 0
    %503 = vmatprep.subr.bf16.mxu0 0
    %504 = vmatpush1.bf16.msra.mxu0 0
    %505 = vmatprep.subr.bf16.mxu0 0
    %506 = vmatpush1.bf16.msra.mxu0 0
    %507 = vmatprep.subr.bf16.mxu0 0
    %508 = vmatpush1.bf16.msra.mxu0 0
    %509 = vmatprep.mubr.bf16.mxu0 0
    %510 = vmatmul.mubr.bf16.gmra.mrb[0].mxu0 %v475
    %v511 = vpop.f32.mrb[0].mxu0
    %v512 = vadd.f32 0.0, %v511
    %v513 = vpop.f32.mrb[0].mxu0
    %v514 = vpop.f32.mrb[0].mxu0
    %v515 = vpop.f32.mrb[0].mxu0
    %v516 = vadd.f32 0.0, %v515
    %517 = vdwg.mxu0
    %s518 = smul.u32 1, 2
    %s519 = smul.addr %s518, 8
    %s520 = scalar_lea.vmem [#allocation2], %s519
    %v521 = vld [vmem:[%s520] sm:$0xff]
    %v522 = vadd.f32 %v521, %v512
    %s523 = smul.u32 6, 2
    %s524 = smul.addr %s523, 8
    %s525 = scalar_lea.vmem [#allocation2], %s524
    %v526 = vld [vmem:[%s525 + $0x8] sm:$0xff]
    %v527 = vadd.f32 %v526, %v516
    %v528 = vxor.u32 %v522, 2147483648
    %v529 = vxor.u32 %v527, 2147483648
    %v530 = vmul.f32 %v528, 1.442695
    %v531 = vpow.pop %v530
    %v532 = vmul.f32 %v529, 1.442695
    %v533 = vpow.pop %v532
    %v534 = vadd.f32 %v531, 1.0
    %v535 = vadd.f32 %v533, 1.0
    %v536 = vrcp.pop %v534
    %v537 = vmul.f32 1.0, %v536
    %v538 = vrcp.pop %v535
    %v539 = vmul.f32 1.0, %v538
    %v540 = vtanh.pop %v522
    %v541 = vtanh.pop %v527
    %v542 = vmul.f32 %v537, %v444
    %v543 = vmul.f32 %v539, %v445
    %546 = vrot.lane.b32.xlu0 %v540, 64
    %v547 = vpop.permute.xlu0 %546
    %548 = vrot.lane.b32.xlu0 %v541, 64
    %v549 = vpop.permute.xlu0 %548
    %v552 = vmul.f32 %v537, %v547
    %v553 = vmul.f32 %v539, %v549
    %556 = vrot.lane.b32.xlu0 %v552, 32
    %v557 = vpop.permute.xlu0 %556
    %558 = vrot.lane.b32.xlu0 %v553, 32
    %v559 = vpop.permute.xlu0 %558
    %v562 = vadd.f32 %v542, %v557
    %v563 = vadd.f32 %v543, %v559
    %v564 = vtanh.pop %v562
    %v565 = vtanh.pop %v563
    %568 = vrot.lane.b32.xlu0 %v564, 64
    %v569 = vpop.permute.xlu0 %568
    %570 = vrot.lane.b32.xlu0 %v565, 64
    %v571 = vpop.permute.xlu0 %570
    %v574 = vmul.f32 %v537, %v569
    %v575 = vmul.f32 %v539, %v571
    %577 = vrot.lane.b32.xlu0 %v574, 32
    %v578 = vpop.permute.xlu0 %577
    %s580 = scalar_lea.vmem [#allocation3], 8
    %581 = vst.msk [vmem:[%s580] sm:$0xff] %vm214, %v578
    %583 = vrot.lane.b32.xlu0 %v575, 64
    %v584 = vpop.permute.xlu0 %583
    %s586 = scalar_lea.vmem [#allocation3], 48
    %587 = vst.msk [vmem:[%s586] sm:$0xff] %vm468, %v584
    %v588 = vpack.c.bf16 %v575, %v574
    %590 = vrot.lane.b32.xlu0 %v588, 32
    %v591 = vpop.permute.xlu0 %590
    %v593 = vsel %vm214, %v591, 0
    %595 = vmatprep.subr.bf16.mxu0 %v349
    %596 = vmatpush1.bf16.msra.mxu0 %v348
    %597 = vmatprep.subr.bf16.mxu0 %v351
    %598 = vmatpush1.bf16.msra.mxu0 %v350
    %599 = vmatprep.subr.bf16.mxu0 0
    %600 = vmatpush1.bf16.msra.mxu0 0
    %601 = vmatprep.subr.bf16.mxu0 0
    %602 = vmatpush1.bf16.msra.mxu0 0
    %603 = vmatprep.subr.bf16.mxu0 0
    %604 = vmatpush1.bf16.msra.mxu0 0
    %605 = vmatprep.subr.bf16.mxu0 0
    %606 = vmatpush1.bf16.msra.mxu0 0
    %607 = vmatprep.subr.bf16.mxu0 0
    %608 = vmatpush1.bf16.msra.mxu0 0
    %609 = vmatprep.subr.bf16.mxu0 0
    %610 = vmatpush1.bf16.msra.mxu0 0
    %611 = vmatprep.subr.bf16.mxu0 0
    %612 = vmatpush1.bf16.msra.mxu0 0
    %613 = vmatprep.subr.bf16.mxu0 0
    %614 = vmatpush1.bf16.msra.mxu0 0
    %615 = vmatprep.subr.bf16.mxu0 0
    %616 = vmatpush1.bf16.msra.mxu0 0
    %617 = vmatprep.subr.bf16.mxu0 0
    %618 = vmatpush1.bf16.msra.mxu0 0
    %619 = vmatprep.subr.bf16.mxu0 0
    %620 = vmatpush1.bf16.msra.mxu0 0
    %621 = vmatprep.subr.bf16.mxu0 0
    %622 = vmatpush1.bf16.msra.mxu0 0
    %623 = vmatprep.subr.bf16.mxu0 0
    %624 = vmatpush1.bf16.msra.mxu0 0
    %625 = vmatprep.subr.bf16.mxu0 0
    %626 = vmatpush1.bf16.msra.mxu0 0
    %627 = vmatprep.mubr.bf16.mxu0 0
    %628 = vmatmul.mubr.bf16.gmra.mrb[0].mxu0 %v593
    %v629 = vpop.f32.mrb[0].mxu0
    %v630 = vadd.f32 0.0, %v629
    %v631 = vpop.f32.mrb[0].mxu0
    %v632 = vpop.f32.mrb[0].mxu0
    %v633 = vpop.f32.mrb[0].mxu0
    %v634 = vadd.f32 0.0, %v633
    %635 = vdwg.mxu0
    %s636 = smul.u32 2, 2
    %s637 = smul.addr %s636, 8
    %s638 = scalar_lea.vmem [#allocation2], %s637
    %v639 = vld [vmem:[%s638] sm:$0xff]
    %v640 = vadd.f32 %v639, %v630
    %s641 = smul.u32 5, 2
    %s642 = smul.addr %s641, 8
    %s643 = scalar_lea.vmem [#allocation2], %s642
    %v644 = vld [vmem:[%s643 + $0x8] sm:$0xff]
    %v645 = vadd.f32 %v644, %v634
    %v646 = vxor.u32 %v640, 2147483648
    %v647 = vxor.u32 %v645, 2147483648
    %v648 = vmul.f32 %v646, 1.442695
    %v649 = vpow.pop %v648
    %v650 = vmul.f32 %v647, 1.442695
    %v651 = vpow.pop %v650
    %v652 = vadd.f32 %v649, 1.0
    %v653 = vadd.f32 %v651, 1.0
    %v654 = vrcp.pop %v652
    %v655 = vmul.f32 1.0, %v654
    %v656 = vrcp.pop %v653
    %v657 = vmul.f32 1.0, %v656
    %v658 = vtanh.pop %v640
    %v659 = vtanh.pop %v645
    %v660 = vmul.f32 %v655, %v562
    %v661 = vmul.f32 %v657, %v563
    %664 = vrot.lane.b32.xlu0 %v658, 64
    %v665 = vpop.permute.xlu0 %664
    %666 = vrot.lane.b32.xlu0 %v659, 64
    %v667 = vpop.permute.xlu0 %666
    %v670 = vmul.f32 %v655, %v665
    %v671 = vmul.f32 %v657, %v667
    %674 = vrot.lane.b32.xlu0 %v670, 32
    %v675 = vpop.permute.xlu0 %674
    %676 = vrot.lane.b32.xlu0 %v671, 32
    %v677 = vpop.permute.xlu0 %676
    %v680 = vadd.f32 %v660, %v675
    %v681 = vadd.f32 %v661, %v677
    %v682 = vtanh.pop %v680
    %v683 = vtanh.pop %v681
    %686 = vrot.lane.b32.xlu0 %v682, 64
    %v687 = vpop.permute.xlu0 %686
    %688 = vrot.lane.b32.xlu0 %v683, 64
    %v689 = vpop.permute.xlu0 %688
    %v692 = vmul.f32 %v655, %v687
    %v693 = vmul.f32 %v657, %v689
    %695 = vrot.lane.b32.xlu0 %v692, 32
    %v696 = vpop.permute.xlu0 %695
    %s698 = scalar_lea.vmem [#allocation3], 16
    %699 = vst.msk [vmem:[%s698] sm:$0xff] %vm214, %v696
    %701 = vrot.lane.b32.xlu0 %v693, 64
    %v702 = vpop.permute.xlu0 %701
    %s704 = scalar_lea.vmem [#allocation3], 40
    %705 = vst.msk [vmem:[%s704] sm:$0xff] %vm468, %v702
    %v706 = vpack.c.bf16 %v693, %v692
    %708 = vrot.lane.b32.xlu0 %v706, 32
    %v709 = vpop.permute.xlu0 %708
    %v711 = vsel %vm214, %v709, 0
    %713 = vmatprep.subr.bf16.mxu0 %v349
    %714 = vmatpush1.bf16.msra.mxu0 %v348
    %715 = vmatprep.subr.bf16.mxu0 %v351
    %716 = vmatpush1.bf16.msra.mxu0 %v350
    %717 = vmatprep.subr.bf16.mxu0 0
    %718 = vmatpush1.bf16.msra.mxu0 0
    %719 = vmatprep.subr.bf16.mxu0 0
    %720 = vmatpush1.bf16.msra.mxu0 0
    %721 = vmatprep.subr.bf16.mxu0 0
    %722 = vmatpush1.bf16.msra.mxu0 0
    %723 = vmatprep.subr.bf16.mxu0 0
    %724 = vmatpush1.bf16.msra.mxu0 0
    %725 = vmatprep.subr.bf16.mxu0 0
    %726 = vmatpush1.bf16.msra.mxu0 0
    %727 = vmatprep.subr.bf16.mxu0 0
    %728 = vmatpush1.bf16.msra.mxu0 0
    %729 = vmatprep.subr.bf16.mxu0 0
    %730 = vmatpush1.bf16.msra.mxu0 0
    %731 = vmatprep.subr.bf16.mxu0 0
    %732 = vmatpush1.bf16.msra.mxu0 0
    %733 = vmatprep.subr.bf16.mxu0 0
    %734 = vmatpush1.bf16.msra.mxu0 0
    %735 = vmatprep.subr.bf16.mxu0 0
    %736 = vmatpush1.bf16.msra.mxu0 0
    %737 = vmatprep.subr.bf16.mxu0 0
    %738 = vmatpush1.bf16.msra.mxu0 0
    %739 = vmatprep.subr.bf16.mxu0 0
    %740 = vmatpush1.bf16.msra.mxu0 0
    %741 = vmatprep.subr.bf16.mxu0 0
    %742 = vmatpush1.bf16.msra.mxu0 0
    %743 = vmatprep.subr.bf16.mxu0 0
    %744 = vmatpush1.bf16.msra.mxu0 0
    %745 = vmatprep.mubr.bf16.mxu0 0
    %746 = vmatmul.mubr.bf16.gmra.mrb[0].mxu0 %v711
    %v747 = vpop.f32.mrb[0].mxu0
    %v748 = vadd.f32 0.0, %v747
    %v749 = vpop.f32.mrb[0].mxu0
    %v750 = vpop.f32.mrb[0].mxu0
    %v751 = vpop.f32.mrb[0].mxu0
    %v752 = vadd.f32 0.0, %v751
    %753 = vdwg.mxu0
    %s754 = smul.u32 3, 2
    %s755 = smul.addr %s754, 8
    %s756 = scalar_lea.vmem [#allocation2], %s755
    %v757 = vld [vmem:[%s756] sm:$0xff]
    %v758 = vadd.f32 %v757, %v748
    %s759 = smul.u32 4, 2
    %s760 = smul.addr %s759, 8
    %s761 = scalar_lea.vmem [#allocation2], %s760
    %v762 = vld [vmem:[%s761 + $0x8] sm:$0xff]
    %v763 = vadd.f32 %v762, %v752
    %v764 = vxor.u32 %v758, 2147483648
    %v765 = vxor.u32 %v763, 2147483648
    %v766 = vmul.f32 %v764, 1.442695
    %v767 = vpow.pop %v766
    %v768 = vmul.f32 %v765, 1.442695
    %v769 = vpow.pop %v768
    %v770 = vadd.f32 %v767, 1.0
    %v771 = vadd.f32 %v769, 1.0
    %v772 = vrcp.pop %v770
    %v773 = vmul.f32 1.0, %v772
    %v774 = vrcp.pop %v771
    %v775 = vmul.f32 1.0, %v774
    %v776 = vtanh.pop %v758
    %v777 = vtanh.pop %v763
    %v778 = vmul.f32 %v773, %v680
    %v779 = vmul.f32 %v775, %v681
    %782 = vrot.lane.b32.xlu0 %v776, 64
    %v783 = vpop.permute.xlu0 %782
    %784 = vrot.lane.b32.xlu0 %v777, 64
    %v785 = vpop.permute.xlu0 %784
    %v788 = vmul.f32 %v773, %v783
    %v789 = vmul.f32 %v775, %v785
    %792 = vrot.lane.b32.xlu0 %v788, 32
    %v793 = vpop.permute.xlu0 %792
    %794 = vrot.lane.b32.xlu0 %v789, 32
    %v795 = vpop.permute.xlu0 %794
    %v798 = vadd.f32 %v778, %v793
    %v799 = vadd.f32 %v779, %v795
    %v800 = vtanh.pop %v798
    %v801 = vtanh.pop %v799
    %804 = vrot.lane.b32.xlu0 %v800, 64
    %v805 = vpop.permute.xlu0 %804
    %806 = vrot.lane.b32.xlu0 %v801, 64
    %v807 = vpop.permute.xlu0 %806
    %v810 = vmul.f32 %v773, %v805
    %v811 = vmul.f32 %v775, %v807
    %813 = vrot.lane.b32.xlu0 %v810, 32
    %v814 = vpop.permute.xlu0 %813
    %s816 = scalar_lea.vmem [#allocation3], 24
    %817 = vst.msk [vmem:[%s816] sm:$0xff] %vm214, %v814
    %819 = vrot.lane.b32.xlu0 %v811, 64
    %v820 = vpop.permute.xlu0 %819
    %s822 = scalar_lea.vmem [#allocation3], 32
    %823 = vst.msk [vmem:[%s822] sm:$0xff] %vm468, %v820
    %v824 = vpack.c.bf16 %v811, %v810
    %826 = vrot.lane.b32.xlu0 %v824, 32
    %v827 = vpop.permute.xlu0 %826
    %v829 = vsel %vm214, %v827, 0
    %831 = vmatprep.subr.bf16.mxu0 %v349
    %832 = vmatpush1.bf16.msra.mxu0 %v348
    %833 = vmatprep.subr.bf16.mxu0 %v351
    %834 = vmatpush1.bf16.msra.mxu0 %v350
    %835 = vmatprep.subr.bf16.mxu0 0
    %836 = vmatpush1.bf16.msra.mxu0 0
    %837 = vmatprep.subr.bf16.mxu0 0
    %838 = vmatpush1.bf16.msra.mxu0 0
    %839 = vmatprep.subr.bf16.mxu0 0
    %840 = vmatpush1.bf16.msra.mxu0 0
    %841 = vmatprep.subr.bf16.mxu0 0
    %842 = vmatpush1.bf16.msra.mxu0 0
    %843 = vmatprep.subr.bf16.mxu0 0
    %844 = vmatpush1.bf16.msra.mxu0 0
    %845 = vmatprep.subr.bf16.mxu0 0
    %846 = vmatpush1.bf16.msra.mxu0 0
    %847 = vmatprep.subr.bf16.mxu0 0
    %848 = vmatpush1.bf16.msra.mxu0 0
    %849 = vmatprep.subr.bf16.mxu0 0
    %850 = vmatpush1.bf16.msra.mxu0 0
    %851 = vmatprep.subr.bf16.mxu0 0
    %852 = vmatpush1.bf16.msra.mxu0 0
    %853 = vmatprep.subr.bf16.mxu0 0
    %854 = vmatpush1.bf16.msra.mxu0 0
    %855 = vmatprep.subr.bf16.mxu0 0
    %856 = vmatpush1.bf16.msra.mxu0 0
    %857 = vmatprep.subr.bf16.mxu0 0
    %858 = vmatpush1.bf16.msra.mxu0 0
    %859 = vmatprep.subr.bf16.mxu0 0
    %860 = vmatpush1.bf16.msra.mxu0 0
    %861 = vmatprep.subr.bf16.mxu0 0
    %862 = vmatpush1.bf16.msra.mxu0 0
    %863 = vmatprep.mubr.bf16.mxu0 0
    %864 = vmatmul.mubr.bf16.gmra.mrb[0].mxu0 %v829
    %v865 = vpop.f32.mrb[0].mxu0
    %v866 = vadd.f32 0.0, %v865
    %v867 = vpop.f32.mrb[0].mxu0
    %v868 = vpop.f32.mrb[0].mxu0
    %v869 = vpop.f32.mrb[0].mxu0
    %v870 = vadd.f32 0.0, %v869
    %871 = vdwg.mxu0
    %v872 = vld [vmem:[%s761] sm:$0xff]
    %v873 = vadd.f32 %v872, %v866
    %v874 = vld [vmem:[%s756 + $0x8] sm:$0xff]
    %v875 = vadd.f32 %v874, %v870
    %v876 = vxor.u32 %v873, 2147483648
    %v877 = vxor.u32 %v875, 2147483648
    %v878 = vmul.f32 %v876, 1.442695
    %v879 = vpow.pop %v878
    %v880 = vmul.f32 %v877, 1.442695
    %v881 = vpow.pop %v880
    %v882 = vadd.f32 %v879, 1.0
    %v883 = vadd.f32 %v881, 1.0
    %v884 = vrcp.pop %v882
    %v885 = vmul.f32 1.0, %v884
    %v886 = vrcp.pop %v883
    %v887 = vmul.f32 1.0, %v886
    %v888 = vtanh.pop %v873
    %v889 = vtanh.pop %v875
    %v890 = vmul.f32 %v885, %v798
    %v891 = vmul.f32 %v887, %v799
    %894 = vrot.lane.b32.xlu0 %v888, 64
    %v895 = vpop.permute.xlu0 %894
    %896 = vrot.lane.b32.xlu0 %v889, 64
    %v897 = vpop.permute.xlu0 %896
    %v900 = vmul.f32 %v885, %v895
    %v901 = vmul.f32 %v887, %v897
    %904 = vrot.lane.b32.xlu0 %v900, 32
    %v905 = vpop.permute.xlu0 %904
    %906 = vrot.lane.b32.xlu0 %v901, 32
    %v907 = vpop.permute.xlu0 %906
    %v910 = vadd.f32 %v890, %v905
    %v911 = vadd.f32 %v891, %v907
    %v912 = vtanh.pop %v910
    %v913 = vtanh.pop %v911
    %916 = vrot.lane.b32.xlu0 %v912, 64
    %v917 = vpop.permute.xlu0 %916
    %918 = vrot.lane.b32.xlu0 %v913, 64
    %v919 = vpop.permute.xlu0 %918
    %v922 = vmul.f32 %v885, %v917
    %v923 = vmul.f32 %v887, %v919
    %925 = vrot.lane.b32.xlu0 %v922, 32
    %v926 = vpop.permute.xlu0 %925
    %928 = vst.msk [vmem:[%s822] sm:$0xff] %vm214, %v926
    %930 = vrot.lane.b32.xlu0 %v923, 64
    %v931 = vpop.permute.xlu0 %930
    %933 = vst.msk [vmem:[%s816] sm:$0xff] %vm468, %v931
    %v934 = vpack.c.bf16 %v923, %v922
    %936 = vrot.lane.b32.xlu0 %v934, 32
    %v937 = vpop.permute.xlu0 %936
    %v939 = vsel %vm214, %v937, 0
    %941 = vmatprep.subr.bf16.mxu0 %v349
    %942 = vmatpush1.bf16.msra.mxu0 %v348
    %943 = vmatprep.subr.bf16.mxu0 %v351
    %944 = vmatpush1.bf16.msra.mxu0 %v350
    %945 = vmatprep.subr.bf16.mxu0 0
    %946 = vmatpush1.bf16.msra.mxu0 0
    %947 = vmatprep.subr.bf16.mxu0 0
    %948 = vmatpush1.bf16.msra.mxu0 0
    %949 = vmatprep.subr.bf16.mxu0 0
    %950 = vmatpush1.bf16.msra.mxu0 0
    %951 = vmatprep.subr.bf16.mxu0 0
    %952 = vmatpush1.bf16.msra.mxu0 0
    %953 = vmatprep.subr.bf16.mxu0 0
    %954 = vmatpush1.bf16.msra.mxu0 0
    %955 = vmatprep.subr.bf16.mxu0 0
    %956 = vmatpush1.bf16.msra.mxu0 0
    %957 = vmatprep.subr.bf16.mxu0 0
    %958 = vmatpush1.bf16.msra.mxu0 0
    %959 = vmatprep.subr.bf16.mxu0 0
    %960 = vmatpush1.bf16.msra.mxu0 0
    %961 = vmatprep.subr.bf16.mxu0 0
    %962 = vmatpush1.bf16.msra.mxu0 0
    %963 = vmatprep.subr.bf16.mxu0 0
    %964 = vmatpush1.bf16.msra.mxu0 0
    %965 = vmatprep.subr.bf16.mxu0 0
    %966 = vmatpush1.bf16.msra.mxu0 0
    %967 = vmatprep.subr.bf16.mxu0 0
    %968 = vmatpush1.bf16.msra.mxu0 0
    %969 = vmatprep.subr.bf16.mxu0 0
    %970 = vmatpush1.bf16.msra.mxu0 0
    %971 = vmatprep.subr.bf16.mxu0 0
    %972 = vmatpush1.bf16.msra.mxu0 0
    %973 = vmatprep.mubr.bf16.mxu0 0
    %974 = vmatmul.mubr.bf16.gmra.mrb[0].mxu0 %v939
    %v975 = vpop.f32.mrb[0].mxu0
    %v976 = vadd.f32 0.0, %v975
    %v977 = vpop.f32.mrb[0].mxu0
    %v978 = vpop.f32.mrb[0].mxu0
    %v979 = vpop.f32.mrb[0].mxu0
    %v980 = vadd.f32 0.0, %v979
    %981 = vdwg.mxu0
    %v982 = vld [vmem:[%s643] sm:$0xff]
    %v983 = vadd.f32 %v982, %v976
    %v984 = vld [vmem:[%s638 + $0x8] sm:$0xff]
    %v985 = vadd.f32 %v984, %v980
    %v986 = vxor.u32 %v983, 2147483648
    %v987 = vxor.u32 %v985, 2147483648
    %v988 = vmul.f32 %v986, 1.442695
    %v989 = vpow.pop %v988
    %v990 = vmul.f32 %v987, 1.442695
    %v991 = vpow.pop %v990
    %v992 = vadd.f32 %v989, 1.0
    %v993 = vadd.f32 %v991, 1.0
    %v994 = vrcp.pop %v992
    %v995 = vmul.f32 1.0, %v994
    %v996 = vrcp.pop %v993
    %v997 = vmul.f32 1.0, %v996
    %v998 = vtanh.pop %v983
    %v999 = vtanh.pop %v985
    %v1000 = vmul.f32 %v995, %v910
    %v1001 = vmul.f32 %v997, %v911
    %1004 = vrot.lane.b32.xlu0 %v998, 64
    %v1005 = vpop.permute.xlu0 %1004
    %1006 = vrot.lane.b32.xlu0 %v999, 64
    %v1007 = vpop.permute.xlu0 %1006
    %v1010 = vmul.f32 %v995, %v1005
    %v1011 = vmul.f32 %v997, %v1007
    %1014 = vrot.lane.b32.xlu0 %v1010, 32
    %v1015 = vpop.permute.xlu0 %1014
    %1016 = vrot.lane.b32.xlu0 %v1011, 32
    %v1017 = vpop.permute.xlu0 %1016
    %v1020 = vadd.f32 %v1000, %v1015
    %v1021 = vadd.f32 %v1001, %v1017
    %v1022 = vtanh.pop %v1020
    %v1023 = vtanh.pop %v1021
    %1026 = vrot.lane.b32.xlu0 %v1022, 64
    %v1027 = vpop.permute.xlu0 %1026
    %1028 = vrot.lane.b32.xlu0 %v1023, 64
    %v1029 = vpop.permute.xlu0 %1028
    %v1032 = vmul.f32 %v995, %v1027
    %v1033 = vmul.f32 %v997, %v1029
    %1035 = vrot.lane.b32.xlu0 %v1032, 32
    %v1036 = vpop.permute.xlu0 %1035
    %1038 = vst.msk [vmem:[%s704] sm:$0xff] %vm214, %v1036
    %1040 = vrot.lane.b32.xlu0 %v1033, 64
    %v1041 = vpop.permute.xlu0 %1040
    %1043 = vst.msk [vmem:[%s698] sm:$0xff] %vm468, %v1041
    %v1044 = vpack.c.bf16 %v1033, %v1032
    %1046 = vrot.lane.b32.xlu0 %v1044, 32
    %v1047 = vpop.permute.xlu0 %1046
    %v1049 = vsel %vm214, %v1047, 0
    %1051 = vmatprep.subr.bf16.mxu0 %v349
    %1052 = vmatpush1.bf16.msra.mxu0 %v348
    %1053 = vmatprep.subr.bf16.mxu0 %v351
    %1054 = vmatpush1.bf16.msra.mxu0 %v350
    %1055 = vmatprep.subr.bf16.mxu0 0
    %1056 = vmatpush1.bf16.msra.mxu0 0
    %1057 = vmatprep.subr.bf16.mxu0 0
    %1058 = vmatpush1.bf16.msra.mxu0 0
    %1059 = vmatprep.subr.bf16.mxu0 0
    %1060 = vmatpush1.bf16.msra.mxu0 0
    %1061 = vmatprep.subr.bf16.mxu0 0
    %1062 = vmatpush1.bf16.msra.mxu0 0
    %1063 = vmatprep.subr.bf16.mxu0 0
    %1064 = vmatpush1.bf16.msra.mxu0 0
    %1065 = vmatprep.subr.bf16.mxu0 0
    %1066 = vmatpush1.bf16.msra.mxu0 0
    %1067 = vmatprep.subr.bf16.mxu0 0
    %1068 = vmatpush1.bf16.msra.mxu0 0
    %1069 = vmatprep.subr.bf16.mxu0 0
    %1070 = vmatpush1.bf16.msra.mxu0 0
    %1071 = vmatprep.subr.bf16.mxu0 0
    %1072 = vmatpush1.bf16.msra.mxu0 0
    %1073 = vmatprep.subr.bf16.mxu0 0
    %1074 = vmatpush1.bf16.msra.mxu0 0
    %1075 = vmatprep.subr.bf16.mxu0 0
    %1076 = vmatpush1.bf16.msra.mxu0 0
    %1077 = vmatprep.subr.bf16.mxu0 0
    %1078 = vmatpush1.bf16.msra.mxu0 0
    %1079 = vmatprep.subr.bf16.mxu0 0
    %1080 = vmatpush1.bf16.msra.mxu0 0
    %1081 = vmatprep.subr.bf16.mxu0 0
    %1082 = vmatpush1.bf16.msra.mxu0 0
    %1083 = vmatprep.mubr.bf16.mxu0 0
    %1084 = vmatmul.mubr.bf16.gmra.mrb[0].mxu0 %v1049
    %v1085 = vpop.f32.mrb[0].mxu0
    %v1086 = vadd.f32 0.0, %v1085
    %v1087 = vpop.f32.mrb[0].mxu0
    %v1088 = vpop.f32.mrb[0].mxu0
    %v1089 = vpop.f32.mrb[0].mxu0
    %v1090 = vadd.f32 0.0, %v1089
    %1091 = vdwg.mxu0
    %v1092 = vld [vmem:[%s525] sm:$0xff]
    %v1093 = vadd.f32 %v1092, %v1086
    %v1094 = vld [vmem:[%s520 + $0x8] sm:$0xff]
    %v1095 = vadd.f32 %v1094, %v1090
    %v1096 = vxor.u32 %v1093, 2147483648
    %v1097 = vxor.u32 %v1095, 2147483648
    %v1098 = vmul.f32 %v1096, 1.442695
    %v1099 = vpow.pop %v1098
    %v1100 = vmul.f32 %v1097, 1.442695
    %v1101 = vpow.pop %v1100
    %v1102 = vadd.f32 %v1099, 1.0
    %v1103 = vadd.f32 %v1101, 1.0
    %v1104 = vrcp.pop %v1102
    %v1105 = vmul.f32 1.0, %v1104
    %v1106 = vrcp.pop %v1103
    %v1107 = vmul.f32 1.0, %v1106
    %v1108 = vtanh.pop %v1093
    %v1109 = vtanh.pop %v1095
    %v1110 = vmul.f32 %v1105, %v1020
    %v1111 = vmul.f32 %v1107, %v1021
    %1114 = vrot.lane.b32.xlu0 %v1108, 64
    %v1115 = vpop.permute.xlu0 %1114
    %1116 = vrot.lane.b32.xlu0 %v1109, 64
    %v1117 = vpop.permute.xlu0 %1116
    %v1120 = vmul.f32 %v1105, %v1115
    %v1121 = vmul.f32 %v1107, %v1117
    %1124 = vrot.lane.b32.xlu0 %v1120, 32
    %v1125 = vpop.permute.xlu0 %1124
    %1126 = vrot.lane.b32.xlu0 %v1121, 32
    %v1127 = vpop.permute.xlu0 %1126
    %v1130 = vadd.f32 %v1110, %v1125
    %v1131 = vadd.f32 %v1111, %v1127
    %v1132 = vtanh.pop %v1130
    %v1133 = vtanh.pop %v1131
    %1136 = vrot.lane.b32.xlu0 %v1132, 64
    %v1137 = vpop.permute.xlu0 %1136
    %1138 = vrot.lane.b32.xlu0 %v1133, 64
    %v1139 = vpop.permute.xlu0 %1138
    %v1142 = vmul.f32 %v1105, %v1137
    %v1143 = vmul.f32 %v1107, %v1139
    %1145 = vrot.lane.b32.xlu0 %v1142, 32
    %v1146 = vpop.permute.xlu0 %1145
    %1148 = vst.msk [vmem:[%s586] sm:$0xff] %vm214, %v1146
    %1150 = vrot.lane.b32.xlu0 %v1143, 64
    %v1151 = vpop.permute.xlu0 %1150
    %1153 = vst.msk [vmem:[%s580] sm:$0xff] %vm468, %v1151
    %v1154 = vpack.c.bf16 %v1143, %v1142
    %1156 = vrot.lane.b32.xlu0 %v1154, 32
    %v1157 = vpop.permute.xlu0 %1156
    %v1159 = vsel %vm214, %v1157, 0
    %1161 = vmatprep.subr.bf16.mxu0 %v349
    %1162 = vmatpush1.bf16.msra.mxu0 %v348
    %1163 = vmatprep.subr.bf16.mxu0 %v351
    %1164 = vmatpush1.bf16.msra.mxu0 %v350
    %1165 = vmatprep.subr.bf16.mxu0 0
    %1166 = vmatpush1.bf16.msra.mxu0 0
    %1167 = vmatprep.subr.bf16.mxu0 0
    %1168 = vmatpush1.bf16.msra.mxu0 0
    %1169 = vmatprep.subr.bf16.mxu0 0
    %1170 = vmatpush1.bf16.msra.mxu0 0
    %1171 = vmatprep.subr.bf16.mxu0 0
    %1172 = vmatpush1.bf16.msra.mxu0 0
    %1173 = vmatprep.subr.bf16.mxu0 0
    %1174 = vmatpush1.bf16.msra.mxu0 0
    %1175 = vmatprep.subr.bf16.mxu0 0
    %1176 = vmatpush1.bf16.msra.mxu0 0
    %1177 = vmatprep.subr.bf16.mxu0 0
    %1178 = vmatpush1.bf16.msra.mxu0 0
    %1179 = vmatprep.subr.bf16.mxu0 0
    %1180 = vmatpush1.bf16.msra.mxu0 0
    %1181 = vmatprep.subr.bf16.mxu0 0
    %1182 = vmatpush1.bf16.msra.mxu0 0
    %1183 = vmatprep.subr.bf16.mxu0 0
    %1184 = vmatpush1.bf16.msra.mxu0 0
    %1185 = vmatprep.subr.bf16.mxu0 0
    %1186 = vmatpush1.bf16.msra.mxu0 0
    %1187 = vmatprep.subr.bf16.mxu0 0
    %1188 = vmatpush1.bf16.msra.mxu0 0
    %1189 = vmatprep.subr.bf16.mxu0 0
    %1190 = vmatpush1.bf16.msra.mxu0 0
    %1191 = vmatprep.subr.bf16.mxu0 0
    %1192 = vmatpush1.bf16.msra.mxu0 0
    %1193 = vmatprep.mubr.bf16.mxu0 0
    %1194 = vmatmul.mubr.bf16.gmra.mrb[0].mxu0 %v1159
    %v1195 = vpop.f32.mrb[0].mxu0
    %v1196 = vadd.f32 0.0, %v1195
    %v1197 = vpop.f32.mrb[0].mxu0
    %v1198 = vpop.f32.mrb[0].mxu0
    %v1199 = vpop.f32.mrb[0].mxu0
    %v1200 = vadd.f32 0.0, %v1199
    %1201 = vdwg.mxu0
    %v1202 = vld [vmem:[%s407] sm:$0xff]
    %v1203 = vadd.f32 %v1202, %v1196
    %v1204 = vld [vmem:[%s402 + $0x8] sm:$0xff]
    %v1205 = vadd.f32 %v1204, %v1200
    %v1206 = vxor.u32 %v1203, 2147483648
    %v1207 = vxor.u32 %v1205, 2147483648
    %v1208 = vmul.f32 %v1206, 1.442695
    %v1209 = vpow.pop %v1208
    %v1210 = vmul.f32 %v1207, 1.442695
    %v1211 = vpow.pop %v1210
    %v1212 = vadd.f32 %v1209, 1.0
    %v1213 = vadd.f32 %v1211, 1.0
    %v1214 = vrcp.pop %v1212
    %v1215 = vmul.f32 1.0, %v1214
    %v1216 = vrcp.pop %v1213
    %v1217 = vmul.f32 1.0, %v1216
    %v1218 = vtanh.pop %v1203
    %v1219 = vtanh.pop %v1205
    %v1220 = vmul.f32 %v1215, %v1130
    %v1221 = vmul.f32 %v1217, %v1131
    %1224 = vrot.lane.b32.xlu0 %v1218, 64
    %v1225 = vpop.permute.xlu0 %1224
    %1226 = vrot.lane.b32.xlu0 %v1219, 64
    %v1227 = vpop.permute.xlu0 %1226
    %v1230 = vmul.f32 %v1215, %v1225
    %v1231 = vmul.f32 %v1217, %v1227
    %1234 = vrot.lane.b32.xlu0 %v1230, 32
    %v1235 = vpop.permute.xlu0 %1234
    %1236 = vrot.lane.b32.xlu0 %v1231, 32
    %v1237 = vpop.permute.xlu0 %1236
    %v1240 = vadd.f32 %v1220, %v1235
    %v1241 = vadd.f32 %v1221, %v1237
    %v1242 = vtanh.pop %v1240
    %v1243 = vtanh.pop %v1241
    %1246 = vrot.lane.b32.xlu0 %v1242, 64
    %v1247 = vpop.permute.xlu0 %1246
    %1248 = vrot.lane.b32.xlu0 %v1243, 64
    %v1249 = vpop.permute.xlu0 %1248
    %v1252 = vmul.f32 %v1215, %v1247
    %v1253 = vmul.f32 %v1217, %v1249
    %1255 = vrot.lane.b32.xlu0 %v1252, 32
    %v1256 = vpop.permute.xlu0 %1255
    %1258 = vst.msk [vmem:[%s467] sm:$0xff] %vm214, %v1256
    %1260 = vrot.lane.b32.xlu0 %v1253, 64
    %v1261 = vpop.permute.xlu0 %1260
    %1263 = vst.msk [vmem:[#allocation3] sm:$0xff] %vm468, %v1261
    %v1264 = vld [vmem:[#allocation3] sm:$0xff]
    %v1265 = vld [vmem:[#allocation3 + $0x8] sm:$0xff]
    %v1266 = vld [vmem:[#allocation3 + $0x10] sm:$0xff]
    %v1267 = vld [vmem:[#allocation3 + $0x18] sm:$0xff]
    %v1268 = vld [vmem:[#allocation3 + $0x20] sm:$0xff]
    %v1269 = vld [vmem:[#allocation3 + $0x28] sm:$0xff]
    %v1270 = vld [vmem:[#allocation3 + $0x30] sm:$0xff]
    %v1271 = vld [vmem:[#allocation3 + $0x38] sm:$0xff]
    %v1272 = vpack.c.bf16 %v1265, %v1264
    %v1273 = vpack.c.bf16 %v1267, %v1266
    %v1274 = vpack.c.bf16 %v1269, %v1268
    %v1275 = vpack.c.bf16 %v1271, %v1270
    %v1276 = vld [vmem:[#allocation15] sm:$0x3]
    %v1278 = vlaneseq
    %v1279 = vshrl.u32 %v1278, 7
    %v1280 = vsub.s32 0, %v1279
    %v1281 = vrot.slane %v1276, %v1280
    %v1282 = vlaneseq
    %v1283 = vshrl.u32 %v1282, 7
    %v1284 = vsub.s32 1, %v1283
    %v1285 = vrot.slane %v1276, %v1284
    %v1288 = vld [vmem:[#allocation12] sm:$0xff]
    %v1289 = vld [vmem:[#allocation12 + $0x8] sm:$0xff]
    %v1290 = vld [vmem:[#allocation12 + $0x10] sm:$0xff]
    %v1291 = vld [vmem:[#allocation12 + $0x18] sm:$0xff]
    %v1292 = vld [vmem:[#allocation12 + $0x20] sm:$0xff]
    %v1293 = vld [vmem:[#allocation12 + $0x28] sm:$0xff]
    %v1294 = vld [vmem:[#allocation12 + $0x30] sm:$0xff]
    %v1295 = vld [vmem:[#allocation12 + $0x38] sm:$0xff]
    %v1304 = vunpack.c.l.b16 %v1288
    %v1305 = vunpack.c.h.b16 %v1288
    %v1306 = vunpack.c.l.b16 %v1289
    %v1307 = vunpack.c.h.b16 %v1289
    %v1308 = vunpack.c.l.b16 %v1290
    %v1309 = vunpack.c.h.b16 %v1290
    %v1310 = vunpack.c.l.b16 %v1291
    %v1311 = vunpack.c.h.b16 %v1291
    %v1312 = vunpack.c.l.b16 %v1292
    %v1313 = vunpack.c.h.b16 %v1292
    %v1314 = vunpack.c.l.b16 %v1293
    %v1315 = vunpack.c.h.b16 %v1293
    %v1316 = vunpack.c.l.b16 %v1294
    %v1317 = vunpack.c.h.b16 %v1294
    %v1318 = vunpack.c.l.b16 %v1295
    %v1319 = vunpack.c.h.b16 %v1295
    %v1320 = vpack.c.b16 %v1306, %v1304
    %v1321 = vpack.c.b16 %v1307, %v1305
    %v1322 = vpack.c.b16 %v1310, %v1308
    %v1323 = vpack.c.b16 %v1311, %v1309
    %v1324 = vpack.c.b16 %v1314, %v1312
    %v1325 = vpack.c.b16 %v1315, %v1313
    %v1326 = vpack.c.b16 %v1318, %v1316
    %v1327 = vpack.c.b16 %v1319, %v1317
    %vm1336 = vcmask 523264
    %v1338 = vsel %vm1336, %v1272, 0
    %v1341 = vsel %vm1336, %v1273, 0
    %v1344 = vsel %vm1336, %v1274, 0
    %v1347 = vsel %vm1336, %v1275, 0
    %1349 = vmatprep.subr.bf16.mxu0 %v1321
    %1350 = vmatpush1.bf16.msra.mxu0 %v1320
    %1351 = vmatprep.subr.bf16.mxu0 %v1323
    %1352 = vmatpush1.bf16.msra.mxu0 %v1322
    %1353 = vmatprep.subr.bf16.mxu0 %v1325
    %1354 = vmatpush1.bf16.msra.mxu0 %v1324
    %1355 = vmatprep.subr.bf16.mxu0 %v1327
    %1356 = vmatpush1.bf16.msra.mxu0 %v1326
    %1357 = vmatprep.subr.bf16.mxu0 0
    %1358 = vmatpush1.bf16.msra.mxu0 0
    %1359 = vmatprep.subr.bf16.mxu0 0
    %1360 = vmatpush1.bf16.msra.mxu0 0
    %1361 = vmatprep.subr.bf16.mxu0 0
    %1362 = vmatpush1.bf16.msra.mxu0 0
    %1363 = vmatprep.subr.bf16.mxu0 0
    %1364 = vmatpush1.bf16.msra.mxu0 0
    %1365 = vmatprep.subr.bf16.mxu0 0
    %1366 = vmatpush1.bf16.msra.mxu0 0
    %1367 = vmatprep.subr.bf16.mxu0 0
    %1368 = vmatpush1.bf16.msra.mxu0 0
    %1369 = vmatprep.subr.bf16.mxu0 0
    %1370 = vmatpush1.bf16.msra.mxu0 0
    %1371 = vmatprep.subr.bf16.mxu0 0
    %1372 = vmatpush1.bf16.msra.mxu0 0
    %1373 = vmatprep.subr.bf16.mxu0 0
    %1374 = vmatpush1.bf16.msra.mxu0 0
    %1375 = vmatprep.subr.bf16.mxu0 0
    %1376 = vmatpush1.bf16.msra.mxu0 0
    %1377 = vmatprep.subr.bf16.mxu0 0
    %1378 = vmatpush1.bf16.msra.mxu0 0
    %1379 = vmatprep.subr.bf16.mxu0 0
    %1380 = vmatpush1.bf16.msra.mxu0 0
    %1381 = vmatprep.mubr.bf16.mxu0 0
    %1382 = vmatmul.mubr.bf16.gmra.mrb[0].mxu0 %v1338
    %v1383 = vpop.f32.mrb[0].mxu0
    %v1384 = vadd.f32 0.0, %v1383
    %v1385 = vpop.f32.mrb[0].mxu0
    %v1386 = vadd.f32 0.0, %v1385
    %v1387 = vpop.f32.mrb[0].mxu0
    %v1388 = vadd.f32 0.0, %v1387
    %v1389 = vpop.f32.mrb[0].mxu0
    %v1390 = vadd.f32 0.0, %v1389
    %1391 = vmatprep.mubr.bf16.mxu0 0
    %1392 = vmatmul.mubr.bf16.gmra.mrb[0].mxu0 %v1341
    %v1393 = vpop.f32.mrb[0].mxu0
    %v1394 = vadd.f32 0.0, %v1393
    %v1395 = vpop.f32.mrb[0].mxu0
    %v1396 = vadd.f32 0.0, %v1395
    %v1397 = vpop.f32.mrb[0].mxu0
    %v1398 = vadd.f32 0.0, %v1397
    %v1399 = vpop.f32.mrb[0].mxu0
    %v1400 = vadd.f32 0.0, %v1399
    %1401 = vmatprep.mubr.bf16.mxu0 0
    %1402 = vmatmul.mubr.bf16.gmra.mrb[0].mxu0 %v1344
    %v1403 = vpop.f32.mrb[0].mxu0
    %v1404 = vadd.f32 0.0, %v1403
    %v1405 = vpop.f32.mrb[0].mxu0
    %v1406 = vadd.f32 0.0, %v1405
    %v1407 = vpop.f32.mrb[0].mxu0
    %v1408 = vadd.f32 0.0, %v1407
    %v1409 = vpop.f32.mrb[0].mxu0
    %v1410 = vadd.f32 0.0, %v1409
    %1411 = vmatprep.mubr.bf16.mxu0 0
    %1412 = vmatmul.mubr.bf16.gmra.mrb[0].mxu0 %v1347
    %v1413 = vpop.f32.mrb[0].mxu0
    %v1414 = vadd.f32 0.0, %v1413
    %v1415 = vpop.f32.mrb[0].mxu0
    %v1416 = vadd.f32 0.0, %v1415
    %v1417 = vpop.f32.mrb[0].mxu0
    %v1418 = vadd.f32 0.0, %v1417
    %v1419 = vpop.f32.mrb[0].mxu0
    %v1420 = vadd.f32 0.0, %v1419
    %1421 = vdwg.mxu0
    %v1422 = vadd.f32 %v1281, %v1384
    %v1423 = vadd.f32 %v1285, %v1386
    %v1424 = vadd.f32 %v1281, %v1388
    %v1425 = vadd.f32 %v1285, %v1390
    %v1426 = vadd.f32 %v1281, %v1394
    %v1427 = vadd.f32 %v1285, %v1396
    %v1428 = vadd.f32 %v1281, %v1398
    %v1429 = vadd.f32 %v1285, %v1400
    %v1430 = vadd.f32 %v1281, %v1404
    %v1431 = vadd.f32 %v1285, %v1406
    %v1432 = vadd.f32 %v1281, %v1408
    %v1433 = vadd.f32 %v1285, %v1410
    %v1434 = vadd.f32 %v1281, %v1414
    %v1435 = vadd.f32 %v1285, %v1416
    %v1436 = vadd.f32 %v1281, %v1418
    %v1437 = vadd.f32 %v1285, %v1420
    %1438 = vst [vmem:[#allocation2] sm:$0xff] %v1422
    %1439 = vst [vmem:[#allocation2 + $0x8] sm:$0xff] %v1423
    %1440 = vst [vmem:[#allocation2 + $0x10] sm:$0xff] %v1424
    %1441 = vst [vmem:[#allocation2 + $0x18] sm:$0xff] %v1425
    %1442 = vst [vmem:[#allocation2 + $0x20] sm:$0xff] %v1426
    %1443 = vst [vmem:[#allocation2 + $0x28] sm:$0xff] %v1427
    %1444 = vst [vmem:[#allocation2 + $0x30] sm:$0xff] %v1428
    %1445 = vst [vmem:[#allocation2 + $0x38] sm:$0xff] %v1429
    %1446 = vst [vmem:[#allocation2 + $0x40] sm:$0xff] %v1430
    %1447 = vst [vmem:[#allocation2 + $0x48] sm:$0xff] %v1431
    %1448 = vst [vmem:[#allocation2 + $0x50] sm:$0xff] %v1432
    %1449 = vst [vmem:[#allocation2 + $0x58] sm:$0xff] %v1433
    %1450 = vst [vmem:[#allocation2 + $0x60] sm:$0xff] %v1434
    %1451 = vst [vmem:[#allocation2 + $0x68] sm:$0xff] %v1435
    %1452 = vst [vmem:[#allocation2 + $0x70] sm:$0xff] %v1436
    %1453 = vst [vmem:[#allocation2 + $0x78] sm:$0xff] %v1437
    %v1454 = vld [vmem:[#allocation13] sm:$0xff]
    %v1455 = vld [vmem:[#allocation13 + $0x8] sm:$0xff]
    %v1456 = vld [vmem:[#allocation13 + $0x10] sm:$0xff]
    %v1457 = vld [vmem:[#allocation13 + $0x18] sm:$0xff]
    %v1462 = vunpack.c.l.b16 %v1454
    %v1463 = vunpack.c.h.b16 %v1454
    %v1464 = vunpack.c.l.b16 %v1455
    %v1465 = vunpack.c.h.b16 %v1455
    %v1466 = vunpack.c.l.b16 %v1456
    %v1467 = vunpack.c.h.b16 %v1456
    %v1468 = vunpack.c.l.b16 %v1457
    %v1469 = vunpack.c.h.b16 %v1457
    %v1470 = vpack.c.b16 %v1464, %v1462
    %v1471 = vpack.c.b16 %v1465, %v1463
    %v1472 = vpack.c.b16 %v1468, %v1466
    %v1473 = vpack.c.b16 %v1469, %v1467
    %1478 = vmatprep.subr.bf16.mxu0 %v1471
    %1479 = vmatpush1.bf16.msra.mxu0 %v1470
    %1480 = vmatprep.subr.bf16.mxu0 %v1473
    %1481 = vmatpush1.bf16.msra.mxu0 %v1472
    %1482 = vmatprep.subr.bf16.mxu0 0
    %1483 = vmatpush1.bf16.msra.mxu0 0
    %1484 = vmatprep.subr.bf16.mxu0 0
    %1485 = vmatpush1.bf16.msra.mxu0 0
    %1486 = vmatprep.subr.bf16.mxu0 0
    %1487 = vmatpush1.bf16.msra.mxu0 0
    %1488 = vmatprep.subr.bf16.mxu0 0
    %1489 = vmatpush1.bf16.msra.mxu0 0
    %1490 = vmatprep.subr.bf16.mxu0 0
    %1491 = vmatpush1.bf16.msra.mxu0 0
    %1492 = vmatprep.subr.bf16.mxu0 0
    %1493 = vmatpush1.bf16.msra.mxu0 0
    %1494 = vmatprep.subr.bf16.mxu0 0
    %1495 = vmatpush1.bf16.msra.mxu0 0
    %1496 = vmatprep.subr.bf16.mxu0 0
    %1497 = vmatpush1.bf16.msra.mxu0 0
    %1498 = vmatprep.subr.bf16.mxu0 0
    %1499 = vmatpush1.bf16.msra.mxu0 0
    %1500 = vmatprep.subr.bf16.mxu0 0
    %1501 = vmatpush1.bf16.msra.mxu0 0
    %1502 = vmatprep.subr.bf16.mxu0 0
    %1503 = vmatpush1.bf16.msra.mxu0 0
    %1504 = vmatprep.subr.bf16.mxu0 0
    %1505 = vmatpush1.bf16.msra.mxu0 0
    %1506 = vmatprep.subr.bf16.mxu0 0
    %1507 = vmatpush1.bf16.msra.mxu0 0
    %1508 = vmatprep.subr.bf16.mxu0 0
    %1509 = vmatpush1.bf16.msra.mxu0 0
    %1510 = vmatprep.mubr.bf16.mxu0 0
    %1511 = vmatmul.mubr.bf16.gmra.mrb[0].mxu0 %v357
    %v1512 = vpop.f32.mrb[0].mxu0
    %v1513 = vadd.f32 0.0, %v1512
    %v1514 = vpop.f32.mrb[0].mxu0
    %v1515 = vpop.f32.mrb[0].mxu0
    %v1516 = vpop.f32.mrb[0].mxu0
    %v1517 = vadd.f32 0.0, %v1516
    %1518 = vdwg.mxu0
    %v1519 = vld [vmem:[%s402] sm:$0xff]
    %v1520 = vadd.f32 %v1519, %v1513
    %v1521 = vld [vmem:[%s407 + $0x8] sm:$0xff]
    %v1522 = vadd.f32 %v1521, %v1517
    %v1523 = vxor.u32 %v1520, 2147483648
    %v1524 = vxor.u32 %v1522, 2147483648
    %v1525 = vmul.f32 %v1523, 1.442695
    %v1526 = vpow.pop %v1525
    %v1527 = vmul.f32 %v1524, 1.442695
    %v1528 = vpow.pop %v1527
    %v1529 = vadd.f32 %v1526, 1.0
    %v1530 = vadd.f32 %v1528, 1.0
    %v1531 = vrcp.pop %v1529
    %v1532 = vmul.f32 1.0, %v1531
    %v1533 = vrcp.pop %v1530
    %v1534 = vmul.f32 1.0, %v1533
    %v1535 = vtanh.pop %v1520
    %v1536 = vtanh.pop %v1522
    %v1537 = vmul.f32 %v1532, 0.0
    %v1538 = vmul.f32 %v1534, 0.0
    %1541 = vrot.lane.b32.xlu0 %v1535, 64
    %v1542 = vpop.permute.xlu0 %1541
    %1543 = vrot.lane.b32.xlu0 %v1536, 64
    %v1544 = vpop.permute.xlu0 %1543
    %v1547 = vmul.f32 %v1532, %v1542
    %v1548 = vmul.f32 %v1534, %v1544
    %1551 = vrot.lane.b32.xlu0 %v1547, 32
    %v1552 = vpop.permute.xlu0 %1551
    %1553 = vrot.lane.b32.xlu0 %v1548, 32
    %v1554 = vpop.permute.xlu0 %1553
    %v1557 = vadd.f32 %v1537, %v1552
    %v1558 = vadd.f32 %v1538, %v1554
    %v1559 = vtanh.pop %v1557
    %v1560 = vtanh.pop %v1558
    %1563 = vrot.lane.b32.xlu0 %v1559, 64
    %v1564 = vpop.permute.xlu0 %1563
    %1565 = vrot.lane.b32.xlu0 %v1560, 64
    %v1566 = vpop.permute.xlu0 %1565
    %v1569 = vmul.f32 %v1532, %v1564
    %v1570 = vmul.f32 %v1534, %v1566
    %v1571 = vpack.c.bf16 %v1570, %v1569
    %1573 = vrot.lane.b32.xlu0 %v1571, 32
    %v1574 = vpop.permute.xlu0 %1573
    %v1576 = vsel %vm214, %v1574, 0
    %1578 = vmatprep.subr.bf16.mxu0 %v1471
    %1579 = vmatpush1.bf16.msra.mxu0 %v1470
    %1580 = vmatprep.subr.bf16.mxu0 %v1473
    %1581 = vmatpush1.bf16.msra.mxu0 %v1472
    %1582 = vmatprep.subr.bf16.mxu0 0
    %1583 = vmatpush1.bf16.msra.mxu0 0
    %1584 = vmatprep.subr.bf16.mxu0 0
    %1585 = vmatpush1.bf16.msra.mxu0 0
    %1586 = vmatprep.subr.bf16.mxu0 0
    %1587 = vmatpush1.bf16.msra.mxu0 0
    %1588 = vmatprep.subr.bf16.mxu0 0
    %1589 = vmatpush1.bf16.msra.mxu0 0
    %1590 = vmatprep.subr.bf16.mxu0 0
    %1591 = vmatpush1.bf16.msra.mxu0 0
    %1592 = vmatprep.subr.bf16.mxu0 0
    %1593 = vmatpush1.bf16.msra.mxu0 0
    %1594 = vmatprep.subr.bf16.mxu0 0
    %1595 = vmatpush1.bf16.msra.mxu0 0
    %1596 = vmatprep.subr.bf16.mxu0 0
    %1597 = vmatpush1.bf16.msra.mxu0 0
    %1598 = vmatprep.subr.bf16.mxu0 0
    %1599 = vmatpush1.bf16.msra.mxu0 0
    %1600 = vmatprep.subr.bf16.mxu0 0
    %1601 = vmatpush1.bf16.msra.mxu0 0
    %1602 = vmatprep.subr.bf16.mxu0 0
    %1603 = vmatpush1.bf16.msra.mxu0 0
    %1604 = vmatprep.subr.bf16.mxu0 0
    %1605 = vmatpush1.bf16.msra.mxu0 0
    %1606 = vmatprep.subr.bf16.mxu0 0
    %1607 = vmatpush1.bf16.msra.mxu0 0
    %1608 = vmatprep.subr.bf16.mxu0 0
    %1609 = vmatpush1.bf16.msra.mxu0 0
    %1610 = vmatprep.mubr.bf16.mxu0 0
    %1611 = vmatmul.mubr.bf16.gmra.mrb[0].mxu0 %v1576
    %v1612 = vpop.f32.mrb[0].mxu0
    %v1613 = vadd.f32 0.0, %v1612
    %v1614 = vpop.f32.mrb[0].mxu0
    %v1615 = vpop.f32.mrb[0].mxu0
    %v1616 = vpop.f32.mrb[0].mxu0
    %v1617 = vadd.f32 0.0, %v1616
    %1618 = vdwg.mxu0
    %v1619 = vld [vmem:[%s520] sm:$0xff]
    %v1620 = vadd.f32 %v1619, %v1613
    %v1621 = vld [vmem:[%s525 + $0x8] sm:$0xff]
    %v1622 = vadd.f32 %v1621, %v1617
    %v1623 = vxor.u32 %v1620, 2147483648
    %v1624 = vxor.u32 %v1622, 2147483648
    %v1625 = vmul.f32 %v1623, 1.442695
    %v1626 = vpow.pop %v1625
    %v1627 = vmul.f32 %v1624, 1.442695
    %v1628 = vpow.pop %v1627
    %v1629 = vadd.f32 %v1626, 1.0
    %v1630 = vadd.f32 %v1628, 1.0
    %v1631 = vrcp.pop %v1629
    %v1632 = vmul.f32 1.0, %v1631
    %v1633 = vrcp.pop %v1630
    %v1634 = vmul.f32 1.0, %v1633
    %v1635 = vtanh.pop %v1620
    %v1636 = vtanh.pop %v1622
    %v1637 = vmul.f32 %v1632, %v1557
    %v1638 = vmul.f32 %v1634, %v1558
    %1641 = vrot.lane.b32.xlu0 %v1635, 64
    %v1642 = vpop.permute.xlu0 %1641
    %1643 = vrot.lane.b32.xlu0 %v1636, 64
    %v1644 = vpop.permute.xlu0 %1643
    %v1647 = vmul.f32 %v1632, %v1642
    %v1648 = vmul.f32 %v1634, %v1644
    %1651 = vrot.lane.b32.xlu0 %v1647, 32
    %v1652 = vpop.permute.xlu0 %1651
    %1653 = vrot.lane.b32.xlu0 %v1648, 32
    %v1654 = vpop.permute.xlu0 %1653
    %v1657 = vadd.f32 %v1637, %v1652
    %v1658 = vadd.f32 %v1638, %v1654
    %v1659 = vtanh.pop %v1657
    %v1660 = vtanh.pop %v1658
    %1663 = vrot.lane.b32.xlu0 %v1659, 64
    %v1664 = vpop.permute.xlu0 %1663
    %1665 = vrot.lane.b32.xlu0 %v1660, 64
    %v1666 = vpop.permute.xlu0 %1665
    %v1669 = vmul.f32 %v1632, %v1664
    %v1670 = vmul.f32 %v1634, %v1666
    %v1671 = vpack.c.bf16 %v1670, %v1669
    %1673 = vrot.lane.b32.xlu0 %v1671, 32
    %v1674 = vpop.permute.xlu0 %1673
    %v1676 = vsel %vm214, %v1674, 0
    %1678 = vmatprep.subr.bf16.mxu0 %v1471
    %1679 = vmatpush1.bf16.msra.mxu0 %v1470
    %1680 = vmatprep.subr.bf16.mxu0 %v1473
    %1681 = vmatpush1.bf16.msra.mxu0 %v1472
    %1682 = vmatprep.subr.bf16.mxu0 0
    %1683 = vmatpush1.bf16.msra.mxu0 0
    %1684 = vmatprep.subr.bf16.mxu0 0
    %1685 = vmatpush1.bf16.msra.mxu0 0
    %1686 = vmatprep.subr.bf16.mxu0 0
    %1687 = vmatpush1.bf16.msra.mxu0 0
    %1688 = vmatprep.subr.bf16.mxu0 0
    %1689 = vmatpush1.bf16.msra.mxu0 0
    %1690 = vmatprep.subr.bf16.mxu0 0
    %1691 = vmatpush1.bf16.msra.mxu0 0
    %1692 = vmatprep.subr.bf16.mxu0 0
    %1693 = vmatpush1.bf16.msra.mxu0 0
    %1694 = vmatprep.subr.bf16.mxu0 0
    %1695 = vmatpush1.bf16.msra.mxu0 0
    %1696 = vmatprep.subr.bf16.mxu0 0
    %1697 = vmatpush1.bf16.msra.mxu0 0
    %1698 = vmatprep.subr.bf16.mxu0 0
    %1699 = vmatpush1.bf16.msra.mxu0 0
    %1700 = vmatprep.subr.bf16.mxu0 0
    %1701 = vmatpush1.bf16.msra.mxu0 0
    %1702 = vmatprep.subr.bf16.mxu0 0
    %1703 = vmatpush1.bf16.msra.mxu0 0
    %1704 = vmatprep.subr.bf16.mxu0 0
    %1705 = vmatpush1.bf16.msra.mxu0 0
    %1706 = vmatprep.subr.bf16.mxu0 0
    %1707 = vmatpush1.bf16.msra.mxu0 0
    %1708 = vmatprep.subr.bf16.mxu0 0
    %1709 = vmatpush1.bf16.msra.mxu0 0
    %1710 = vmatprep.mubr.bf16.mxu0 0
    %1711 = vmatmul.mubr.bf16.gmra.mrb[0].mxu0 %v1676
    %v1712 = vpop.f32.mrb[0].mxu0
    %v1713 = vadd.f32 0.0, %v1712
    %v1714 = vpop.f32.mrb[0].mxu0
    %v1715 = vpop.f32.mrb[0].mxu0
    %v1716 = vpop.f32.mrb[0].mxu0
    %v1717 = vadd.f32 0.0, %v1716
    %1718 = vdwg.mxu0
    %v1719 = vld [vmem:[%s638] sm:$0xff]
    %v1720 = vadd.f32 %v1719, %v1713
    %v1721 = vld [vmem:[%s643 + $0x8] sm:$0xff]
    %v1722 = vadd.f32 %v1721, %v1717
    %v1723 = vxor.u32 %v1720, 2147483648
    %v1724 = vxor.u32 %v1722, 2147483648
    %v1725 = vmul.f32 %v1723, 1.442695
    %v1726 = vpow.pop %v1725
    %v1727 = vmul.f32 %v1724, 1.442695
    %v1728 = vpow.pop %v1727
    %v1729 = vadd.f32 %v1726, 1.0
    %v1730 = vadd.f32 %v1728, 1.0
    %v1731 = vrcp.pop %v1729
    %v1732 = vmul.f32 1.0, %v1731
    %v1733 = vrcp.pop %v1730
    %v1734 = vmul.f32 1.0, %v1733
    %v1735 = vtanh.pop %v1720
    %v1736 = vtanh.pop %v1722
    %v1737 = vmul.f32 %v1732, %v1657
    %v1738 = vmul.f32 %v1734, %v1658
    %1741 = vrot.lane.b32.xlu0 %v1735, 64
    %v1742 = vpop.permute.xlu0 %1741
    %1743 = vrot.lane.b32.xlu0 %v1736, 64
    %v1744 = vpop.permute.xlu0 %1743
    %v1747 = vmul.f32 %v1732, %v1742
    %v1748 = vmul.f32 %v1734, %v1744
    %1751 = vrot.lane.b32.xlu0 %v1747, 32
    %v1752 = vpop.permute.xlu0 %1751
    %1753 = vrot.lane.b32.xlu0 %v1748, 32
    %v1754 = vpop.permute.xlu0 %1753
    %v1757 = vadd.f32 %v1737, %v1752
    %v1758 = vadd.f32 %v1738, %v1754
    %v1759 = vtanh.pop %v1757
    %v1760 = vtanh.pop %v1758
    %1763 = vrot.lane.b32.xlu0 %v1759, 64
    %v1764 = vpop.permute.xlu0 %1763
    %1765 = vrot.lane.b32.xlu0 %v1760, 64
    %v1766 = vpop.permute.xlu0 %1765
    %v1769 = vmul.f32 %v1732, %v1764
    %v1770 = vmul.f32 %v1734, %v1766
    %v1771 = vpack.c.bf16 %v1770, %v1769
    %1773 = vrot.lane.b32.xlu0 %v1771, 32
    %v1774 = vpop.permute.xlu0 %1773
    %v1776 = vsel %vm214, %v1774, 0
    %1778 = vmatprep.subr.bf16.mxu0 %v1471
    %1779 = vmatpush1.bf16.msra.mxu0 %v1470
    %1780 = vmatprep.subr.bf16.mxu0 %v1473
    %1781 = vmatpush1.bf16.msra.mxu0 %v1472
    %1782 = vmatprep.subr.bf16.mxu0 0
    %1783 = vmatpush1.bf16.msra.mxu0 0
    %1784 = vmatprep.subr.bf16.mxu0 0
    %1785 = vmatpush1.bf16.msra.mxu0 0
    %1786 = vmatprep.subr.bf16.mxu0 0
    %1787 = vmatpush1.bf16.msra.mxu0 0
    %1788 = vmatprep.subr.bf16.mxu0 0
    %1789 = vmatpush1.bf16.msra.mxu0 0
    %1790 = vmatprep.subr.bf16.mxu0 0
    %1791 = vmatpush1.bf16.msra.mxu0 0
    %1792 = vmatprep.subr.bf16.mxu0 0
    %1793 = vmatpush1.bf16.msra.mxu0 0
    %1794 = vmatprep.subr.bf16.mxu0 0
    %1795 = vmatpush1.bf16.msra.mxu0 0
    %1796 = vmatprep.subr.bf16.mxu0 0
    %1797 = vmatpush1.bf16.msra.mxu0 0
    %1798 = vmatprep.subr.bf16.mxu0 0
    %1799 = vmatpush1.bf16.msra.mxu0 0
    %1800 = vmatprep.subr.bf16.mxu0 0
    %1801 = vmatpush1.bf16.msra.mxu0 0
    %1802 = vmatprep.subr.bf16.mxu0 0
    %1803 = vmatpush1.bf16.msra.mxu0 0
    %1804 = vmatprep.subr.bf16.mxu0 0
    %1805 = vmatpush1.bf16.msra.mxu0 0
    %1806 = vmatprep.subr.bf16.mxu0 0
    %1807 = vmatpush1.bf16.msra.mxu0 0
    %1808 = vmatprep.subr.bf16.mxu0 0
    %1809 = vmatpush1.bf16.msra.mxu0 0
    %1810 = vmatprep.mubr.bf16.mxu0 0
    %1811 = vmatmul.mubr.bf16.gmra.mrb[0].mxu0 %v1776
    %v1812 = vpop.f32.mrb[0].mxu0
    %v1813 = vadd.f32 0.0, %v1812
    %v1814 = vpop.f32.mrb[0].mxu0
    %v1815 = vpop.f32.mrb[0].mxu0
    %v1816 = vpop.f32.mrb[0].mxu0
    %v1817 = vadd.f32 0.0, %v1816
    %1818 = vdwg.mxu0
    %v1819 = vld [vmem:[%s756] sm:$0xff]
    %v1820 = vadd.f32 %v1819, %v1813
    %v1821 = vld [vmem:[%s761 + $0x8] sm:$0xff]
    %v1822 = vadd.f32 %v1821, %v1817
    %v1823 = vxor.u32 %v1820, 2147483648
    %v1824 = vxor.u32 %v1822, 2147483648
    %v1825 = vmul.f32 %v1823, 1.442695
    %v1826 = vpow.pop %v1825
    %v1827 = vmul.f32 %v1824, 1.442695
    %v1828 = vpow.pop %v1827
    %v1829 = vadd.f32 %v1826, 1.0
    %v1830 = vadd.f32 %v1828, 1.0
    %v1831 = vrcp.pop %v1829
    %v1832 = vmul.f32 1.0, %v1831
    %v1833 = vrcp.pop %v1830
    %v1834 = vmul.f32 1.0, %v1833
    %v1835 = vtanh.pop %v1820
    %v1836 = vtanh.pop %v1822
    %v1837 = vmul.f32 %v1832, %v1757
    %v1838 = vmul.f32 %v1834, %v1758
    %1841 = vrot.lane.b32.xlu0 %v1835, 64
    %v1842 = vpop.permute.xlu0 %1841
    %1843 = vrot.lane.b32.xlu0 %v1836, 64
    %v1844 = vpop.permute.xlu0 %1843
    %v1847 = vmul.f32 %v1832, %v1842
    %v1848 = vmul.f32 %v1834, %v1844
    %1851 = vrot.lane.b32.xlu0 %v1847, 32
    %v1852 = vpop.permute.xlu0 %1851
    %1853 = vrot.lane.b32.xlu0 %v1848, 32
    %v1854 = vpop.permute.xlu0 %1853
    %v1857 = vadd.f32 %v1837, %v1852
    %v1858 = vadd.f32 %v1838, %v1854
    %v1859 = vtanh.pop %v1857
    %v1860 = vtanh.pop %v1858
    %1863 = vrot.lane.b32.xlu0 %v1859, 64
    %v1864 = vpop.permute.xlu0 %1863
    %1865 = vrot.lane.b32.xlu0 %v1860, 64
    %v1866 = vpop.permute.xlu0 %1865
    %v1869 = vmul.f32 %v1832, %v1864
    %v1870 = vmul.f32 %v1834, %v1866
    %v1871 = vpack.c.bf16 %v1870, %v1869
    %1873 = vrot.lane.b32.xlu0 %v1871, 32
    %v1874 = vpop.permute.xlu0 %1873
    %v1876 = vsel %vm214, %v1874, 0
    %1878 = vmatprep.subr.bf16.mxu0 %v1471
    %1879 = vmatpush1.bf16.msra.mxu0 %v1470
    %1880 = vmatprep.subr.bf16.mxu0 %v1473
    %1881 = vmatpush1.bf16.msra.mxu0 %v1472
    %1882 = vmatprep.subr.bf16.mxu0 0
    %1883 = vmatpush1.bf16.msra.mxu0 0
    %1884 = vmatprep.subr.bf16.mxu0 0
    %1885 = vmatpush1.bf16.msra.mxu0 0
    %1886 = vmatprep.subr.bf16.mxu0 0
    %1887 = vmatpush1.bf16.msra.mxu0 0
    %1888 = vmatprep.subr.bf16.mxu0 0
    %1889 = vmatpush1.bf16.msra.mxu0 0
    %1890 = vmatprep.subr.bf16.mxu0 0
    %1891 = vmatpush1.bf16.msra.mxu0 0
    %1892 = vmatprep.subr.bf16.mxu0 0
    %1893 = vmatpush1.bf16.msra.mxu0 0
    %1894 = vmatprep.subr.bf16.mxu0 0
    %1895 = vmatpush1.bf16.msra.mxu0 0
    %1896 = vmatprep.subr.bf16.mxu0 0
    %1897 = vmatpush1.bf16.msra.mxu0 0
    %1898 = vmatprep.subr.bf16.mxu0 0
    %1899 = vmatpush1.bf16.msra.mxu0 0
    %1900 = vmatprep.subr.bf16.mxu0 0
    %1901 = vmatpush1.bf16.msra.mxu0 0
    %1902 = vmatprep.subr.bf16.mxu0 0
    %1903 = vmatpush1.bf16.msra.mxu0 0
    %1904 = vmatprep.subr.bf16.mxu0 0
    %1905 = vmatpush1.bf16.msra.mxu0 0
    %1906 = vmatprep.subr.bf16.mxu0 0
    %1907 = vmatpush1.bf16.msra.mxu0 0
    %1908 = vmatprep.subr.bf16.mxu0 0
    %1909 = vmatpush1.bf16.msra.mxu0 0
    %1910 = vmatprep.mubr.bf16.mxu0 0
    %1911 = vmatmul.mubr.bf16.gmra.mrb[0].mxu0 %v1876
    %v1912 = vpop.f32.mrb[0].mxu0
    %v1913 = vadd.f32 0.0, %v1912
    %v1914 = vpop.f32.mrb[0].mxu0
    %v1915 = vpop.f32.mrb[0].mxu0
    %v1916 = vpop.f32.mrb[0].mxu0
    %v1917 = vadd.f32 0.0, %v1916
    %1918 = vdwg.mxu0
    %v1919 = vld [vmem:[%s761] sm:$0xff]
    %v1920 = vadd.f32 %v1919, %v1913
    %v1921 = vld [vmem:[%s756 + $0x8] sm:$0xff]
    %v1922 = vadd.f32 %v1921, %v1917
    %v1923 = vxor.u32 %v1920, 2147483648
    %v1924 = vxor.u32 %v1922, 2147483648
    %v1925 = vmul.f32 %v1923, 1.442695
    %v1926 = vpow.pop %v1925
    %v1927 = vmul.f32 %v1924, 1.442695
    %v1928 = vpow.pop %v1927
    %v1929 = vadd.f32 %v1926, 1.0
    %v1930 = vadd.f32 %v1928, 1.0
    %v1931 = vrcp.pop %v1929
    %v1932 = vmul.f32 1.0, %v1931
    %v1933 = vrcp.pop %v1930
    %v1934 = vmul.f32 1.0, %v1933
    %v1935 = vtanh.pop %v1920
    %v1936 = vtanh.pop %v1922
    %v1937 = vmul.f32 %v1932, %v1857
    %v1938 = vmul.f32 %v1934, %v1858
    %1941 = vrot.lane.b32.xlu0 %v1935, 64
    %v1942 = vpop.permute.xlu0 %1941
    %1943 = vrot.lane.b32.xlu0 %v1936, 64
    %v1944 = vpop.permute.xlu0 %1943
    %v1947 = vmul.f32 %v1932, %v1942
    %v1948 = vmul.f32 %v1934, %v1944
    %1951 = vrot.lane.b32.xlu0 %v1947, 32
    %v1952 = vpop.permute.xlu0 %1951
    %1953 = vrot.lane.b32.xlu0 %v1948, 32
    %v1954 = vpop.permute.xlu0 %1953
    %v1957 = vadd.f32 %v1937, %v1952
    %v1958 = vadd.f32 %v1938, %v1954
    %v1959 = vtanh.pop %v1957
    %v1960 = vtanh.pop %v1958
    %1963 = vrot.lane.b32.xlu0 %v1959, 64
    %v1964 = vpop.permute.xlu0 %1963
    %1965 = vrot.lane.b32.xlu0 %v1960, 64
    %v1966 = vpop.permute.xlu0 %1965
    %v1969 = vmul.f32 %v1932, %v1964
    %v1970 = vmul.f32 %v1934, %v1966
    %v1971 = vpack.c.bf16 %v1970, %v1969
    %1973 = vrot.lane.b32.xlu0 %v1971, 32
    %v1974 = vpop.permute.xlu0 %1973
    %v1976 = vsel %vm214, %v1974, 0
    %1978 = vmatprep.subr.bf16.mxu0 %v1471
    %1979 = vmatpush1.bf16.msra.mxu0 %v1470
    %1980 = vmatprep.subr.bf16.mxu0 %v1473
    %1981 = vmatpush1.bf16.msra.mxu0 %v1472
    %1982 = vmatprep.subr.bf16.mxu0 0
    %1983 = vmatpush1.bf16.msra.mxu0 0
    %1984 = vmatprep.subr.bf16.mxu0 0
    %1985 = vmatpush1.bf16.msra.mxu0 0
    %1986 = vmatprep.subr.bf16.mxu0 0
    %1987 = vmatpush1.bf16.msra.mxu0 0
    %1988 = vmatprep.subr.bf16.mxu0 0
    %1989 = vmatpush1.bf16.msra.mxu0 0
    %1990 = vmatprep.subr.bf16.mxu0 0
    %1991 = vmatpush1.bf16.msra.mxu0 0
    %1992 = vmatprep.subr.bf16.mxu0 0
    %1993 = vmatpush1.bf16.msra.mxu0 0
    %1994 = vmatprep.subr.bf16.mxu0 0
    %1995 = vmatpush1.bf16.msra.mxu0 0
    %1996 = vmatprep.subr.bf16.mxu0 0
    %1997 = vmatpush1.bf16.msra.mxu0 0
    %1998 = vmatprep.subr.bf16.mxu0 0
    %1999 = vmatpush1.bf16.msra.mxu0 0
    %2000 = vmatprep.subr.bf16.mxu0 0
    %2001 = vmatpush1.bf16.msra.mxu0 0
    %2002 = vmatprep.subr.bf16.mxu0 0
    %2003 = vmatpush1.bf16.msra.mxu0 0
    %2004 = vmatprep.subr.bf16.mxu0 0
    %2005 = vmatpush1.bf16.msra.mxu0 0
    %2006 = vmatprep.subr.bf16.mxu0 0
    %2007 = vmatpush1.bf16.msra.mxu0 0
    %2008 = vmatprep.subr.bf16.mxu0 0
    %2009 = vmatpush1.bf16.msra.mxu0 0
    %2010 = vmatprep.mubr.bf16.mxu0 0
    %2011 = vmatmul.mubr.bf16.gmra.mrb[0].mxu0 %v1976
    %v2012 = vpop.f32.mrb[0].mxu0
    %v2013 = vadd.f32 0.0, %v2012
    %v2014 = vpop.f32.mrb[0].mxu0
    %v2015 = vpop.f32.mrb[0].mxu0
    %v2016 = vpop.f32.mrb[0].mxu0
    %v2017 = vadd.f32 0.0, %v2016
    %2018 = vdwg.mxu0
    %v2019 = vld [vmem:[%s643] sm:$0xff]
    %v2020 = vadd.f32 %v2019, %v2013
    %v2021 = vld [vmem:[%s638 + $0x8] sm:$0xff]
    %v2022 = vadd.f32 %v2021, %v2017
    %v2023 = vxor.u32 %v2020, 2147483648
    %v2024 = vxor.u32 %v2022, 2147483648
    %v2025 = vmul.f32 %v2023, 1.442695
    %v2026 = vpow.pop %v2025
    %v2027 = vmul.f32 %v2024, 1.442695
    %v2028 = vpow.pop %v2027
    %v2029 = vadd.f32 %v2026, 1.0
    %v2030 = vadd.f32 %v2028, 1.0
    %v2031 = vrcp.pop %v2029
    %v2032 = vmul.f32 1.0, %v2031
    %v2033 = vrcp.pop %v2030
    %v2034 = vmul.f32 1.0, %v2033
    %v2035 = vtanh.pop %v2020
    %v2036 = vtanh.pop %v2022
    %v2037 = vmul.f32 %v2032, %v1957
    %v2038 = vmul.f32 %v2034, %v1958
    %2041 = vrot.lane.b32.xlu0 %v2035, 64
    %v2042 = vpop.permute.xlu0 %2041
    %2043 = vrot.lane.b32.xlu0 %v2036, 64
    %v2044 = vpop.permute.xlu0 %2043
    %v2047 = vmul.f32 %v2032, %v2042
    %v2048 = vmul.f32 %v2034, %v2044
    %2051 = vrot.lane.b32.xlu0 %v2047, 32
    %v2052 = vpop.permute.xlu0 %2051
    %2053 = vrot.lane.b32.xlu0 %v2048, 32
    %v2054 = vpop.permute.xlu0 %2053
    %v2057 = vadd.f32 %v2037, %v2052
    %v2058 = vadd.f32 %v2038, %v2054
    %v2059 = vtanh.pop %v2057
    %v2060 = vtanh.pop %v2058
    %2063 = vrot.lane.b32.xlu0 %v2059, 64
    %v2064 = vpop.permute.xlu0 %2063
    %2065 = vrot.lane.b32.xlu0 %v2060, 64
    %v2066 = vpop.permute.xlu0 %2065
    %v2069 = vmul.f32 %v2032, %v2064
    %v2070 = vmul.f32 %v2034, %v2066
    %v2071 = vpack.c.bf16 %v2070, %v2069
    %2073 = vrot.lane.b32.xlu0 %v2071, 32
    %v2074 = vpop.permute.xlu0 %2073
    %v2076 = vsel %vm214, %v2074, 0
    %2078 = vmatprep.subr.bf16.mxu0 %v1471
    %2079 = vmatpush1.bf16.msra.mxu0 %v1470
    %2080 = vmatprep.subr.bf16.mxu0 %v1473
    %2081 = vmatpush1.bf16.msra.mxu0 %v1472
    %2082 = vmatprep.subr.bf16.mxu0 0
    %2083 = vmatpush1.bf16.msra.mxu0 0
    %2084 = vmatprep.subr.bf16.mxu0 0
    %2085 = vmatpush1.bf16.msra.mxu0 0
    %2086 = vmatprep.subr.bf16.mxu0 0
    %2087 = vmatpush1.bf16.msra.mxu0 0
    %2088 = vmatprep.subr.bf16.mxu0 0
    %2089 = vmatpush1.bf16.msra.mxu0 0
    %2090 = vmatprep.subr.bf16.mxu0 0
    %2091 = vmatpush1.bf16.msra.mxu0 0
    %2092 = vmatprep.subr.bf16.mxu0 0
    %2093 = vmatpush1.bf16.msra.mxu0 0
    %2094 = vmatprep.subr.bf16.mxu0 0
    %2095 = vmatpush1.bf16.msra.mxu0 0
    %2096 = vmatprep.subr.bf16.mxu0 0
    %2097 = vmatpush1.bf16.msra.mxu0 0
    %2098 = vmatprep.subr.bf16.mxu0 0
    %2099 = vmatpush1.bf16.msra.mxu0 0
    %2100 = vmatprep.subr.bf16.mxu0 0
    %2101 = vmatpush1.bf16.msra.mxu0 0
    %2102 = vmatprep.subr.bf16.mxu0 0
    %2103 = vmatpush1.bf16.msra.mxu0 0
    %2104 = vmatprep.subr.bf16.mxu0 0
    %2105 = vmatpush1.bf16.msra.mxu0 0
    %2106 = vmatprep.subr.bf16.mxu0 0
    %2107 = vmatpush1.bf16.msra.mxu0 0
    %2108 = vmatprep.subr.bf16.mxu0 0
    %2109 = vmatpush1.bf16.msra.mxu0 0
    %2110 = vmatprep.mubr.bf16.mxu0 0
    %2111 = vmatmul.mubr.bf16.gmra.mrb[0].mxu0 %v2076
    %v2112 = vpop.f32.mrb[0].mxu0
    %v2113 = vadd.f32 0.0, %v2112
    %v2114 = vpop.f32.mrb[0].mxu0
    %v2115 = vpop.f32.mrb[0].mxu0
    %v2116 = vpop.f32.mrb[0].mxu0
    %v2117 = vadd.f32 0.0, %v2116
    %2118 = vdwg.mxu0
    %v2119 = vld [vmem:[%s525] sm:$0xff]
    %v2120 = vadd.f32 %v2119, %v2113
    %v2121 = vld [vmem:[%s520 + $0x8] sm:$0xff]
    %v2122 = vadd.f32 %v2121, %v2117
    %v2123 = vxor.u32 %v2120, 2147483648
    %v2124 = vxor.u32 %v2122, 2147483648
    %v2125 = vmul.f32 %v2123, 1.442695
    %v2126 = vpow.pop %v2125
    %v2127 = vmul.f32 %v2124, 1.442695
    %v2128 = vpow.pop %v2127
    %v2129 = vadd.f32 %v2126, 1.0
    %v2130 = vadd.f32 %v2128, 1.0
    %v2131 = vrcp.pop %v2129
    %v2132 = vmul.f32 1.0, %v2131
    %v2133 = vrcp.pop %v2130
    %v2134 = vmul.f32 1.0, %v2133
    %v2135 = vtanh.pop %v2120
    %v2136 = vtanh.pop %v2122
    %v2137 = vmul.f32 %v2132, %v2057
    %v2138 = vmul.f32 %v2134, %v2058
    %2141 = vrot.lane.b32.xlu0 %v2135, 64
    %v2142 = vpop.permute.xlu0 %2141
    %2143 = vrot.lane.b32.xlu0 %v2136, 64
    %v2144 = vpop.permute.xlu0 %2143
    %v2147 = vmul.f32 %v2132, %v2142
    %v2148 = vmul.f32 %v2134, %v2144
    %2151 = vrot.lane.b32.xlu0 %v2147, 32
    %v2152 = vpop.permute.xlu0 %2151
    %2153 = vrot.lane.b32.xlu0 %v2148, 32
    %v2154 = vpop.permute.xlu0 %2153
    %v2157 = vadd.f32 %v2137, %v2152
    %v2158 = vadd.f32 %v2138, %v2154
    %v2159 = vtanh.pop %v2157
    %v2160 = vtanh.pop %v2158
    %2163 = vrot.lane.b32.xlu0 %v2159, 64
    %v2164 = vpop.permute.xlu0 %2163
    %2165 = vrot.lane.b32.xlu0 %v2160, 64
    %v2166 = vpop.permute.xlu0 %2165
    %v2169 = vmul.f32 %v2132, %v2164
    %v2170 = vmul.f32 %v2134, %v2166
    %v2171 = vpack.c.bf16 %v2170, %v2169
    %2173 = vrot.lane.b32.xlu0 %v2171, 32
    %v2174 = vpop.permute.xlu0 %2173
    %v2176 = vsel %vm214, %v2174, 0
    %2178 = vmatprep.subr.bf16.mxu0 %v1471
    %2179 = vmatpush1.bf16.msra.mxu0 %v1470
    %2180 = vmatprep.subr.bf16.mxu0 %v1473
    %2181 = vmatpush1.bf16.msra.mxu0 %v1472
    %2182 = vmatprep.subr.bf16.mxu0 0
    %2183 = vmatpush1.bf16.msra.mxu0 0
    %2184 = vmatprep.subr.bf16.mxu0 0
    %2185 = vmatpush1.bf16.msra.mxu0 0
    %2186 = vmatprep.subr.bf16.mxu0 0
    %2187 = vmatpush1.bf16.msra.mxu0 0
    %2188 = vmatprep.subr.bf16.mxu0 0
    %2189 = vmatpush1.bf16.msra.mxu0 0
    %2190 = vmatprep.subr.bf16.mxu0 0
    %2191 = vmatpush1.bf16.msra.mxu0 0
    %2192 = vmatprep.subr.bf16.mxu0 0
    %2193 = vmatpush1.bf16.msra.mxu0 0
    %2194 = vmatprep.subr.bf16.mxu0 0
    %2195 = vmatpush1.bf16.msra.mxu0 0
    %2196 = vmatprep.subr.bf16.mxu0 0
    %2197 = vmatpush1.bf16.msra.mxu0 0
    %2198 = vmatprep.subr.bf16.mxu0 0
    %2199 = vmatpush1.bf16.msra.mxu0 0
    %2200 = vmatprep.subr.bf16.mxu0 0
    %2201 = vmatpush1.bf16.msra.mxu0 0
    %2202 = vmatprep.subr.bf16.mxu0 0
    %2203 = vmatpush1.bf16.msra.mxu0 0
    %2204 = vmatprep.subr.bf16.mxu0 0
    %2205 = vmatpush1.bf16.msra.mxu0 0
    %2206 = vmatprep.subr.bf16.mxu0 0
    %2207 = vmatpush1.bf16.msra.mxu0 0
    %2208 = vmatprep.subr.bf16.mxu0 0
    %2209 = vmatpush1.bf16.msra.mxu0 0
    %2210 = vmatprep.mubr.bf16.mxu0 0
    %2211 = vmatmul.mubr.bf16.gmra.mrb[0].mxu0 %v2176
    %v2212 = vpop.f32.mrb[0].mxu0
    %v2213 = vadd.f32 0.0, %v2212
    %v2214 = vpop.f32.mrb[0].mxu0
    %v2215 = vpop.f32.mrb[0].mxu0
    %v2216 = vpop.f32.mrb[0].mxu0
    %v2217 = vadd.f32 0.0, %v2216
    %2218 = vdwg.mxu0
    %v2219 = vld [vmem:[%s407] sm:$0xff]
    %v2220 = vadd.f32 %v2219, %v2213
    %v2221 = vld [vmem:[%s402 + $0x8] sm:$0xff]
    %v2222 = vadd.f32 %v2221, %v2217
    %v2223 = vxor.u32 %v2220, 2147483648
    %v2224 = vxor.u32 %v2222, 2147483648
    %v2225 = vmul.f32 %v2223, 1.442695
    %v2226 = vpow.pop %v2225
    %v2227 = vmul.f32 %v2224, 1.442695
    %v2228 = vpow.pop %v2227
    %v2229 = vadd.f32 %v2226, 1.0
    %v2230 = vadd.f32 %v2228, 1.0
    %v2231 = vrcp.pop %v2229
    %v2232 = vmul.f32 1.0, %v2231
    %v2233 = vrcp.pop %v2230
    %v2234 = vmul.f32 1.0, %v2233
    %v2235 = vtanh.pop %v2220
    %v2236 = vtanh.pop %v2222
    %v2237 = vmul.f32 %v2232, %v2157
    %v2238 = vmul.f32 %v2234, %v2158
    %2241 = vrot.lane.b32.xlu0 %v2235, 64
    %v2242 = vpop.permute.xlu0 %2241
    %2243 = vrot.lane.b32.xlu0 %v2236, 64
    %v2244 = vpop.permute.xlu0 %2243
    %v2247 = vmul.f32 %v2232, %v2242
    %v2248 = vmul.f32 %v2234, %v2244
    %2251 = vrot.lane.b32.xlu0 %v2247, 32
    %v2252 = vpop.permute.xlu0 %2251
    %2253 = vrot.lane.b32.xlu0 %v2248, 32
    %v2254 = vpop.permute.xlu0 %2253
    %v2257 = vadd.f32 %v2237, %v2252
    %v2258 = vadd.f32 %v2238, %v2254
    %v2259 = vtanh.pop %v2257
    %v2260 = vtanh.pop %v2258
    %2263 = vrot.lane.b32.xlu0 %v2259, 64
    %v2264 = vpop.permute.xlu0 %2263
    %2265 = vrot.lane.b32.xlu0 %v2260, 64
    %v2266 = vpop.permute.xlu0 %2265
    %v2269 = vmul.f32 %v2232, %v2264
    %v2270 = vmul.f32 %v2234, %v2266
    %v2271 = vld [vmem:[#allocation18] sm:$0x1]
    %v2273 = vlaneseq
    %v2274 = vshrl.u32 %v2273, 7
    %v2275 = vsub.s32 0, %v2274
    %v2276 = vrot.slane %v2271, %v2275
    %v2278 = vld [vmem:[#allocation16] sm:$0xf]
    %v2279 = vld [vmem:[#allocation16 + $0x4] sm:$0xf]
    %v2280 = vld [vmem:[#allocation16 + $0x8] sm:$0xf]
    %v2281 = vld [vmem:[#allocation16 + $0xc] sm:$0xf]
    %v2282 = vmax.f32 %v1252, 0.0
    %v2283 = vpack.c.bf16 %v2282, %v2282
    %2285 = vrot.lane.b32.xlu0 %v2283, 32
    %v2286 = vpop.permute.xlu0 %2285
    %v2291 = vunpack.c.l.b16 %v2278
    %v2292 = vunpack.c.l.b16 %v2279
    %v2293 = vunpack.c.l.b16 %v2280
    %v2294 = vunpack.c.l.b16 %v2281
    %v2295 = vpack.c.b16 %v2292, %v2291
    %v2296 = vpack.c.b16 %v2294, %v2293
    %v2300 = vsel %vm214, %v2286, 0
    %2302 = vmatprep.subr.bf16.mxu0 0
    %2303 = vmatpush1.bf16.msra.mxu0 %v2295
    %2304 = vmatprep.subr.bf16.mxu0 0
    %2305 = vmatpush1.bf16.msra.mxu0 %v2296
    %2306 = vmatprep.subr.bf16.mxu0 0
    %2307 = vmatpush1.bf16.msra.mxu0 0
    %2308 = vmatprep.subr.bf16.mxu0 0
    %2309 = vmatpush1.bf16.msra.mxu0 0
    %2310 = vmatprep.subr.bf16.mxu0 0
    %2311 = vmatpush1.bf16.msra.mxu0 0
    %2312 = vmatprep.subr.bf16.mxu0 0
    %2313 = vmatpush1.bf16.msra.mxu0 0
    %2314 = vmatprep.subr.bf16.mxu0 0
    %2315 = vmatpush1.bf16.msra.mxu0 0
    %2316 = vmatprep.subr.bf16.mxu0 0
    %2317 = vmatpush1.bf16.msra.mxu0 0
    %2318 = vmatprep.subr.bf16.mxu0 0
    %2319 = vmatpush1.bf16.msra.mxu0 0
    %2320 = vmatprep.subr.bf16.mxu0 0
    %2321 = vmatpush1.bf16.msra.mxu0 0
    %2322 = vmatprep.subr.bf16.mxu0 0
    %2323 = vmatpush1.bf16.msra.mxu0 0
    %2324 = vmatprep.subr.bf16.mxu0 0
    %2325 = vmatpush1.bf16.msra.mxu0 0
    %2326 = vmatprep.subr.bf16.mxu0 0
    %2327 = vmatpush1.bf16.msra.mxu0 0
    %2328 = vmatprep.subr.bf16.mxu0 0
    %2329 = vmatpush1.bf16.msra.mxu0 0
    %2330 = vmatprep.subr.bf16.mxu0 0
    %2331 = vmatpush1.bf16.msra.mxu0 0
    %2332 = vmatprep.subr.bf16.mxu0 0
    %2333 = vmatpush1.bf16.msra.mxu0 0
    %2334 = vmatprep.mubr.bf16.mxu0 0
    %2335 = vmatmul.mubr.bf16.gmra.mrb[0].mxu0 %v2300
    %v2336 = vpop.f32.mrb[0].mxu0
    %v2337 = vadd.f32 0.0, %v2336
    %v2338 = vpop.f32.mrb[0].mxu0
    %v2339 = vpop.f32.mrb[0].mxu0
    %v2340 = vpop.f32.mrb[0].mxu0
    %2341 = vdwg.mxu0
    %v2342 = vadd.f32 %v2276, %v2337
    %v2343 = vld [vmem:[#allocation16 + $0x10] sm:$0xf]
    %v2344 = vld [vmem:[#allocation16 + $0x14] sm:$0xf]
    %v2345 = vld [vmem:[#allocation16 + $0x18] sm:$0xf]
    %v2346 = vld [vmem:[#allocation16 + $0x1c] sm:$0xf]
    %v2347 = vmax.f32 %v1253, 0.0
    %v2348 = vpack.c.bf16 %v2347, %v2347
    %2350 = vrot.lane.b32.xlu0 %v2348, 32
    %v2351 = vpop.permute.xlu0 %2350
    %v2356 = vunpack.c.l.b16 %v2343
    %v2357 = vunpack.c.l.b16 %v2344
    %v2358 = vunpack.c.l.b16 %v2345
    %v2359 = vunpack.c.l.b16 %v2346
    %v2360 = vpack.c.b16 %v2357, %v2356
    %v2361 = vpack.c.b16 %v2359, %v2358
    %v2365 = vsel %vm214, %v2351, 0
    %2367 = vmatprep.subr.bf16.mxu0 0
    %2368 = vmatpush1.bf16.msra.mxu0 %v2360
    %2369 = vmatprep.subr.bf16.mxu0 0
    %2370 = vmatpush1.bf16.msra.mxu0 %v2361
    %2371 = vmatprep.subr.bf16.mxu0 0
    %2372 = vmatpush1.bf16.msra.mxu0 0
    %2373 = vmatprep.subr.bf16.mxu0 0
    %2374 = vmatpush1.bf16.msra.mxu0 0
    %2375 = vmatprep.subr.bf16.mxu0 0
    %2376 = vmatpush1.bf16.msra.mxu0 0
    %2377 = vmatprep.subr.bf16.mxu0 0
    %2378 = vmatpush1.bf16.msra.mxu0 0
    %2379 = vmatprep.subr.bf16.mxu0 0
    %2380 = vmatpush1.bf16.msra.mxu0 0
    %2381 = vmatprep.subr.bf16.mxu0 0
    %2382 = vmatpush1.bf16.msra.mxu0 0
    %2383 = vmatprep.subr.bf16.mxu0 0
    %2384 = vmatpush1.bf16.msra.mxu0 0
    %2385 = vmatprep.subr.bf16.mxu0 0
    %2386 = vmatpush1.bf16.msra.mxu0 0
    %2387 = vmatprep.subr.bf16.mxu0 0
    %2388 = vmatpush1.bf16.msra.mxu0 0
    %2389 = vmatprep.subr.bf16.mxu0 0
    %2390 = vmatpush1.bf16.msra.mxu0 0
    %2391 = vmatprep.subr.bf16.mxu0 0
    %2392 = vmatpush1.bf16.msra.mxu0 0
    %2393 = vmatprep.subr.bf16.mxu0 0
    %2394 = vmatpush1.bf16.msra.mxu0 0
    %2395 = vmatprep.subr.bf16.mxu0 0
    %2396 = vmatpush1.bf16.msra.mxu0 0
    %2397 = vmatprep.subr.bf16.mxu0 0
    %2398 = vmatpush1.bf16.msra.mxu0 0
    %2399 = vmatprep.mubr.bf16.mxu0 0
    %2400 = vmatmul.mubr.bf16.gmra.mrb[0].mxu0 %v2365
    %v2401 = vpop.f32.mrb[0].mxu0
    %v2402 = vadd.f32 0.0, %v2401
    %v2403 = vpop.f32.mrb[0].mxu0
    %v2404 = vpop.f32.mrb[0].mxu0
    %v2405 = vpop.f32.mrb[0].mxu0
    %2406 = vdwg.mxu0
    %v2407 = vadd.f32 %v2342, %v2402
    %v2408 = vld [vmem:[#allocation16 + $0x20] sm:$0xf]
    %v2409 = vld [vmem:[#allocation16 + $0x24] sm:$0xf]
    %v2410 = vld [vmem:[#allocation16 + $0x28] sm:$0xf]
    %v2411 = vld [vmem:[#allocation16 + $0x2c] sm:$0xf]
    %v2412 = vmax.f32 %v2269, 0.0
    %v2413 = vpack.c.bf16 %v2412, %v2412
    %2415 = vrot.lane.b32.xlu0 %v2413, 32
    %v2416 = vpop.permute.xlu0 %2415
    %v2421 = vunpack.c.l.b16 %v2408
    %v2422 = vunpack.c.l.b16 %v2409
    %v2423 = vunpack.c.l.b16 %v2410
    %v2424 = vunpack.c.l.b16 %v2411
    %v2425 = vpack.c.b16 %v2422, %v2421
    %v2426 = vpack.c.b16 %v2424, %v2423
    %v2430 = vsel %vm214, %v2416, 0
    %2432 = vmatprep.subr.bf16.mxu0 0
    %2433 = vmatpush1.bf16.msra.mxu0 %v2425
    %2434 = vmatprep.subr.bf16.mxu0 0
    %2435 = vmatpush1.bf16.msra.mxu0 %v2426
    %2436 = vmatprep.subr.bf16.mxu0 0
    %2437 = vmatpush1.bf16.msra.mxu0 0
    %2438 = vmatprep.subr.bf16.mxu0 0
    %2439 = vmatpush1.bf16.msra.mxu0 0
    %2440 = vmatprep.subr.bf16.mxu0 0
    %2441 = vmatpush1.bf16.msra.mxu0 0
    %2442 = vmatprep.subr.bf16.mxu0 0
    %2443 = vmatpush1.bf16.msra.mxu0 0
    %2444 = vmatprep.subr.bf16.mxu0 0
    %2445 = vmatpush1.bf16.msra.mxu0 0
    %2446 = vmatprep.subr.bf16.mxu0 0
    %2447 = vmatpush1.bf16.msra.mxu0 0
    %2448 = vmatprep.subr.bf16.mxu0 0
    %2449 = vmatpush1.bf16.msra.mxu0 0
    %2450 = vmatprep.subr.bf16.mxu0 0
    %2451 = vmatpush1.bf16.msra.mxu0 0
    %2452 = vmatprep.subr.bf16.mxu0 0
    %2453 = vmatpush1.bf16.msra.mxu0 0
    %2454 = vmatprep.subr.bf16.mxu0 0
    %2455 = vmatpush1.bf16.msra.mxu0 0
    %2456 = vmatprep.subr.bf16.mxu0 0
    %2457 = vmatpush1.bf16.msra.mxu0 0
    %2458 = vmatprep.subr.bf16.mxu0 0
    %2459 = vmatpush1.bf16.msra.mxu0 0
    %2460 = vmatprep.subr.bf16.mxu0 0
    %2461 = vmatpush1.bf16.msra.mxu0 0
    %2462 = vmatprep.subr.bf16.mxu0 0
    %2463 = vmatpush1.bf16.msra.mxu0 0
    %2464 = vmatprep.mubr.bf16.mxu0 0
    %2465 = vmatmul.mubr.bf16.gmra.mrb[0].mxu0 %v2430
    %v2466 = vpop.f32.mrb[0].mxu0
    %v2467 = vadd.f32 0.0, %v2466
    %v2468 = vpop.f32.mrb[0].mxu0
    %v2469 = vpop.f32.mrb[0].mxu0
    %v2470 = vpop.f32.mrb[0].mxu0
    %2471 = vdwg.mxu0
    %v2472 = vadd.f32 %v2407, %v2467
    %v2473 = vld [vmem:[#allocation16 + $0x30] sm:$0xf]
    %v2474 = vld [vmem:[#allocation16 + $0x34] sm:$0xf]
    %v2475 = vld [vmem:[#allocation16 + $0x38] sm:$0xf]
    %v2476 = vld [vmem:[#allocation16 + $0x3c] sm:$0xf]
    %v2477 = vmax.f32 %v2270, 0.0
    %v2478 = vpack.c.bf16 %v2477, %v2477
    %2480 = vrot.lane.b32.xlu0 %v2478, 32
    %v2481 = vpop.permute.xlu0 %2480
    %v2486 = vunpack.c.l.b16 %v2473
    %v2487 = vunpack.c.l.b16 %v2474
    %v2488 = vunpack.c.l.b16 %v2475
    %v2489 = vunpack.c.l.b16 %v2476
    %v2490 = vpack.c.b16 %v2487, %v2486
    %v2491 = vpack.c.b16 %v2489, %v2488
    %v2495 = vsel %vm214, %v2481, 0
    %2497 = vmatprep.subr.bf16.mxu0 0
    %2498 = vmatpush1.bf16.msra.mxu0 %v2490
    %2499 = vmatprep.subr.bf16.mxu0 0
    %2500 = vmatpush1.bf16.msra.mxu0 %v2491
    %2501 = vmatprep.subr.bf16.mxu0 0
    %2502 = vmatpush1.bf16.msra.mxu0 0
    %2503 = vmatprep.subr.bf16.mxu0 0
    %2504 = vmatpush1.bf16.msra.mxu0 0
    %2505 = vmatprep.subr.bf16.mxu0 0
    %2506 = vmatpush1.bf16.msra.mxu0 0
    %2507 = vmatprep.subr.bf16.mxu0 0
    %2508 = vmatpush1.bf16.msra.mxu0 0
    %2509 = vmatprep.subr.bf16.mxu0 0
    %2510 = vmatpush1.bf16.msra.mxu0 0
    %2511 = vmatprep.subr.bf16.mxu0 0
    %2512 = vmatpush1.bf16.msra.mxu0 0
    %2513 = vmatprep.subr.bf16.mxu0 0
    %2514 = vmatpush1.bf16.msra.mxu0 0
    %2515 = vmatprep.subr.bf16.mxu0 0
    %2516 = vmatpush1.bf16.msra.mxu0 0
    %2517 = vmatprep.subr.bf16.mxu0 0
    %2518 = vmatpush1.bf16.msra.mxu0 0
    %2519 = vmatprep.subr.bf16.mxu0 0
    %2520 = vmatpush1.bf16.msra.mxu0 0
    %2521 = vmatprep.subr.bf16.mxu0 0
    %2522 = vmatpush1.bf16.msra.mxu0 0
    %2523 = vmatprep.subr.bf16.mxu0 0
    %2524 = vmatpush1.bf16.msra.mxu0 0
    %2525 = vmatprep.subr.bf16.mxu0 0
    %2526 = vmatpush1.bf16.msra.mxu0 0
    %2527 = vmatprep.subr.bf16.mxu0 0
    %2528 = vmatpush1.bf16.msra.mxu0 0
    %2529 = vmatprep.mubr.bf16.mxu0 0
    %2530 = vmatmul.mubr.bf16.gmra.mrb[0].mxu0 %v2495
    %v2531 = vpop.f32.mrb[0].mxu0
    %v2532 = vadd.f32 0.0, %v2531
    %v2533 = vpop.f32.mrb[0].mxu0
    %v2534 = vpop.f32.mrb[0].mxu0
    %v2535 = vpop.f32.mrb[0].mxu0
    %2536 = vdwg.mxu0
    %v2537 = vadd.f32 %v2472, %v2532
    %v2538 = vxor.u32 %v2537, 2147483648
    %v2539 = vmul.f32 %v2538, 1.442695
    %v2540 = vpow.pop %v2539
    %v2541 = vadd.f32 %v2540, 1.0
    %v2542 = vrcp.pop %v2541
    %v2543 = vmul.f32 1.0, %v2542
    %vm2544 = vcmask 31744
    %2545 = vst.msk [vmem:[#allocation19] sm:$0xff] %vm2544, %v2543
    // Predicated region
    $region74: #{my_lstm_forward.1} parent=1 // pred_check
      _
    $region75: #{my_lstm_forward.1} parent=1 // pred_check_branch
      %2547 = sbr.rel (0) target = $region77
    $region76: #{my_lstm_forward.1} parent=1 // pred_region
      %s2549 = ssub.s32 128, 128
      %2550 = vsyncadd [#allocation6], %s2549
      %s2552 = sshll.u32 [#allocation19], 4
      %s2553 = int_to_ptr.vmem [resolvable:$true] %s2552
      %2555 = dma.vmem_to_hbm [thread:$0]  %s2553, 128, %s9, [#allocation6]
    $region77: #{my_lstm_forward.1} parent=1 // pred_fallthru
      _
    // Predicated region
    $region78: #{my_lstm_forward.1} parent=1 // pred_check
      _
    $region79: #{my_lstm_forward.1} parent=1 // pred_check_branch
      %2557 = sbr.rel (0) target = $region81
    $region80: #{my_lstm_forward.1} parent=1 // pred_region
      %2558 = dma.done [#allocation6], 128
    $region81: #{my_lstm_forward.1} parent=1 // pred_fallthru
      _
    %2559 = vsyncpa [#allocation5], 1
    %2560 = vsyncpa [#allocation8], 1
    %2561 = vsyncpa [#allocation11], 1
    %2562 = vsyncpa [#allocation14], 1
    %2563 = vsyncpa [#allocation17], 1
    %2564 = vsyncpa [#allocation6], 1

</llo_original>
